<compile_context>
chip_gen: v7x
topology: tpu7x:2x2x1
jax: 0.10.0
libtpu: 0.0.40
codegen_flags: <defaults>
</compile_context>

<pallas_src>
import functools
from math import sqrt

import jax
import jax.numpy as jnp
from jax import lax
from jax.experimental import pallas as pl
from jax.experimental.pallas import tpu as pltpu

NEG_INF = -100000.0  # same constant the PyTorch module uses for masked_fill


# ----------------------------------------------------------------------------
# Pallas kernel: one grid step == one batch element, full sequences in VMEM.
# ----------------------------------------------------------------------------
def _decoder_layer_kernel(
    # data
    x_ref, enc_ref, smask_ref, cmask_ref,
    # self-attention params (per-head packed)
    ln1_g, ln1_b, wqkv1, bqkv1, wo1, bo1,
    # cross-attention params (per-head packed)
    ln2_g, ln2_b, wq2, bq2, wkv2, bkv2, wo2, bo2,
    # feed-forward params
    ln3_g, ln3_b, w1, b1, w2, b2,
    # output
    o_ref,
    *, n_heads, head_dim, embed_dim, compute_dtype, approx_recip,
):
    cdt = compute_dtype
    x = x_ref[0]        # (n_tgt, d) f32
    enc = enc_ref[0]    # (n_src, d) f32
    n_tgt = x.shape[0]
    n_src = enc.shape[0]
    d = embed_dim
    inv_scale = 1.0 / sqrt(float(embed_dim))   # PyTorch scales by sqrt(embed_dim)

    def layernorm(v, g_ref, b_ref):            # f32 VPU/EUP math
        mu = jnp.mean(v, axis=-1, keepdims=True)
        var = jnp.mean(jnp.square(v - mu), axis=-1, keepdims=True)
        return (v - mu) * lax.rsqrt(var + 1e-5) * g_ref[...] + b_ref[...]

    def mm(a, w_ref, b_ref):                   # 2D matmul, f32 accumulation
        return jnp.dot(a.astype(cdt), w_ref[...],
                       preferred_element_type=jnp.float32) + b_ref[...]

    def head_proj(a, w_ref, b_ref, n_rows):
        # a: (n_rows, d) -> (H, n_rows, out); single head-batched contraction.
        ab = jnp.broadcast_to(a.astype(cdt)[None], (n_heads, n_rows, d))
        p = jnp.einsum('hnd,hde->hne', ab, w_ref[...],
                       preferred_element_type=jnp.float32)
        return p + b_ref[...]                  # bias: (H, 1, out), f32

    def attention(q_h, k_h, v_h, mask):
        # q_h: (H, n_q, hd); k_h/v_h: (H, n_k, hd); mask broadcastable (., ., n_k)
        s = jnp.einsum('hqd,hkd->hqk', q_h.astype(cdt), k_h.astype(cdt),
                       preferred_element_type=jnp.float32) * inv_scale
        s = jnp.where(mask, NEG_INF, s)
        m = jnp.max(s, axis=-1, keepdims=True)
        e = jnp.exp(s - m)
        p = e * pl.reciprocal(jnp.sum(e, axis=-1, keepdims=True),
                              approx=approx_recip)
        return jnp.einsum('hqk,hkd->hqd', p.astype(cdt), v_h.astype(cdt),
                          preferred_element_type=jnp.float32)   # (H, n_q, hd)

    def out_proj(o_h, wo_ref, bo_ref):
        # head merge folded into the output projection: sum_h o_h[h] @ Wo[h]
        per_head = jnp.einsum('hqc,hcd->hqd', o_h.astype(cdt), wo_ref[...],
                              preferred_element_type=jnp.float32)
        return jnp.sum(per_head, axis=0) + bo_ref[...]

    # ---- causal self attention ----
    xn = layernorm(x, ln1_g, ln1_b)
    qkv = head_proj(xn, wqkv1, bqkv1, n_tgt)            # (H, n_tgt, 3*hd)
    q_h = qkv[:, :, :head_dim]
    k_h = qkv[:, :, head_dim:2 * head_dim]
    v_h = qkv[:, :, 2 * head_dim:]
    causal = cmask_ref[...] > 0.5                       # (n_tgt, n_tgt)
    x = x + out_proj(attention(q_h, k_h, v_h, causal[None]), wo1, bo1)

    # ---- encoder cross attention (source padding mask) ----
    xn = layernorm(x, ln2_g, ln2_b)
    q_h = head_proj(xn, wq2, bq2, n_tgt)                # (H, n_tgt, hd)
    kv = head_proj(enc, wkv2, bkv2, n_src)              # (H, n_src, 2*hd)
    k_h = kv[:, :, :head_dim]
    v_h = kv[:, :, head_dim:]
    smask = smask_ref[0] > 0.5                          # (1, n_src)
    x = x + out_proj(attention(q_h, k_h, v_h, smask[None]), wo2, bo2)

    # ---- position-wise feed forward ----
    xn = layernorm(x, ln3_g, ln3_b)
    h = jnp.maximum(mm(xn, w1, b1), 0.0)
    x = x + mm(h, w2, b2)

    o_ref[0] = x.astype(o_ref.dtype)


# ----------------------------------------------------------------------------
# Wrapper: weight repacking (fused + per-head) and pallas_call setup.
# ----------------------------------------------------------------------------
def _split_heads_w(w, n_heads):
    d_in, d_out = w.shape
    hd = d_out // n_heads
    return jnp.transpose(w.reshape(d_in, n_heads, hd), (1, 0, 2))   # (H, d_in, hd)


def _split_heads_b(b, n_heads):
    d_out = b.shape[-1]
    hd = d_out // n_heads
    return jnp.transpose(b.reshape(1, n_heads, hd), (1, 0, 2))      # (H, 1, hd)


def _prepare_params(params, n_heads, compute_dtype):
    (ln1_g, ln1_b, wq1, bq1, wk1, bk1, wv1, bv1, wo1, bo1,
     ln2_g, ln2_b, wq2, bq2, wk2, bk2, wv2, bv2, wo2, bo2,
     ln3_g, ln3_b, w1, b1, w2, b2) = params
    d = wq1.shape[0]
    hd = d // n_heads
    cdt = compute_dtype

    def sw(w):
        return _split_heads_w(w, n_heads)

    def sb(b):
        return _split_heads_b(b, n_heads)

    # fused QKV (self-attn) and fused KV (cross-attn), packed per head.
    wqkv1 = jnp.concatenate([sw(wq1), sw(wk1), sw(wv1)], axis=-1).astype(cdt)
    bqkv1 = jnp.concatenate([sb(bq1), sb(bk1), sb(bv1)], axis=-1)
    wo1_h = wo1.reshape(n_heads, hd, d).astype(cdt)

    wq2_h = sw(wq2).astype(cdt)
    bq2_h = sb(bq2)
    wkv2 = jnp.concatenate([sw(wk2), sw(wv2)], axis=-1).astype(cdt)
    bkv2 = jnp.concatenate([sb(bk2), sb(bv2)], axis=-1)
    wo2_h = wo2.reshape(n_heads, hd, d).astype(cdt)

    return (ln1_g, ln1_b, wqkv1, bqkv1, wo1_h, bo1,
            ln2_g, ln2_b, wq2_h, bq2_h, wkv2, bkv2, wo2_h, bo2,
            ln3_g, ln3_b, w1.astype(cdt), b1, w2.astype(cdt), b2)


@functools.partial(jax.jit,
                   static_argnames=("n_heads", "compute_dtype", "approx_recip"))
def decoder_layer_pallas(x_nbd, enc_nbd, src_mask_nb, params, n_heads,
                         compute_dtype=jnp.float32, approx_recip=False):
    """x_nbd: (n_tgt, b, d); enc_nbd: (n_src, b, d); src_mask_nb: (n_src, b)."""
    # sequence-first (PyTorch layout) -> batch-major, d on the lane axis.
    x = jnp.transpose(x_nbd, (1, 0, 2))                                # (b, n_tgt, d)
    enc = jnp.transpose(enc_nbd, (1, 0, 2))                            # (b, n_src, d)
    mask = jnp.transpose(src_mask_nb, (1, 0)).astype(jnp.float32)[:, None, :]
    b, n_tgt, d = x.shape
    n_src = enc.shape[1]
    head_dim = d // n_heads

    # causal mask hoisted out of the kernel (identical for every grid step).
    causal = jnp.triu(jnp.ones((n_tgt, n_tgt), jnp.float32), k=1)

    prep = _prepare_params(params, n_heads, compute_dtype)

    def full_spec(shape):
        nd = len(shape)
        return pl.BlockSpec(shape, lambda i, _nd=nd: (0,) * _nd)

    in_specs = [
        pl.BlockSpec((1, n_tgt, d), lambda i: (i, 0, 0)),
        pl.BlockSpec((1, n_src, d), lambda i: (i, 0, 0)),
        pl.BlockSpec((1, 1, n_src), lambda i: (i, 0, 0)),
        pl.BlockSpec((n_tgt, n_tgt), lambda i: (0, 0)),
    ] + [full_spec(w.shape) for w in prep]

    kernel = functools.partial(
        _decoder_layer_kernel, n_heads=n_heads, head_dim=head_dim,
        embed_dim=d, compute_dtype=compute_dtype, approx_recip=approx_recip)

    out = pl.pallas_call(
        kernel,
        out_shape=jax.ShapeDtypeStruct((b, n_tgt, d), x.dtype),
        grid=(b,),
        in_specs=in_specs,
        out_specs=pl.BlockSpec((1, n_tgt, d), lambda i: (i, 0, 0)),
        compiler_params=pltpu.CompilerParams(
            dimension_semantics=("parallel",),        # batch is independent (v7x: 2 TCs)
            vmem_limit_bytes=32 * 1024 * 1024),
    )(x, enc, mask, causal, *prep)
    return jnp.transpose(out, (1, 0, 2))               # back to (n_tgt, b, d)


# ----------------------------------------------------------------------------
# Deterministic parameter construction (xavier-uniform weights, zero biases,
# LayerNorm gamma=1 / beta=0), matching the shapes of the PyTorch module.
# Weights stored as (in, out) so the math is x @ W + b.
# ----------------------------------------------------------------------------
def make_params(key, d, hidden):
    def xavier(k, fan_in, fan_out):
        bound = sqrt(6.0 / (fan_in + fan_out))
        return jax.random.uniform(k, (fan_in, fan_out), jnp.float32, -bound, bound)

    ks = jax.random.split(key, 10)
    ones_d = jnp.ones((1, d), jnp.float32)
    zeros_d = jnp.zeros((1, d), jnp.float32)
    zeros_h = jnp.zeros((1, hidden), jnp.float32)
    params = (
        ones_d, zeros_d,                                   # ln self-att
        xavier(ks[0], d, d), zeros_d, xavier(ks[1], d, d), zeros_d,
        xavier(ks[2], d, d), zeros_d, xavier(ks[3], d, d), zeros_d,
        ones_d, zeros_d,                                   # ln enc-att
        xavier(ks[4], d, d), zeros_d, xavier(ks[5], d, d), zeros_d,
        xavier(ks[6], d, d), zeros_d, xavier(ks[7], d, d), zeros_d,
        ones_d, zeros_d,                                   # ln ff
        xavier(ks[8], d, hidden), zeros_h, xavier(ks[9], hidden, d), zeros_d,
    )
    return params


# ----------------------------------------------------------------------------
# Pure-JAX reference mirroring the PyTorch forward (for correctness check).
# ----------------------------------------------------------------------------
def decoder_layer_ref(x, enc, mask_bn, params, n_heads):
    (ln1_g, ln1_b, wq1, bq1, wk1, bk1, wv1, bv1, wo1, bo1,
     ln2_g, ln2_b, wq2, bq2, wk2, bk2, wv2, bv2, wo2, bo2,
     ln3_g, ln3_b, w1, b1, w2, b2) = params
    d = x.shape[-1]
    hd = d // n_heads

    def ln(v, g, b):
        mu = v.mean(-1, keepdims=True)
        var = ((v - mu) ** 2).mean(-1, keepdims=True)
        return (v - mu) / jnp.sqrt(var + 1e-5) * g + b

    def mha(q_in, kv_in, wq, bq, wk, bk, wv, bv, wo, bo,
            src_mask=None, causal=False):
        b_, m_, _ = q_in.shape
        n_ = kv_in.shape[1]
        q = (q_in @ wq + bq).reshape(b_, m_, n_heads, hd)
        k = (kv_in @ wk + bk).reshape(b_, n_, n_heads, hd)
        v = (kv_in @ wv + bv).reshape(b_, n_, n_heads, hd)
        s = jnp.einsum('bmhd,bnhd->bhmn', q, k) / sqrt(float(d))
        if src_mask is not None:
            s = jnp.where(src_mask[:, None, None, :] > 0.5, NEG_INF, s)
        if causal:
            cm = jnp.triu(jnp.ones((m_, n_)), k=1) == 1
            s = jnp.where(cm[None, None], NEG_INF, s)
        w = jax.nn.softmax(s, axis=-1)
        p = jnp.einsum('bhmn,bnhd->bmhd', w, v).reshape(b_, m_, d)
        return p @ wo + bo

    x = x + mha(ln(x, ln1_g, ln1_b), ln(x, ln1_g, ln1_b),
                wq1, bq1, wk1, bk1, wv1, bv1, wo1, bo1, causal=True)
    x = x + mha(ln(x, ln2_g, ln2_b), enc,
                wq2, bq2, wk2, bk2, wv2, bv2, wo2, bo2, src_mask=mask_bn)
    xn = ln(x, ln3_g, ln3_b)
    return x + (jnp.maximum(xn @ w1 + b1, 0.0) @ w2 + b2)


if __name__ == "__main__":
    D, H, HID = 32, 4, 64          # embed_dim, n_heads, hidden_dim
    B, N_TGT, N_SRC = 2, 8, 8      # batch, target len, source len

    key = jax.random.PRNGKey(0)
    kx, ke, kp = jax.random.split(key, 3)
    x_nbd = jax.random.normal(kx, (N_TGT, B, D), jnp.float32)     # (n, b, d)
    enc_nbd = jax.random.normal(ke, (N_SRC, B, D), jnp.float32)   # (n_src, b, d)
    # src_mask (n_src, b): 1 at padding positions (batch 0 -> last 1 masked,
    # batch 1 -> last 2 masked)
    src_mask_nb = (jnp.arange(N_SRC)[:, None]
                   >= (N_SRC - 1 - jnp.arange(B))[None, :]).astype(jnp.float32)

    params = make_params(kp, D, HID)

    ref = decoder_layer_ref(jnp.transpose(x_nbd, (1, 0, 2)),
                            jnp.transpose(enc_nbd, (1, 0, 2)),
                            jnp.transpose(src_mask_nb, (1, 0)),
                            params, H)
    ref = jnp.transpose(ref, (1, 0, 2))

    # f32 MXU path (exact reciprocal): must match the reference tightly.
    out_f32 = jax.block_until_ready(
        decoder_layer_pallas(x_nbd, enc_nbd, src_mask_nb, params, H))
    err_f32 = float(jnp.max(jnp.abs(out_f32 - ref)))
    assert jnp.allclose(out_f32, ref, rtol=1e-4, atol=1e-4), \
        f"f32 max abs err {err_f32}"

    # bf16 MXU path (v6e/v7x-oriented: bf16 operands, f32 accumulation,
    # approx EUP reciprocal) — checked against the f32 reference with a
    # tolerance appropriate for bf16 rounding.
    out_bf16 = jax.block_until_ready(
        decoder_layer_pallas(x_nbd, enc_nbd, src_mask_nb, params, H,
                             compute_dtype=jnp.bfloat16, approx_recip=True))
    err_bf16 = float(jnp.max(jnp.abs(out_bf16 - ref)))
    assert jnp.allclose(out_bf16, ref, rtol=1e-1, atol=2.5e-1), \
        f"bf16 max abs err {err_bf16}"

    print("KERNEL_OK")
</pallas_src>

<mosaic_0001>
module attributes {stable_mosaic.version = 11 : i64} {
  func.func @_decoder_layer_kernel(%arg0: i32, %arg1: memref<1x8x32xf32, #tpu.memory_space<vmem>>, %arg2: memref<1x8x32xf32, #tpu.memory_space<vmem>>, %arg3: memref<1x1x8xf32, #tpu.memory_space<vmem>>, %arg4: memref<8x8xf32, #tpu.memory_space<vmem>>, %arg5: memref<1x32xf32, #tpu.memory_space<vmem>>, %arg6: memref<1x32xf32, #tpu.memory_space<vmem>>, %arg7: memref<4x32x24xf32, #tpu.memory_space<vmem>>, %arg8: memref<4x1x24xf32, #tpu.memory_space<vmem>>, %arg9: memref<4x8x32xf32, #tpu.memory_space<vmem>>, %arg10: memref<1x32xf32, #tpu.memory_space<vmem>>, %arg11: memref<1x32xf32, #tpu.memory_space<vmem>>, %arg12: memref<1x32xf32, #tpu.memory_space<vmem>>, %arg13: memref<4x32x8xf32, #tpu.memory_space<vmem>>, %arg14: memref<4x1x8xf32, #tpu.memory_space<vmem>>, %arg15: memref<4x32x16xf32, #tpu.memory_space<vmem>>, %arg16: memref<4x1x16xf32, #tpu.memory_space<vmem>>, %arg17: memref<4x8x32xf32, #tpu.memory_space<vmem>>, %arg18: memref<1x32xf32, #tpu.memory_space<vmem>>, %arg19: memref<1x32xf32, #tpu.memory_space<vmem>>, %arg20: memref<1x32xf32, #tpu.memory_space<vmem>>, %arg21: memref<32x64xf32, #tpu.memory_space<vmem>>, %arg22: memref<1x64xf32, #tpu.memory_space<vmem>>, %arg23: memref<64x32xf32, #tpu.memory_space<vmem>>, %arg24: memref<1x32xf32, #tpu.memory_space<vmem>>, %arg25: memref<1x8x32xf32, #tpu.memory_space<vmem>>) attributes {dimension_semantics = [#tpu.dimension_semantics<parallel>], iteration_bounds = array<i64: 2>, scalar_prefetch = 0 : i64, scratch_operands = 0 : i64, tpu.core_type = #tpu.core_type<tc>, window_params = [{transform_indices = @transform_0, window_bounds = array<i64: 1, 8, 32>}, {transform_indices = @transform_1, window_bounds = array<i64: 1, 8, 32>}, {transform_indices = @transform_2, window_bounds = array<i64: 1, 1, 8>}, {pipeline_mode = #tpu.pipeline_mode<synchronous>, transform_indices = @transform_3, window_bounds = array<i64: 8, 8>}, {pipeline_mode = #tpu.pipeline_mode<synchronous>, transform_indices = @transform_4, window_bounds = array<i64: 1, 32>}, {pipeline_mode = #tpu.pipeline_mode<synchronous>, transform_indices = @transform_5, window_bounds = array<i64: 1, 32>}, {pipeline_mode = #tpu.pipeline_mode<synchronous>, transform_indices = @transform_6, window_bounds = array<i64: 4, 32, 24>}, {pipeline_mode = #tpu.pipeline_mode<synchronous>, transform_indices = @transform_7, window_bounds = array<i64: 4, 1, 24>}, {pipeline_mode = #tpu.pipeline_mode<synchronous>, transform_indices = @transform_8, window_bounds = array<i64: 4, 8, 32>}, {pipeline_mode = #tpu.pipeline_mode<synchronous>, transform_indices = @transform_9, window_bounds = array<i64: 1, 32>}, {pipeline_mode = #tpu.pipeline_mode<synchronous>, transform_indices = @transform_10, window_bounds = array<i64: 1, 32>}, {pipeline_mode = #tpu.pipeline_mode<synchronous>, transform_indices = @transform_11, window_bounds = array<i64: 1, 32>}, {pipeline_mode = #tpu.pipeline_mode<synchronous>, transform_indices = @transform_12, window_bounds = array<i64: 4, 32, 8>}, {pipeline_mode = #tpu.pipeline_mode<synchronous>, transform_indices = @transform_13, window_bounds = array<i64: 4, 1, 8>}, {pipeline_mode = #tpu.pipeline_mode<synchronous>, transform_indices = @transform_14, window_bounds = array<i64: 4, 32, 16>}, {pipeline_mode = #tpu.pipeline_mode<synchronous>, transform_indices = @transform_15, window_bounds = array<i64: 4, 1, 16>}, {pipeline_mode = #tpu.pipeline_mode<synchronous>, transform_indices = @transform_16, window_bounds = array<i64: 4, 8, 32>}, {pipeline_mode = #tpu.pipeline_mode<synchronous>, transform_indices = @transform_17, window_bounds = array<i64: 1, 32>}, {pipeline_mode = #tpu.pipeline_mode<synchronous>, transform_indices = @transform_18, window_bounds = array<i64: 1, 32>}, {pipeline_mode = #tpu.pipeline_mode<synchronous>, transform_indices = @transform_19, window_bounds = array<i64: 1, 32>}, {pipeline_mode = #tpu.pipeline_mode<synchronous>, transform_indices = @transform_20, window_bounds = array<i64: 32, 64>}, {pipeline_mode = #tpu.pipeline_mode<synchronous>, transform_indices = @transform_21, window_bounds = array<i64: 1, 64>}, {pipeline_mode = #tpu.pipeline_mode<synchronous>, transform_indices = @transform_22, window_bounds = array<i64: 64, 32>}, {pipeline_mode = #tpu.pipeline_mode<synchronous>, transform_indices = @transform_23, window_bounds = array<i64: 1, 32>}, {transform_indices = @transform_24, window_bounds = array<i64: 1, 8, 32>}]} {
    %c0 = arith.constant 0 : index
    %c0_0 = arith.constant 0 : index
    %c0_1 = arith.constant 0 : index
    %0 = vector.load %arg1[%c0, %c0_0, %c0_1] : memref<1x8x32xf32, #tpu.memory_space<vmem>>, vector<1x8x32xf32>
    %1 = vector.shape_cast %0 : vector<1x8x32xf32> to vector<8x32xf32>
    %c0_2 = arith.constant 0 : index
    %c0_3 = arith.constant 0 : index
    %c0_4 = arith.constant 0 : index
    %2 = vector.load %arg2[%c0_2, %c0_3, %c0_4] : memref<1x8x32xf32, #tpu.memory_space<vmem>>, vector<1x8x32xf32>
    %3 = vector.shape_cast %2 : vector<1x8x32xf32> to vector<8x32xf32>
    %cst = arith.constant dense<0.000000e+00> : vector<8xf32>
    %4 = vector.multi_reduction <add>, %1, %cst [1] : vector<8x32xf32> to vector<8xf32>
    %5 = vector.shape_cast %4 : vector<8xf32> to vector<8x1xf32>
    %cst_5 = arith.constant 3.200000e+01 : f32
    %6 = vector.broadcast %cst_5 : f32 to vector<8x1xf32>
    %7 = arith.divf %5, %6 : vector<8x1xf32>
    %8 = vector.broadcast %7 : vector<8x1xf32> to vector<8x32xf32>
    %9 = arith.subf %1, %8 : vector<8x32xf32>
    %10 = arith.mulf %9, %9 : vector<8x32xf32>
    %cst_6 = arith.constant dense<0.000000e+00> : vector<8xf32>
    %11 = vector.multi_reduction <add>, %10, %cst_6 [1] : vector<8x32xf32> to vector<8xf32>
    %12 = vector.shape_cast %11 : vector<8xf32> to vector<8x1xf32>
    %cst_7 = arith.constant 3.200000e+01 : f32
    %13 = vector.broadcast %cst_7 : f32 to vector<8x1xf32>
    %14 = arith.divf %12, %13 : vector<8x1xf32>
    %15 = vector.broadcast %7 : vector<8x1xf32> to vector<8x32xf32>
    %16 = arith.subf %1, %15 : vector<8x32xf32>
    %cst_8 = arith.constant 9.99999974E-6 : f32
    %17 = vector.broadcast %cst_8 : f32 to vector<8x1xf32>
    %18 = arith.addf %14, %17 : vector<8x1xf32>
    %19 = math.rsqrt %18 : vector<8x1xf32>
    %20 = vector.broadcast %19 : vector<8x1xf32> to vector<8x32xf32>
    %21 = arith.mulf %16, %20 : vector<8x32xf32>
    %c0_9 = arith.constant 0 : index
    %c0_10 = arith.constant 0 : index
    %22 = vector.load %arg5[%c0_9, %c0_10] : memref<1x32xf32, #tpu.memory_space<vmem>>, vector<1x32xf32>
    %23 = vector.broadcast %22 : vector<1x32xf32> to vector<8x32xf32>
    %24 = arith.mulf %21, %23 : vector<8x32xf32>
    %c0_11 = arith.constant 0 : index
    %c0_12 = arith.constant 0 : index
    %25 = vector.load %arg6[%c0_11, %c0_12] : memref<1x32xf32, #tpu.memory_space<vmem>>, vector<1x32xf32>
    %26 = vector.broadcast %25 : vector<1x32xf32> to vector<8x32xf32>
    %27 = arith.addf %24, %26 : vector<8x32xf32>
    %28 = vector.shape_cast %27 : vector<8x32xf32> to vector<1x8x32xf32>
    %29 = vector.shape_cast %28 : vector<1x8x32xf32> to vector<1x8x32xf32>
    %30 = vector.broadcast %29 : vector<1x8x32xf32> to vector<4x8x32xf32>
    %c0_13 = arith.constant 0 : index
    %c0_14 = arith.constant 0 : index
    %c0_15 = arith.constant 0 : index
    %31 = vector.load %arg7[%c0_13, %c0_14, %c0_15] : memref<4x32x24xf32, #tpu.memory_space<vmem>>, vector<4x32x24xf32>
    "tpu.trace_start"() <{level = 10 : i32, message = "hnd,hde->hne"}> : () -> ()
    %cst_16 = arith.constant dense<0.000000e+00> : vector<4x8x24xf32>
    %32 = tpu.matmul %30, %31, %cst_16 {dimension_numbers = #tpu.dot_dimension_numbers<[2], [1], [1], [2], [0, 0, 0, 1, 1, 2], [0], [0]>} : vector<4x8x32xf32>, vector<4x32x24xf32>, vector<4x8x24xf32> -> vector<4x8x24xf32>
    "tpu.trace_stop"() : () -> ()
    %c0_17 = arith.constant 0 : index
    %c0_18 = arith.constant 0 : index
    %c0_19 = arith.constant 0 : index
    %33 = vector.load %arg8[%c0_17, %c0_18, %c0_19] : memref<4x1x24xf32, #tpu.memory_space<vmem>>, vector<4x1x24xf32>
    %34 = vector.broadcast %33 : vector<4x1x24xf32> to vector<4x8x24xf32>
    %35 = arith.addf %32, %34 : vector<4x8x24xf32>
    %36 = vector.extract_strided_slice %35 {offsets = [0, 0, 0], sizes = [4, 8, 8], strides = [1, 1, 1]} : vector<4x8x24xf32> to vector<4x8x8xf32>
    %37 = vector.extract_strided_slice %35 {offsets = [0, 0, 8], sizes = [4, 8, 8], strides = [1, 1, 1]} : vector<4x8x24xf32> to vector<4x8x8xf32>
    %38 = vector.extract_strided_slice %35 {offsets = [0, 0, 16], sizes = [4, 8, 8], strides = [1, 1, 1]} : vector<4x8x24xf32> to vector<4x8x8xf32>
    %c0_20 = arith.constant 0 : index
    %c0_21 = arith.constant 0 : index
    %39 = vector.load %arg4[%c0_20, %c0_21] : memref<8x8xf32, #tpu.memory_space<vmem>>, vector<8x8xf32>
    %cst_22 = arith.constant 5.000000e-01 : f32
    %40 = vector.broadcast %cst_22 : f32 to vector<8x8xf32>
    %41 = arith.cmpf ogt, %39, %40 : vector<8x8xf32>
    %42 = vector.shape_cast %41 : vector<8x8xi1> to vector<1x8x8xi1>
    "tpu.trace_start"() <{level = 10 : i32, message = "hqd,hkd->hqk"}> : () -> ()
    %cst_23 = arith.constant dense<0.000000e+00> : vector<4x8x8xf32>
    %43 = tpu.matmul %36, %37, %cst_23 {dimension_numbers = #tpu.dot_dimension_numbers<[2], [2], [1], [1], [0, 0, 0, 1, 1, 1], [0], [0]>} : vector<4x8x8xf32>, vector<4x8x8xf32>, vector<4x8x8xf32> -> vector<4x8x8xf32>
    "tpu.trace_stop"() : () -> ()
    %cst_24 = arith.constant 0.176776692 : f32
    %44 = vector.broadcast %cst_24 : f32 to vector<4x8x8xf32>
    %45 = arith.mulf %43, %44 : vector<4x8x8xf32>
    %cst_25 = arith.constant -1.000000e+05 : f32
    %46 = vector.shape_cast %42 : vector<1x8x8xi1> to vector<1x8x8xi1>
    %47 = vector.broadcast %46 : vector<1x8x8xi1> to vector<4x8x8xi1>
    %48 = vector.broadcast %cst_25 : f32 to vector<4x8x8xf32>
    %49 = arith.select %47, %48, %45 : vector<4x8x8xi1>, vector<4x8x8xf32>
    %cst_26 = arith.constant dense<0xFF800000> : vector<4x8xf32>
    %50 = vector.multi_reduction <maximumf>, %49, %cst_26 [2] : vector<4x8x8xf32> to vector<4x8xf32>
    %51 = vector.shape_cast %50 : vector<4x8xf32> to vector<4x8x1xf32>
    %52 = vector.broadcast %51 : vector<4x8x1xf32> to vector<4x8x8xf32>
    %53 = arith.subf %49, %52 : vector<4x8x8xf32>
    %54 = math.exp %53 : vector<4x8x8xf32>
    %cst_27 = arith.constant dense<0.000000e+00> : vector<4x8xf32>
    %55 = vector.multi_reduction <add>, %54, %cst_27 [2] : vector<4x8x8xf32> to vector<4x8xf32>
    %56 = vector.shape_cast %55 : vector<4x8xf32> to vector<4x8x1xf32>
    %57 = tpu.reciprocal %56 : vector<4x8x1xf32> -> vector<4x8x1xf32>
    %58 = vector.broadcast %57 : vector<4x8x1xf32> to vector<4x8x8xf32>
    %59 = arith.mulf %54, %58 : vector<4x8x8xf32>
    "tpu.trace_start"() <{level = 10 : i32, message = "hqk,hkd->hqd"}> : () -> ()
    %cst_28 = arith.constant dense<0.000000e+00> : vector<4x8x8xf32>
    %60 = tpu.matmul %59, %38, %cst_28 {dimension_numbers = #tpu.dot_dimension_numbers<[2], [1], [1], [2], [0, 0, 0, 1, 1, 2], [0], [0]>} : vector<4x8x8xf32>, vector<4x8x8xf32>, vector<4x8x8xf32> -> vector<4x8x8xf32>
    "tpu.trace_stop"() : () -> ()
    %c0_29 = arith.constant 0 : index
    %c0_30 = arith.constant 0 : index
    %c0_31 = arith.constant 0 : index
    %61 = vector.load %arg9[%c0_29, %c0_30, %c0_31] : memref<4x8x32xf32, #tpu.memory_space<vmem>>, vector<4x8x32xf32>
    "tpu.trace_start"() <{level = 10 : i32, message = "hqc,hcd->hqd"}> : () -> ()
    %cst_32 = arith.constant dense<0.000000e+00> : vector<4x8x32xf32>
    %62 = tpu.matmul %60, %61, %cst_32 {dimension_numbers = #tpu.dot_dimension_numbers<[2], [1], [1], [2], [0, 0, 0, 1, 1, 2], [0], [0]>} : vector<4x8x8xf32>, vector<4x8x32xf32>, vector<4x8x32xf32> -> vector<4x8x32xf32>
    "tpu.trace_stop"() : () -> ()
    %cst_33 = arith.constant dense<0.000000e+00> : vector<8x32xf32>
    %63 = vector.multi_reduction <add>, %62, %cst_33 [0] : vector<4x8x32xf32> to vector<8x32xf32>
    %c0_34 = arith.constant 0 : index
    %c0_35 = arith.constant 0 : index
    %64 = vector.load %arg10[%c0_34, %c0_35] : memref<1x32xf32, #tpu.memory_space<vmem>>, vector<1x32xf32>
    %65 = vector.broadcast %64 : vector<1x32xf32> to vector<8x32xf32>
    %66 = arith.addf %63, %65 : vector<8x32xf32>
    %67 = arith.addf %1, %66 : vector<8x32xf32>
    %cst_36 = arith.constant dense<0.000000e+00> : vector<8xf32>
    %68 = vector.multi_reduction <add>, %67, %cst_36 [1] : vector<8x32xf32> to vector<8xf32>
    %69 = vector.shape_cast %68 : vector<8xf32> to vector<8x1xf32>
    %cst_37 = arith.constant 3.200000e+01 : f32
    %70 = vector.broadcast %cst_37 : f32 to vector<8x1xf32>
    %71 = arith.divf %69, %70 : vector<8x1xf32>
    %72 = vector.broadcast %71 : vector<8x1xf32> to vector<8x32xf32>
    %73 = arith.subf %67, %72 : vector<8x32xf32>
    %74 = arith.mulf %73, %73 : vector<8x32xf32>
    %cst_38 = arith.constant dense<0.000000e+00> : vector<8xf32>
    %75 = vector.multi_reduction <add>, %74, %cst_38 [1] : vector<8x32xf32> to vector<8xf32>
    %76 = vector.shape_cast %75 : vector<8xf32> to vector<8x1xf32>
    %cst_39 = arith.constant 3.200000e+01 : f32
    %77 = vector.broadcast %cst_39 : f32 to vector<8x1xf32>
    %78 = arith.divf %76, %77 : vector<8x1xf32>
    %79 = vector.broadcast %71 : vector<8x1xf32> to vector<8x32xf32>
    %80 = arith.subf %67, %79 : vector<8x32xf32>
    %cst_40 = arith.constant 9.99999974E-6 : f32
    %81 = vector.broadcast %cst_40 : f32 to vector<8x1xf32>
    %82 = arith.addf %78, %81 : vector<8x1xf32>
    %83 = math.rsqrt %82 : vector<8x1xf32>
    %84 = vector.broadcast %83 : vector<8x1xf32> to vector<8x32xf32>
    %85 = arith.mulf %80, %84 : vector<8x32xf32>
    %c0_41 = arith.constant 0 : index
    %c0_42 = arith.constant 0 : index
    %86 = vector.load %arg11[%c0_41, %c0_42] : memref<1x32xf32, #tpu.memory_space<vmem>>, vector<1x32xf32>
    %87 = vector.broadcast %86 : vector<1x32xf32> to vector<8x32xf32>
    %88 = arith.mulf %85, %87 : vector<8x32xf32>
    %c0_43 = arith.constant 0 : index
    %c0_44 = arith.constant 0 : index
    %89 = vector.load %arg12[%c0_43, %c0_44] : memref<1x32xf32, #tpu.memory_space<vmem>>, vector<1x32xf32>
    %90 = vector.broadcast %89 : vector<1x32xf32> to vector<8x32xf32>
    %91 = arith.addf %88, %90 : vector<8x32xf32>
    %92 = vector.shape_cast %91 : vector<8x32xf32> to vector<1x8x32xf32>
    %93 = vector.shape_cast %92 : vector<1x8x32xf32> to vector<1x8x32xf32>
    %94 = vector.broadcast %93 : vector<1x8x32xf32> to vector<4x8x32xf32>
    %c0_45 = arith.constant 0 : index
    %c0_46 = arith.constant 0 : index
    %c0_47 = arith.constant 0 : index
    %95 = vector.load %arg13[%c0_45, %c0_46, %c0_47] : memref<4x32x8xf32, #tpu.memory_space<vmem>>, vector<4x32x8xf32>
    "tpu.trace_start"() <{level = 10 : i32, message = "hnd,hde->hne"}> : () -> ()
    %cst_48 = arith.constant dense<0.000000e+00> : vector<4x8x8xf32>
    %96 = tpu.matmul %94, %95, %cst_48 {dimension_numbers = #tpu.dot_dimension_numbers<[2], [1], [1], [2], [0, 0, 0, 1, 1, 2], [0], [0]>} : vector<4x8x32xf32>, vector<4x32x8xf32>, vector<4x8x8xf32> -> vector<4x8x8xf32>
    "tpu.trace_stop"() : () -> ()
    %c0_49 = arith.constant 0 : index
    %c0_50 = arith.constant 0 : index
    %c0_51 = arith.constant 0 : index
    %97 = vector.load %arg14[%c0_49, %c0_50, %c0_51] : memref<4x1x8xf32, #tpu.memory_space<vmem>>, vector<4x1x8xf32>
    %98 = vector.broadcast %97 : vector<4x1x8xf32> to vector<4x8x8xf32>
    %99 = arith.addf %96, %98 : vector<4x8x8xf32>
    %100 = vector.shape_cast %3 : vector<8x32xf32> to vector<1x8x32xf32>
    %101 = vector.shape_cast %100 : vector<1x8x32xf32> to vector<1x8x32xf32>
    %102 = vector.broadcast %101 : vector<1x8x32xf32> to vector<4x8x32xf32>
    %c0_52 = arith.constant 0 : index
    %c0_53 = arith.constant 0 : index
    %c0_54 = arith.constant 0 : index
    %103 = vector.load %arg15[%c0_52, %c0_53, %c0_54] : memref<4x32x16xf32, #tpu.memory_space<vmem>>, vector<4x32x16xf32>
    "tpu.trace_start"() <{level = 10 : i32, message = "hnd,hde->hne"}> : () -> ()
    %cst_55 = arith.constant dense<0.000000e+00> : vector<4x8x16xf32>
    %104 = tpu.matmul %102, %103, %cst_55 {dimension_numbers = #tpu.dot_dimension_numbers<[2], [1], [1], [2], [0, 0, 0, 1, 1, 2], [0], [0]>} : vector<4x8x32xf32>, vector<4x32x16xf32>, vector<4x8x16xf32> -> vector<4x8x16xf32>
    "tpu.trace_stop"() : () -> ()
    %c0_56 = arith.constant 0 : index
    %c0_57 = arith.constant 0 : index
    %c0_58 = arith.constant 0 : index
    %105 = vector.load %arg16[%c0_56, %c0_57, %c0_58] : memref<4x1x16xf32, #tpu.memory_space<vmem>>, vector<4x1x16xf32>
    %106 = vector.broadcast %105 : vector<4x1x16xf32> to vector<4x8x16xf32>
    %107 = arith.addf %104, %106 : vector<4x8x16xf32>
    %108 = vector.extract_strided_slice %107 {offsets = [0, 0, 0], sizes = [4, 8, 8], strides = [1, 1, 1]} : vector<4x8x16xf32> to vector<4x8x8xf32>
    %109 = vector.extract_strided_slice %107 {offsets = [0, 0, 8], sizes = [4, 8, 8], strides = [1, 1, 1]} : vector<4x8x16xf32> to vector<4x8x8xf32>
    %c0_59 = arith.constant 0 : index
    %c0_60 = arith.constant 0 : index
    %c0_61 = arith.constant 0 : index
    %110 = vector.load %arg3[%c0_59, %c0_60, %c0_61] : memref<1x1x8xf32, #tpu.memory_space<vmem>>, vector<1x1x8xf32>
    %111 = vector.shape_cast %110 : vector<1x1x8xf32> to vector<1x8xf32>
    %cst_62 = arith.constant 5.000000e-01 : f32
    %112 = vector.broadcast %cst_62 : f32 to vector<1x8xf32>
    %113 = arith.cmpf ogt, %111, %112 : vector<1x8xf32>
    %114 = vector.shape_cast %113 : vector<1x8xi1> to vector<1x1x8xi1>
    "tpu.trace_start"() <{level = 10 : i32, message = "hqd,hkd->hqk"}> : () -> ()
    %cst_63 = arith.constant dense<0.000000e+00> : vector<4x8x8xf32>
    %115 = tpu.matmul %99, %108, %cst_63 {dimension_numbers = #tpu.dot_dimension_numbers<[2], [2], [1], [1], [0, 0, 0, 1, 1, 1], [0], [0]>} : vector<4x8x8xf32>, vector<4x8x8xf32>, vector<4x8x8xf32> -> vector<4x8x8xf32>
    "tpu.trace_stop"() : () -> ()
    %cst_64 = arith.constant 0.176776692 : f32
    %116 = vector.broadcast %cst_64 : f32 to vector<4x8x8xf32>
    %117 = arith.mulf %115, %116 : vector<4x8x8xf32>
    %cst_65 = arith.constant -1.000000e+05 : f32
    %118 = vector.shape_cast %114 : vector<1x1x8xi1> to vector<1x1x8xi1>
    %119 = vector.broadcast %118 : vector<1x1x8xi1> to vector<4x8x8xi1>
    %120 = vector.broadcast %cst_65 : f32 to vector<4x8x8xf32>
    %121 = arith.select %119, %120, %117 : vector<4x8x8xi1>, vector<4x8x8xf32>
    %cst_66 = arith.constant dense<0xFF800000> : vector<4x8xf32>
    %122 = vector.multi_reduction <maximumf>, %121, %cst_66 [2] : vector<4x8x8xf32> to vector<4x8xf32>
    %123 = vector.shape_cast %122 : vector<4x8xf32> to vector<4x8x1xf32>
    %124 = vector.broadcast %123 : vector<4x8x1xf32> to vector<4x8x8xf32>
    %125 = arith.subf %121, %124 : vector<4x8x8xf32>
    %126 = math.exp %125 : vector<4x8x8xf32>
    %cst_67 = arith.constant dense<0.000000e+00> : vector<4x8xf32>
    %127 = vector.multi_reduction <add>, %126, %cst_67 [2] : vector<4x8x8xf32> to vector<4x8xf32>
    %128 = vector.shape_cast %127 : vector<4x8xf32> to vector<4x8x1xf32>
    %129 = tpu.reciprocal %128 : vector<4x8x1xf32> -> vector<4x8x1xf32>
    %130 = vector.broadcast %129 : vector<4x8x1xf32> to vector<4x8x8xf32>
    %131 = arith.mulf %126, %130 : vector<4x8x8xf32>
    "tpu.trace_start"() <{level = 10 : i32, message = "hqk,hkd->hqd"}> : () -> ()
    %cst_68 = arith.constant dense<0.000000e+00> : vector<4x8x8xf32>
    %132 = tpu.matmul %131, %109, %cst_68 {dimension_numbers = #tpu.dot_dimension_numbers<[2], [1], [1], [2], [0, 0, 0, 1, 1, 2], [0], [0]>} : vector<4x8x8xf32>, vector<4x8x8xf32>, vector<4x8x8xf32> -> vector<4x8x8xf32>
    "tpu.trace_stop"() : () -> ()
    %c0_69 = arith.constant 0 : index
    %c0_70 = arith.constant 0 : index
    %c0_71 = arith.constant 0 : index
    %133 = vector.load %arg17[%c0_69, %c0_70, %c0_71] : memref<4x8x32xf32, #tpu.memory_space<vmem>>, vector<4x8x32xf32>
    "tpu.trace_start"() <{level = 10 : i32, message = "hqc,hcd->hqd"}> : () -> ()
    %cst_72 = arith.constant dense<0.000000e+00> : vector<4x8x32xf32>
    %134 = tpu.matmul %132, %133, %cst_72 {dimension_numbers = #tpu.dot_dimension_numbers<[2], [1], [1], [2], [0, 0, 0, 1, 1, 2], [0], [0]>} : vector<4x8x8xf32>, vector<4x8x32xf32>, vector<4x8x32xf32> -> vector<4x8x32xf32>
    "tpu.trace_stop"() : () -> ()
    %cst_73 = arith.constant dense<0.000000e+00> : vector<8x32xf32>
    %135 = vector.multi_reduction <add>, %134, %cst_73 [0] : vector<4x8x32xf32> to vector<8x32xf32>
    %c0_74 = arith.constant 0 : index
    %c0_75 = arith.constant 0 : index
    %136 = vector.load %arg18[%c0_74, %c0_75] : memref<1x32xf32, #tpu.memory_space<vmem>>, vector<1x32xf32>
    %137 = vector.broadcast %136 : vector<1x32xf32> to vector<8x32xf32>
    %138 = arith.addf %135, %137 : vector<8x32xf32>
    %139 = arith.addf %67, %138 : vector<8x32xf32>
    %cst_76 = arith.constant dense<0.000000e+00> : vector<8xf32>
    %140 = vector.multi_reduction <add>, %139, %cst_76 [1] : vector<8x32xf32> to vector<8xf32>
    %141 = vector.shape_cast %140 : vector<8xf32> to vector<8x1xf32>
    %cst_77 = arith.constant 3.200000e+01 : f32
    %142 = vector.broadcast %cst_77 : f32 to vector<8x1xf32>
    %143 = arith.divf %141, %142 : vector<8x1xf32>
    %144 = vector.broadcast %143 : vector<8x1xf32> to vector<8x32xf32>
    %145 = arith.subf %139, %144 : vector<8x32xf32>
    %146 = arith.mulf %145, %145 : vector<8x32xf32>
    %cst_78 = arith.constant dense<0.000000e+00> : vector<8xf32>
    %147 = vector.multi_reduction <add>, %146, %cst_78 [1] : vector<8x32xf32> to vector<8xf32>
    %148 = vector.shape_cast %147 : vector<8xf32> to vector<8x1xf32>
    %cst_79 = arith.constant 3.200000e+01 : f32
    %149 = vector.broadcast %cst_79 : f32 to vector<8x1xf32>
    %150 = arith.divf %148, %149 : vector<8x1xf32>
    %151 = vector.broadcast %143 : vector<8x1xf32> to vector<8x32xf32>
    %152 = arith.subf %139, %151 : vector<8x32xf32>
    %cst_80 = arith.constant 9.99999974E-6 : f32
    %153 = vector.broadcast %cst_80 : f32 to vector<8x1xf32>
    %154 = arith.addf %150, %153 : vector<8x1xf32>
    %155 = math.rsqrt %154 : vector<8x1xf32>
    %156 = vector.broadcast %155 : vector<8x1xf32> to vector<8x32xf32>
    %157 = arith.mulf %152, %156 : vector<8x32xf32>
    %c0_81 = arith.constant 0 : index
    %c0_82 = arith.constant 0 : index
    %158 = vector.load %arg19[%c0_81, %c0_82] : memref<1x32xf32, #tpu.memory_space<vmem>>, vector<1x32xf32>
    %159 = vector.broadcast %158 : vector<1x32xf32> to vector<8x32xf32>
    %160 = arith.mulf %157, %159 : vector<8x32xf32>
    %c0_83 = arith.constant 0 : index
    %c0_84 = arith.constant 0 : index
    %161 = vector.load %arg20[%c0_83, %c0_84] : memref<1x32xf32, #tpu.memory_space<vmem>>, vector<1x32xf32>
    %162 = vector.broadcast %161 : vector<1x32xf32> to vector<8x32xf32>
    %163 = arith.addf %160, %162 : vector<8x32xf32>
    %c0_85 = arith.constant 0 : index
    %c0_86 = arith.constant 0 : index
    %164 = vector.load %arg21[%c0_85, %c0_86] : memref<32x64xf32, #tpu.memory_space<vmem>>, vector<32x64xf32>
    %cst_87 = arith.constant dense<0.000000e+00> : vector<8x64xf32>
    %165 = tpu.matmul %163, %164, %cst_87 {dimension_numbers = #tpu.dot_dimension_numbers<[1], [0], [0], [1], [0, 0, 1, 1], [], []>} : vector<8x32xf32>, vector<32x64xf32>, vector<8x64xf32> -> vector<8x64xf32>
    %c0_88 = arith.constant 0 : index
    %c0_89 = arith.constant 0 : index
    %166 = vector.load %arg22[%c0_88, %c0_89] : memref<1x64xf32, #tpu.memory_space<vmem>>, vector<1x64xf32>
    %167 = vector.broadcast %166 : vector<1x64xf32> to vector<8x64xf32>
    %168 = arith.addf %165, %167 : vector<8x64xf32>
    %cst_90 = arith.constant 0.000000e+00 : f32
    %169 = vector.broadcast %cst_90 : f32 to vector<8x64xf32>
    %170 = arith.maximumf %168, %169 : vector<8x64xf32>
    %c0_91 = arith.constant 0 : index
    %c0_92 = arith.constant 0 : index
    %171 = vector.load %arg23[%c0_91, %c0_92] : memref<64x32xf32, #tpu.memory_space<vmem>>, vector<64x32xf32>
    %cst_93 = arith.constant dense<0.000000e+00> : vector<8x32xf32>
    %172 = tpu.matmul %170, %171, %cst_93 {dimension_numbers = #tpu.dot_dimension_numbers<[1], [0], [0], [1], [0, 0, 1, 1], [], []>} : vector<8x64xf32>, vector<64x32xf32>, vector<8x32xf32> -> vector<8x32xf32>
    %c0_94 = arith.constant 0 : index
    %c0_95 = arith.constant 0 : index
    %173 = vector.load %arg24[%c0_94, %c0_95] : memref<1x32xf32, #tpu.memory_space<vmem>>, vector<1x32xf32>
    %174 = vector.broadcast %173 : vector<1x32xf32> to vector<8x32xf32>
    %175 = arith.addf %172, %174 : vector<8x32xf32>
    %176 = arith.addf %139, %175 : vector<8x32xf32>
    %c0_96 = arith.constant 0 : index
    %c0_97 = arith.constant 0 : index
    %c0_98 = arith.constant 0 : index
    %177 = vector.load %arg25[%c0_96, %c0_97, %c0_98] : memref<1x8x32xf32, #tpu.memory_space<vmem>>, vector<1x8x32xf32>
    %178 = vector.shape_cast %177 : vector<1x8x32xf32> to vector<8x32xf32>
    %179 = vector.shape_cast %176 : vector<8x32xf32> to vector<1x8x32xf32>
    tpu.vector_store %arg25[%c0_96, %c0_97, %c0_98], %179 {strides = array<i32>} : memref<1x8x32xf32, #tpu.memory_space<vmem>>, vector<1x8x32xf32>,
    return
  }
  func.func @transform_0(%arg0: i32) -> (i32, i32, i32) {
    %c0_i32 = arith.constant 0 : i32
    %c0_i32_0 = arith.constant 0 : i32
    %c0_i32_1 = arith.constant 0 : i32
    return %arg0, %c0_i32, %c0_i32_0 : i32, i32, i32
  }
  func.func @transform_1(%arg0: i32) -> (i32, i32, i32) {
    %c0_i32 = arith.constant 0 : i32
    %c0_i32_0 = arith.constant 0 : i32
    %c0_i32_1 = arith.constant 0 : i32
    return %arg0, %c0_i32, %c0_i32_0 : i32, i32, i32
  }
  func.func @transform_2(%arg0: i32) -> (i32, i32, i32) {
    %c0_i32 = arith.constant 0 : i32
    %c0_i32_0 = arith.constant 0 : i32
    %c0_i32_1 = arith.constant 0 : i32
    return %arg0, %c0_i32, %c0_i32_0 : i32, i32, i32
  }
  func.func @transform_3(%arg0: i32) -> (i32, i32) {
    %c0_i32 = arith.constant 0 : i32
    %c0_i32_0 = arith.constant 0 : i32
    %c0_i32_1 = arith.constant 0 : i32
    return %c0_i32, %c0_i32_0 : i32, i32
  }
  func.func @transform_4(%arg0: i32) -> (i32, i32) {
    %c0_i32 = arith.constant 0 : i32
    %c0_i32_0 = arith.constant 0 : i32
    %c0_i32_1 = arith.constant 0 : i32
    return %c0_i32, %c0_i32_0 : i32, i32
  }
  func.func @transform_5(%arg0: i32) -> (i32, i32) {
    %c0_i32 = arith.constant 0 : i32
    %c0_i32_0 = arith.constant 0 : i32
    %c0_i32_1 = arith.constant 0 : i32
    return %c0_i32, %c0_i32_0 : i32, i32
  }
  func.func @transform_6(%arg0: i32) -> (i32, i32, i32) {
    %c0_i32 = arith.constant 0 : i32
    %c0_i32_0 = arith.constant 0 : i32
    %c0_i32_1 = arith.constant 0 : i32
    %c0_i32_2 = arith.constant 0 : i32
    return %c0_i32, %c0_i32_0, %c0_i32_1 : i32, i32, i32
  }
  func.func @transform_7(%arg0: i32) -> (i32, i32, i32) {
    %c0_i32 = arith.constant 0 : i32
    %c0_i32_0 = arith.constant 0 : i32
    %c0_i32_1 = arith.constant 0 : i32
    %c0_i32_2 = arith.constant 0 : i32
    return %c0_i32, %c0_i32_0, %c0_i32_1 : i32, i32, i32
  }
  func.func @transform_8(%arg0: i32) -> (i32, i32, i32) {
    %c0_i32 = arith.constant 0 : i32
    %c0_i32_0 = arith.constant 0 : i32
    %c0_i32_1 = arith.constant 0 : i32
    %c0_i32_2 = arith.constant 0 : i32
    return %c0_i32, %c0_i32_0, %c0_i32_1 : i32, i32, i32
  }
  func.func @transform_9(%arg0: i32) -> (i32, i32) {
    %c0_i32 = arith.constant 0 : i32
    %c0_i32_0 = arith.constant 0 : i32
    %c0_i32_1 = arith.constant 0 : i32
    return %c0_i32, %c0_i32_0 : i32, i32
  }
  func.func @transform_10(%arg0: i32) -> (i32, i32) {
    %c0_i32 = arith.constant 0 : i32
    %c0_i32_0 = arith.constant 0 : i32
    %c0_i32_1 = arith.constant 0 : i32
    return %c0_i32, %c0_i32_0 : i32, i32
  }
  func.func @transform_11(%arg0: i32) -> (i32, i32) {
    %c0_i32 = arith.constant 0 : i32
    %c0_i32_0 = arith.constant 0 : i32
    %c0_i32_1 = arith.constant 0 : i32
    return %c0_i32, %c0_i32_0 : i32, i32
  }
  func.func @transform_12(%arg0: i32) -> (i32, i32, i32) {
    %c0_i32 = arith.constant 0 : i32
    %c0_i32_0 = arith.constant 0 : i32
    %c0_i32_1 = arith.constant 0 : i32
    %c0_i32_2 = arith.constant 0 : i32
    return %c0_i32, %c0_i32_0, %c0_i32_1 : i32, i32, i32
  }
  func.func @transform_13(%arg0: i32) -> (i32, i32, i32) {
    %c0_i32 = arith.constant 0 : i32
    %c0_i32_0 = arith.constant 0 : i32
    %c0_i32_1 = arith.constant 0 : i32
    %c0_i32_2 = arith.constant 0 : i32
    return %c0_i32, %c0_i32_0, %c0_i32_1 : i32, i32, i32
  }
  func.func @transform_14(%arg0: i32) -> (i32, i32, i32) {
    %c0_i32 = arith.constant 0 : i32
    %c0_i32_0 = arith.constant 0 : i32
    %c0_i32_1 = arith.constant 0 : i32
    %c0_i32_2 = arith.constant 0 : i32
    return %c0_i32, %c0_i32_0, %c0_i32_1 : i32, i32, i32
  }
  func.func @transform_15(%arg0: i32) -> (i32, i32, i32) {
    %c0_i32 = arith.constant 0 : i32
    %c0_i32_0 = arith.constant 0 : i32
    %c0_i32_1 = arith.constant 0 : i32
    %c0_i32_2 = arith.constant 0 : i32
    return %c0_i32, %c0_i32_0, %c0_i32_1 : i32, i32, i32
  }
  func.func @transform_16(%arg0: i32) -> (i32, i32, i32) {
    %c0_i32 = arith.constant 0 : i32
    %c0_i32_0 = arith.constant 0 : i32
    %c0_i32_1 = arith.constant 0 : i32
    %c0_i32_2 = arith.constant 0 : i32
    return %c0_i32, %c0_i32_0, %c0_i32_1 : i32, i32, i32
  }
  func.func @transform_17(%arg0: i32) -> (i32, i32) {
    %c0_i32 = arith.constant 0 : i32
    %c0_i32_0 = arith.constant 0 : i32
    %c0_i32_1 = arith.constant 0 : i32
    return %c0_i32, %c0_i32_0 : i32, i32
  }
  func.func @transform_18(%arg0: i32) -> (i32, i32) {
    %c0_i32 = arith.constant 0 : i32
    %c0_i32_0 = arith.constant 0 : i32
    %c0_i32_1 = arith.constant 0 : i32
    return %c0_i32, %c0_i32_0 : i32, i32
  }
  func.func @transform_19(%arg0: i32) -> (i32, i32) {
    %c0_i32 = arith.constant 0 : i32
    %c0_i32_0 = arith.constant 0 : i32
    %c0_i32_1 = arith.constant 0 : i32
    return %c0_i32, %c0_i32_0 : i32, i32
  }
  func.func @transform_20(%arg0: i32) -> (i32, i32) {
    %c0_i32 = arith.constant 0 : i32
    %c0_i32_0 = arith.constant 0 : i32
    %c0_i32_1 = arith.constant 0 : i32
    return %c0_i32, %c0_i32_0 : i32, i32
  }
  func.func @transform_21(%arg0: i32) -> (i32, i32) {
    %c0_i32 = arith.constant 0 : i32
    %c0_i32_0 = arith.constant 0 : i32
    %c0_i32_1 = arith.constant 0 : i32
    return %c0_i32, %c0_i32_0 : i32, i32
  }
  func.func @transform_22(%arg0: i32) -> (i32, i32) {
    %c0_i32 = arith.constant 0 : i32
    %c0_i32_0 = arith.constant 0 : i32
    %c0_i32_1 = arith.constant 0 : i32
    return %c0_i32, %c0_i32_0 : i32, i32
  }
  func.func @transform_23(%arg0: i32) -> (i32, i32) {
    %c0_i32 = arith.constant 0 : i32
    %c0_i32_0 = arith.constant 0 : i32
    %c0_i32_1 = arith.constant 0 : i32
    return %c0_i32, %c0_i32_0 : i32, i32
  }
  func.func @transform_24(%arg0: i32) -> (i32, i32, i32) {
    %c0_i32 = arith.constant 0 : i32
    %c0_i32_0 = arith.constant 0 : i32
    %c0_i32_1 = arith.constant 0 : i32
    return %arg0, %c0_i32, %c0_i32_0 : i32, i32, i32
  }
}

</mosaic_0001>

<llo_original>
// kernel: decoder_layer_pallas.1
$region0: #{decoder_layer_pallas.1}
  #allocation0 [shape = 'u32[]', space=smem, size = 0x4, offset = 0x4, fixed_abs, tag = 'smem constant byte address 0x4 - core index']
  #allocation1 [shape = 'u32[144,128]{1,0:T(1,128)}', space=vmem, size = 0x12000, scoped, tag = 'internal scratch']
  %s0 = inlined_call_operand.vmem [shape: f32[2,8,32], index: 0, kind: input, shape index: {}]
  %s1 = inlined_call_operand.vmem [shape: f32[2,8,32], index: 1, kind: input, shape index: {}]
  %s2 = inlined_call_operand.vmem [shape: f32[2,1,8], index: 2, kind: input, shape index: {}]
  %s3 = inlined_call_operand.vmem [shape: f32[8,8], index: 3, kind: input, shape index: {}]
  %s4 = inlined_call_operand.vmem [shape: f32[1,32], index: 4, kind: input, shape index: {}]
  %s5 = inlined_call_operand.vmem [shape: f32[1,32], index: 5, kind: input, shape index: {}]
  %s6 = inlined_call_operand.vmem [shape: f32[4,32,24], index: 6, kind: input, shape index: {}]
  %s7 = inlined_call_operand.vmem [shape: f32[4,1,24], index: 7, kind: input, shape index: {}]
  %s8 = inlined_call_operand.vmem [shape: f32[4,8,32], index: 8, kind: input, shape index: {}]
  %s9 = inlined_call_operand.vmem [shape: f32[1,32], index: 9, kind: input, shape index: {}]
  %s10 = inlined_call_operand.vmem [shape: f32[1,32], index: 10, kind: input, shape index: {}]
  %s11 = inlined_call_operand.vmem [shape: f32[1,32], index: 11, kind: input, shape index: {}]
  %s12 = inlined_call_operand.vmem [shape: f32[4,32,8], index: 12, kind: input, shape index: {}]
  %s13 = inlined_call_operand.vmem [shape: f32[4,1,8], index: 13, kind: input, shape index: {}]
  %s14 = inlined_call_operand.vmem [shape: f32[4,32,16], index: 14, kind: input, shape index: {}]
  %s15 = inlined_call_operand.vmem [shape: f32[4,1,16], index: 15, kind: input, shape index: {}]
  %s16 = inlined_call_operand.vmem [shape: f32[4,8,32], index: 16, kind: input, shape index: {}]
  %s17 = inlined_call_operand.vmem [shape: f32[1,32], index: 17, kind: input, shape index: {}]
  %s18 = inlined_call_operand.vmem [shape: f32[1,32], index: 18, kind: input, shape index: {}]
  %s19 = inlined_call_operand.vmem [shape: f32[1,32], index: 19, kind: input, shape index: {}]
  %s20 = inlined_call_operand.vmem [shape: f32[32,64], index: 20, kind: input, shape index: {}]
  %s21 = inlined_call_operand.vmem [shape: f32[1,64], index: 21, kind: input, shape index: {}]
  %s22 = inlined_call_operand.vmem [shape: f32[64,32], index: 22, kind: input, shape index: {}]
  %s23 = inlined_call_operand.vmem [shape: f32[1,32], index: 23, kind: input, shape index: {}]
  %s24 = inlined_call_operand.vmem [shape: f32[2,8,32], index: 24, kind: output, shape index: {}]
  %s25 = sld [smem:[#allocation0]]
  $region129: #{decoder_layer_pallas.1} parent=0
    _
  %s27 = ssub.s32 1, %s25
  %s28 = scalar_select 0, %s27, %s25
  loop: start=0, step=1, limit=4
  $region2: #{decoder_layer_pallas.1} parent=0 // loop_pre_header
    _
  $region3: #{decoder_layer_pallas.1} parent=0 // loop_header
    %s30 = sphi 0, %s34
    %p31 = scmp.ge.s32.totalorder %s30, 4
    %s40 = sphi 0, %s42
    %s43 = sphi 0, %s40
    %s44 = sphi 0, %s43
    %s60 = sphi 0, %s44
    %s66 = sphi 0, %s68
    %s69 = sphi 0, %s66
    %s70 = sphi 0, %s69
    %s86 = sphi 0, %s70
    %s92 = sphi 0, %s94
    %s95 = sphi 0, %s92
    %s96 = sphi 0, %s95
    %s112 = sphi 0, %s96
    %s116 = sphi 0, %s116
    %s118 = sphi 0, %s116
    %s119 = sphi 0, %s118
    %s133 = sphi 0, %s119
    %s137 = sphi 0, %s137
    %s139 = sphi 0, %s137
    %s140 = sphi 0, %s139
    %s154 = sphi 0, %s140
    %s158 = sphi 0, %s158
    %s160 = sphi 0, %s158
    %s161 = sphi 0, %s160
    %s175 = sphi 0, %s161
    %s179 = sphi 0, %s179
    %s181 = sphi 0, %s179
    %s182 = sphi 0, %s181
    %s196 = sphi 0, %s182
    %s200 = sphi 0, %s200
    %s202 = sphi 0, %s200
    %s203 = sphi 0, %s202
    %s217 = sphi 0, %s203
    %s221 = sphi 0, %s221
    %s223 = sphi 0, %s221
    %s224 = sphi 0, %s223
    %s238 = sphi 0, %s224
    %s242 = sphi 0, %s242
    %s244 = sphi 0, %s242
    %s245 = sphi 0, %s244
    %s259 = sphi 0, %s245
    %s263 = sphi 0, %s263
    %s265 = sphi 0, %s263
    %s266 = sphi 0, %s265
    %s280 = sphi 0, %s266
    %s284 = sphi 0, %s284
    %s286 = sphi 0, %s284
    %s287 = sphi 0, %s286
    %s301 = sphi 0, %s287
    %s305 = sphi 0, %s305
    %s307 = sphi 0, %s305
    %s308 = sphi 0, %s307
    %s322 = sphi 0, %s308
    %s326 = sphi 0, %s326
    %s328 = sphi 0, %s326
    %s329 = sphi 0, %s328
    %s343 = sphi 0, %s329
    %s347 = sphi 0, %s347
    %s349 = sphi 0, %s347
    %s350 = sphi 0, %s349
    %s364 = sphi 0, %s350
    %s368 = sphi 0, %s368
    %s370 = sphi 0, %s368
    %s371 = sphi 0, %s370
    %s385 = sphi 0, %s371
    %s389 = sphi 0, %s389
    %s391 = sphi 0, %s389
    %s392 = sphi 0, %s391
    %s406 = sphi 0, %s392
    %s410 = sphi 0, %s410
    %s412 = sphi 0, %s410
    %s413 = sphi 0, %s412
    %s427 = sphi 0, %s413
    %s431 = sphi 0, %s431
    %s433 = sphi 0, %s431
    %s434 = sphi 0, %s433
    %s448 = sphi 0, %s434
    %s452 = sphi 0, %s452
    %s454 = sphi 0, %s452
    %s455 = sphi 0, %s454
    %s469 = sphi 0, %s455
    %s473 = sphi 0, %s473
    %s475 = sphi 0, %s473
    %s476 = sphi 0, %s475
    %s490 = sphi 0, %s476
    %s494 = sphi 0, %s494
    %s496 = sphi 0, %s494
    %s497 = sphi 0, %s496
    %s511 = sphi 0, %s497
    %s515 = sphi 0, %s515
    %s517 = sphi 0, %s515
    %s518 = sphi 0, %s517
    %s532 = sphi 0, %s518
    %s536 = sphi 0, %s536
    %s538 = sphi 0, %s536
    %s539 = sphi 0, %s538
    %s553 = sphi 0, %s539
    %s559 = sphi 0, %s561
    %s562 = sphi 0, %s559
    %s563 = sphi 0, %s562
    %s579 = sphi 0, %s563
  $region4: #{decoder_layer_pallas.1} parent=0 // loop_header_branch
    %33 = sbr.rel (%p31) target = $region8
  $region5: #{decoder_layer_pallas.1} parent=0 // loop_body
    %s35 = ssub.s32 %s30, 1
    %s36 = ssub.s32 %s30, 2
    %s37 = sadd.s32 %s30, 1
    %s38 = ssub.s32 %s30, %s37
    %p39 = scmp.eq.s32.totalorder %s38, 0
    %s41 = sadd.s32 %s40, 1
    %s42 = scalar_select %p39, %s40, %s41
    %p45 = pneg %p39
    %p46 = scmp.eq.s32.totalorder %s30, 1
    %p47 = por %p45, %p46
    %p48 = scmp.ne.s32.totalorder %s40, %s43
    %p49 = scmp.eq.s32.totalorder %s30, 0
    %p50 = por %p48, %p49
    %p51 = scmp.ne.s32.totalorder %s40, %s43
    %p52 = scmp.eq.s32.totalorder %s35, 1
    %p53 = por %p51, %p52
    %p54 = scmp.ne.s32.totalorder %s43, %s44
    %p55 = scmp.eq.s32.totalorder %s35, 0
    %p56 = por %p54, %p55
    %p57 = scmp.ne.s32.totalorder %s43, %s44
    %p58 = scmp.eq.s32.totalorder %s36, 1
    %p59 = por %p57, %p58
    %p61 = scmp.ne.s32.totalorder %s44, %s60
    %p62 = scmp.eq.s32.totalorder %s36, 0
    %p63 = por %p61, %p62
    %s64 = ssub.s32 %s30, %s37
    %p65 = scmp.eq.s32.totalorder %s64, 0
    %s67 = sadd.s32 %s66, 1
    %s68 = scalar_select %p65, %s66, %s67
    %p71 = pneg %p65
    %p72 = scmp.eq.s32.totalorder %s30, 1
    %p73 = por %p71, %p72
    %p74 = scmp.ne.s32.totalorder %s66, %s69
    %p75 = scmp.eq.s32.totalorder %s30, 0
    %p76 = por %p74, %p75
    %p77 = scmp.ne.s32.totalorder %s66, %s69
    %p78 = scmp.eq.s32.totalorder %s35, 1
    %p79 = por %p77, %p78
    %p80 = scmp.ne.s32.totalorder %s69, %s70
    %p81 = scmp.eq.s32.totalorder %s35, 0
    %p82 = por %p80, %p81
    %p83 = scmp.ne.s32.totalorder %s69, %s70
    %p84 = scmp.eq.s32.totalorder %s36, 1
    %p85 = por %p83, %p84
    %p87 = scmp.ne.s32.totalorder %s70, %s86
    %p88 = scmp.eq.s32.totalorder %s36, 0
    %p89 = por %p87, %p88
    %s90 = ssub.s32 %s30, %s37
    %p91 = scmp.eq.s32.totalorder %s90, 0
    %s93 = sadd.s32 %s92, 1
    %s94 = scalar_select %p91, %s92, %s93
    %p97 = pneg %p91
    %p98 = scmp.eq.s32.totalorder %s30, 1
    %p99 = por %p97, %p98
    %p100 = scmp.ne.s32.totalorder %s92, %s95
    %p101 = scmp.eq.s32.totalorder %s30, 0
    %p102 = por %p100, %p101
    %p103 = scmp.ne.s32.totalorder %s92, %s95
    %p104 = scmp.eq.s32.totalorder %s35, 1
    %p105 = por %p103, %p104
    %p106 = scmp.ne.s32.totalorder %s95, %s96
    %p107 = scmp.eq.s32.totalorder %s35, 0
    %p108 = por %p106, %p107
    %p109 = scmp.ne.s32.totalorder %s95, %s96
    %p110 = scmp.eq.s32.totalorder %s36, 1
    %p111 = por %p109, %p110
    %p113 = scmp.ne.s32.totalorder %s96, %s112
    %p114 = scmp.eq.s32.totalorder %s36, 0
    %p115 = por %p113, %p114
    %s117 = sadd.s32 %s116, 1
    %p120 = scmp.eq.s32.totalorder %s30, 1
    %p121 = scmp.ne.s32.totalorder %s116, %s118
    %p122 = scmp.eq.s32.totalorder %s30, 0
    %p123 = por %p121, %p122
    %p124 = scmp.ne.s32.totalorder %s116, %s118
    %p125 = scmp.eq.s32.totalorder %s35, 1
    %p126 = por %p124, %p125
    %p127 = scmp.ne.s32.totalorder %s118, %s119
    %p128 = scmp.eq.s32.totalorder %s35, 0
    %p129 = por %p127, %p128
    %p130 = scmp.ne.s32.totalorder %s118, %s119
    %p131 = scmp.eq.s32.totalorder %s36, 1
    %p132 = por %p130, %p131
    %p134 = scmp.ne.s32.totalorder %s119, %s133
    %p135 = scmp.eq.s32.totalorder %s36, 0
    %p136 = por %p134, %p135
    %s138 = sadd.s32 %s137, 1
    %p141 = scmp.eq.s32.totalorder %s30, 1
    %p142 = scmp.ne.s32.totalorder %s137, %s139
    %p143 = scmp.eq.s32.totalorder %s30, 0
    %p144 = por %p142, %p143
    %p145 = scmp.ne.s32.totalorder %s137, %s139
    %p146 = scmp.eq.s32.totalorder %s35, 1
    %p147 = por %p145, %p146
    %p148 = scmp.ne.s32.totalorder %s139, %s140
    %p149 = scmp.eq.s32.totalorder %s35, 0
    %p150 = por %p148, %p149
    %p151 = scmp.ne.s32.totalorder %s139, %s140
    %p152 = scmp.eq.s32.totalorder %s36, 1
    %p153 = por %p151, %p152
    %p155 = scmp.ne.s32.totalorder %s140, %s154
    %p156 = scmp.eq.s32.totalorder %s36, 0
    %p157 = por %p155, %p156
    %s159 = sadd.s32 %s158, 1
    %p162 = scmp.eq.s32.totalorder %s30, 1
    %p163 = scmp.ne.s32.totalorder %s158, %s160
    %p164 = scmp.eq.s32.totalorder %s30, 0
    %p165 = por %p163, %p164
    %p166 = scmp.ne.s32.totalorder %s158, %s160
    %p167 = scmp.eq.s32.totalorder %s35, 1
    %p168 = por %p166, %p167
    %p169 = scmp.ne.s32.totalorder %s160, %s161
    %p170 = scmp.eq.s32.totalorder %s35, 0
    %p171 = por %p169, %p170
    %p172 = scmp.ne.s32.totalorder %s160, %s161
    %p173 = scmp.eq.s32.totalorder %s36, 1
    %p174 = por %p172, %p173
    %p176 = scmp.ne.s32.totalorder %s161, %s175
    %p177 = scmp.eq.s32.totalorder %s36, 0
    %p178 = por %p176, %p177
    %s180 = sadd.s32 %s179, 1
    %p183 = scmp.eq.s32.totalorder %s30, 1
    %p184 = scmp.ne.s32.totalorder %s179, %s181
    %p185 = scmp.eq.s32.totalorder %s30, 0
    %p186 = por %p184, %p185
    %p187 = scmp.ne.s32.totalorder %s179, %s181
    %p188 = scmp.eq.s32.totalorder %s35, 1
    %p189 = por %p187, %p188
    %p190 = scmp.ne.s32.totalorder %s181, %s182
    %p191 = scmp.eq.s32.totalorder %s35, 0
    %p192 = por %p190, %p191
    %p193 = scmp.ne.s32.totalorder %s181, %s182
    %p194 = scmp.eq.s32.totalorder %s36, 1
    %p195 = por %p193, %p194
    %p197 = scmp.ne.s32.totalorder %s182, %s196
    %p198 = scmp.eq.s32.totalorder %s36, 0
    %p199 = por %p197, %p198
    %s201 = sadd.s32 %s200, 1
    %p204 = scmp.eq.s32.totalorder %s30, 1
    %p205 = scmp.ne.s32.totalorder %s200, %s202
    %p206 = scmp.eq.s32.totalorder %s30, 0
    %p207 = por %p205, %p206
    %p208 = scmp.ne.s32.totalorder %s200, %s202
    %p209 = scmp.eq.s32.totalorder %s35, 1
    %p210 = por %p208, %p209
    %p211 = scmp.ne.s32.totalorder %s202, %s203
    %p212 = scmp.eq.s32.totalorder %s35, 0
    %p213 = por %p211, %p212
    %p214 = scmp.ne.s32.totalorder %s202, %s203
    %p215 = scmp.eq.s32.totalorder %s36, 1
    %p216 = por %p214, %p215
    %p218 = scmp.ne.s32.totalorder %s203, %s217
    %p219 = scmp.eq.s32.totalorder %s36, 0
    %p220 = por %p218, %p219
    %s222 = sadd.s32 %s221, 1
    %p225 = scmp.eq.s32.totalorder %s30, 1
    %p226 = scmp.ne.s32.totalorder %s221, %s223
    %p227 = scmp.eq.s32.totalorder %s30, 0
    %p228 = por %p226, %p227
    %p229 = scmp.ne.s32.totalorder %s221, %s223
    %p230 = scmp.eq.s32.totalorder %s35, 1
    %p231 = por %p229, %p230
    %p232 = scmp.ne.s32.totalorder %s223, %s224
    %p233 = scmp.eq.s32.totalorder %s35, 0
    %p234 = por %p232, %p233
    %p235 = scmp.ne.s32.totalorder %s223, %s224
    %p236 = scmp.eq.s32.totalorder %s36, 1
    %p237 = por %p235, %p236
    %p239 = scmp.ne.s32.totalorder %s224, %s238
    %p240 = scmp.eq.s32.totalorder %s36, 0
    %p241 = por %p239, %p240
    %s243 = sadd.s32 %s242, 1
    %p246 = scmp.eq.s32.totalorder %s30, 1
    %p247 = scmp.ne.s32.totalorder %s242, %s244
    %p248 = scmp.eq.s32.totalorder %s30, 0
    %p249 = por %p247, %p248
    %p250 = scmp.ne.s32.totalorder %s242, %s244
    %p251 = scmp.eq.s32.totalorder %s35, 1
    %p252 = por %p250, %p251
    %p253 = scmp.ne.s32.totalorder %s244, %s245
    %p254 = scmp.eq.s32.totalorder %s35, 0
    %p255 = por %p253, %p254
    %p256 = scmp.ne.s32.totalorder %s244, %s245
    %p257 = scmp.eq.s32.totalorder %s36, 1
    %p258 = por %p256, %p257
    %p260 = scmp.ne.s32.totalorder %s245, %s259
    %p261 = scmp.eq.s32.totalorder %s36, 0
    %p262 = por %p260, %p261
    %s264 = sadd.s32 %s263, 1
    %p267 = scmp.eq.s32.totalorder %s30, 1
    %p268 = scmp.ne.s32.totalorder %s263, %s265
    %p269 = scmp.eq.s32.totalorder %s30, 0
    %p270 = por %p268, %p269
    %p271 = scmp.ne.s32.totalorder %s263, %s265
    %p272 = scmp.eq.s32.totalorder %s35, 1
    %p273 = por %p271, %p272
    %p274 = scmp.ne.s32.totalorder %s265, %s266
    %p275 = scmp.eq.s32.totalorder %s35, 0
    %p276 = por %p274, %p275
    %p277 = scmp.ne.s32.totalorder %s265, %s266
    %p278 = scmp.eq.s32.totalorder %s36, 1
    %p279 = por %p277, %p278
    %p281 = scmp.ne.s32.totalorder %s266, %s280
    %p282 = scmp.eq.s32.totalorder %s36, 0
    %p283 = por %p281, %p282
    %s285 = sadd.s32 %s284, 1
    %p288 = scmp.eq.s32.totalorder %s30, 1
    %p289 = scmp.ne.s32.totalorder %s284, %s286
    %p290 = scmp.eq.s32.totalorder %s30, 0
    %p291 = por %p289, %p290
    %p292 = scmp.ne.s32.totalorder %s284, %s286
    %p293 = scmp.eq.s32.totalorder %s35, 1
    %p294 = por %p292, %p293
    %p295 = scmp.ne.s32.totalorder %s286, %s287
    %p296 = scmp.eq.s32.totalorder %s35, 0
    %p297 = por %p295, %p296
    %p298 = scmp.ne.s32.totalorder %s286, %s287
    %p299 = scmp.eq.s32.totalorder %s36, 1
    %p300 = por %p298, %p299
    %p302 = scmp.ne.s32.totalorder %s287, %s301
    %p303 = scmp.eq.s32.totalorder %s36, 0
    %p304 = por %p302, %p303
    %s306 = sadd.s32 %s305, 1
    %p309 = scmp.eq.s32.totalorder %s30, 1
    %p310 = scmp.ne.s32.totalorder %s305, %s307
    %p311 = scmp.eq.s32.totalorder %s30, 0
    %p312 = por %p310, %p311
    %p313 = scmp.ne.s32.totalorder %s305, %s307
    %p314 = scmp.eq.s32.totalorder %s35, 1
    %p315 = por %p313, %p314
    %p316 = scmp.ne.s32.totalorder %s307, %s308
    %p317 = scmp.eq.s32.totalorder %s35, 0
    %p318 = por %p316, %p317
    %p319 = scmp.ne.s32.totalorder %s307, %s308
    %p320 = scmp.eq.s32.totalorder %s36, 1
    %p321 = por %p319, %p320
    %p323 = scmp.ne.s32.totalorder %s308, %s322
    %p324 = scmp.eq.s32.totalorder %s36, 0
    %p325 = por %p323, %p324
    %s327 = sadd.s32 %s326, 1
    %p330 = scmp.eq.s32.totalorder %s30, 1
    %p331 = scmp.ne.s32.totalorder %s326, %s328
    %p332 = scmp.eq.s32.totalorder %s30, 0
    %p333 = por %p331, %p332
    %p334 = scmp.ne.s32.totalorder %s326, %s328
    %p335 = scmp.eq.s32.totalorder %s35, 1
    %p336 = por %p334, %p335
    %p337 = scmp.ne.s32.totalorder %s328, %s329
    %p338 = scmp.eq.s32.totalorder %s35, 0
    %p339 = por %p337, %p338
    %p340 = scmp.ne.s32.totalorder %s328, %s329
    %p341 = scmp.eq.s32.totalorder %s36, 1
    %p342 = por %p340, %p341
    %p344 = scmp.ne.s32.totalorder %s329, %s343
    %p345 = scmp.eq.s32.totalorder %s36, 0
    %p346 = por %p344, %p345
    %s348 = sadd.s32 %s347, 1
    %p351 = scmp.eq.s32.totalorder %s30, 1
    %p352 = scmp.ne.s32.totalorder %s347, %s349
    %p353 = scmp.eq.s32.totalorder %s30, 0
    %p354 = por %p352, %p353
    %p355 = scmp.ne.s32.totalorder %s347, %s349
    %p356 = scmp.eq.s32.totalorder %s35, 1
    %p357 = por %p355, %p356
    %p358 = scmp.ne.s32.totalorder %s349, %s350
    %p359 = scmp.eq.s32.totalorder %s35, 0
    %p360 = por %p358, %p359
    %p361 = scmp.ne.s32.totalorder %s349, %s350
    %p362 = scmp.eq.s32.totalorder %s36, 1
    %p363 = por %p361, %p362
    %p365 = scmp.ne.s32.totalorder %s350, %s364
    %p366 = scmp.eq.s32.totalorder %s36, 0
    %p367 = por %p365, %p366
    %s369 = sadd.s32 %s368, 1
    %p372 = scmp.eq.s32.totalorder %s30, 1
    %p373 = scmp.ne.s32.totalorder %s368, %s370
    %p374 = scmp.eq.s32.totalorder %s30, 0
    %p375 = por %p373, %p374
    %p376 = scmp.ne.s32.totalorder %s368, %s370
    %p377 = scmp.eq.s32.totalorder %s35, 1
    %p378 = por %p376, %p377
    %p379 = scmp.ne.s32.totalorder %s370, %s371
    %p380 = scmp.eq.s32.totalorder %s35, 0
    %p381 = por %p379, %p380
    %p382 = scmp.ne.s32.totalorder %s370, %s371
    %p383 = scmp.eq.s32.totalorder %s36, 1
    %p384 = por %p382, %p383
    %p386 = scmp.ne.s32.totalorder %s371, %s385
    %p387 = scmp.eq.s32.totalorder %s36, 0
    %p388 = por %p386, %p387
    %s390 = sadd.s32 %s389, 1
    %p393 = scmp.eq.s32.totalorder %s30, 1
    %p394 = scmp.ne.s32.totalorder %s389, %s391
    %p395 = scmp.eq.s32.totalorder %s30, 0
    %p396 = por %p394, %p395
    %p397 = scmp.ne.s32.totalorder %s389, %s391
    %p398 = scmp.eq.s32.totalorder %s35, 1
    %p399 = por %p397, %p398
    %p400 = scmp.ne.s32.totalorder %s391, %s392
    %p401 = scmp.eq.s32.totalorder %s35, 0
    %p402 = por %p400, %p401
    %p403 = scmp.ne.s32.totalorder %s391, %s392
    %p404 = scmp.eq.s32.totalorder %s36, 1
    %p405 = por %p403, %p404
    %p407 = scmp.ne.s32.totalorder %s392, %s406
    %p408 = scmp.eq.s32.totalorder %s36, 0
    %p409 = por %p407, %p408
    %s411 = sadd.s32 %s410, 1
    %p414 = scmp.eq.s32.totalorder %s30, 1
    %p415 = scmp.ne.s32.totalorder %s410, %s412
    %p416 = scmp.eq.s32.totalorder %s30, 0
    %p417 = por %p415, %p416
    %p418 = scmp.ne.s32.totalorder %s410, %s412
    %p419 = scmp.eq.s32.totalorder %s35, 1
    %p420 = por %p418, %p419
    %p421 = scmp.ne.s32.totalorder %s412, %s413
    %p422 = scmp.eq.s32.totalorder %s35, 0
    %p423 = por %p421, %p422
    %p424 = scmp.ne.s32.totalorder %s412, %s413
    %p425 = scmp.eq.s32.totalorder %s36, 1
    %p426 = por %p424, %p425
    %p428 = scmp.ne.s32.totalorder %s413, %s427
    %p429 = scmp.eq.s32.totalorder %s36, 0
    %p430 = por %p428, %p429
    %s432 = sadd.s32 %s431, 1
    %p435 = scmp.eq.s32.totalorder %s30, 1
    %p436 = scmp.ne.s32.totalorder %s431, %s433
    %p437 = scmp.eq.s32.totalorder %s30, 0
    %p438 = por %p436, %p437
    %p439 = scmp.ne.s32.totalorder %s431, %s433
    %p440 = scmp.eq.s32.totalorder %s35, 1
    %p441 = por %p439, %p440
    %p442 = scmp.ne.s32.totalorder %s433, %s434
    %p443 = scmp.eq.s32.totalorder %s35, 0
    %p444 = por %p442, %p443
    %p445 = scmp.ne.s32.totalorder %s433, %s434
    %p446 = scmp.eq.s32.totalorder %s36, 1
    %p447 = por %p445, %p446
    %p449 = scmp.ne.s32.totalorder %s434, %s448
    %p450 = scmp.eq.s32.totalorder %s36, 0
    %p451 = por %p449, %p450
    %s453 = sadd.s32 %s452, 1
    %p456 = scmp.eq.s32.totalorder %s30, 1
    %p457 = scmp.ne.s32.totalorder %s452, %s454
    %p458 = scmp.eq.s32.totalorder %s30, 0
    %p459 = por %p457, %p458
    %p460 = scmp.ne.s32.totalorder %s452, %s454
    %p461 = scmp.eq.s32.totalorder %s35, 1
    %p462 = por %p460, %p461
    %p463 = scmp.ne.s32.totalorder %s454, %s455
    %p464 = scmp.eq.s32.totalorder %s35, 0
    %p465 = por %p463, %p464
    %p466 = scmp.ne.s32.totalorder %s454, %s455
    %p467 = scmp.eq.s32.totalorder %s36, 1
    %p468 = por %p466, %p467
    %p470 = scmp.ne.s32.totalorder %s455, %s469
    %p471 = scmp.eq.s32.totalorder %s36, 0
    %p472 = por %p470, %p471
    %s474 = sadd.s32 %s473, 1
    %p477 = scmp.eq.s32.totalorder %s30, 1
    %p478 = scmp.ne.s32.totalorder %s473, %s475
    %p479 = scmp.eq.s32.totalorder %s30, 0
    %p480 = por %p478, %p479
    %p481 = scmp.ne.s32.totalorder %s473, %s475
    %p482 = scmp.eq.s32.totalorder %s35, 1
    %p483 = por %p481, %p482
    %p484 = scmp.ne.s32.totalorder %s475, %s476
    %p485 = scmp.eq.s32.totalorder %s35, 0
    %p486 = por %p484, %p485
    %p487 = scmp.ne.s32.totalorder %s475, %s476
    %p488 = scmp.eq.s32.totalorder %s36, 1
    %p489 = por %p487, %p488
    %p491 = scmp.ne.s32.totalorder %s476, %s490
    %p492 = scmp.eq.s32.totalorder %s36, 0
    %p493 = por %p491, %p492
    %s495 = sadd.s32 %s494, 1
    %p498 = scmp.eq.s32.totalorder %s30, 1
    %p499 = scmp.ne.s32.totalorder %s494, %s496
    %p500 = scmp.eq.s32.totalorder %s30, 0
    %p501 = por %p499, %p500
    %p502 = scmp.ne.s32.totalorder %s494, %s496
    %p503 = scmp.eq.s32.totalorder %s35, 1
    %p504 = por %p502, %p503
    %p505 = scmp.ne.s32.totalorder %s496, %s497
    %p506 = scmp.eq.s32.totalorder %s35, 0
    %p507 = por %p505, %p506
    %p508 = scmp.ne.s32.totalorder %s496, %s497
    %p509 = scmp.eq.s32.totalorder %s36, 1
    %p510 = por %p508, %p509
    %p512 = scmp.ne.s32.totalorder %s497, %s511
    %p513 = scmp.eq.s32.totalorder %s36, 0
    %p514 = por %p512, %p513
    %s516 = sadd.s32 %s515, 1
    %p519 = scmp.eq.s32.totalorder %s30, 1
    %p520 = scmp.ne.s32.totalorder %s515, %s517
    %p521 = scmp.eq.s32.totalorder %s30, 0
    %p522 = por %p520, %p521
    %p523 = scmp.ne.s32.totalorder %s515, %s517
    %p524 = scmp.eq.s32.totalorder %s35, 1
    %p525 = por %p523, %p524
    %p526 = scmp.ne.s32.totalorder %s517, %s518
    %p527 = scmp.eq.s32.totalorder %s35, 0
    %p528 = por %p526, %p527
    %p529 = scmp.ne.s32.totalorder %s517, %s518
    %p530 = scmp.eq.s32.totalorder %s36, 1
    %p531 = por %p529, %p530
    %p533 = scmp.ne.s32.totalorder %s518, %s532
    %p534 = scmp.eq.s32.totalorder %s36, 0
    %p535 = por %p533, %p534
    %s537 = sadd.s32 %s536, 1
    %p540 = scmp.eq.s32.totalorder %s30, 1
    %p541 = scmp.ne.s32.totalorder %s536, %s538
    %p542 = scmp.eq.s32.totalorder %s30, 0
    %p543 = por %p541, %p542
    %p544 = scmp.ne.s32.totalorder %s536, %s538
    %p545 = scmp.eq.s32.totalorder %s35, 1
    %p546 = por %p544, %p545
    %p547 = scmp.ne.s32.totalorder %s538, %s539
    %p548 = scmp.eq.s32.totalorder %s35, 0
    %p549 = por %p547, %p548
    %p550 = scmp.ne.s32.totalorder %s538, %s539
    %p551 = scmp.eq.s32.totalorder %s36, 1
    %p552 = por %p550, %p551
    %p554 = scmp.ne.s32.totalorder %s539, %s553
    %p555 = scmp.eq.s32.totalorder %s36, 0
    %p556 = por %p554, %p555
    %s557 = ssub.s32 %s30, %s37
    %p558 = scmp.eq.s32.totalorder %s557, 0
    %s560 = sadd.s32 %s559, 1
    %s561 = scalar_select %p558, %s559, %s560
    %p564 = pneg %p558
    %p565 = scmp.eq.s32.totalorder %s30, 1
    %p566 = por %p564, %p565
    %p567 = scmp.ne.s32.totalorder %s559, %s562
    %p568 = scmp.eq.s32.totalorder %s30, 0
    %p569 = por %p567, %p568
    %p570 = scmp.ne.s32.totalorder %s559, %s562
    %p571 = scmp.eq.s32.totalorder %s35, 1
    %p572 = por %p570, %p571
    %p573 = scmp.ne.s32.totalorder %s562, %s563
    %p574 = scmp.eq.s32.totalorder %s35, 0
    %p575 = por %p573, %p574
    %p576 = scmp.ne.s32.totalorder %s562, %s563
    %p577 = scmp.eq.s32.totalorder %s36, 1
    %p578 = por %p576, %p577
    %p580 = scmp.ne.s32.totalorder %s563, %s579
    %p581 = scmp.eq.s32.totalorder %s36, 0
    %p582 = por %p580, %p581
    %p583 = scmp.le.s32.totalorder 1, %s30
    %p584 = scmp.lt.s32.totalorder %s30, 3
    %p585 = pnand %p583, %p584
    %p586 = pneg %p585
    // Predicated region
    $region9: #{decoder_layer_pallas.1} parent=5 // pred_check
      _
    $region10: #{decoder_layer_pallas.1} parent=5 // pred_check_branch
      %588 = sbr.rel (%p585) target = $region12
    $region11: #{decoder_layer_pallas.1} parent=5 // pred_region
      %s589 = ssub.s32 %s30, 1
      // Predicated region
      $region13: #{decoder_layer_pallas.1} parent=11 // pred_check
        %p590 = pneg %p129
      $region14: #{decoder_layer_pallas.1} parent=11 // pred_check_branch
        %592 = sbr.rel (%p590) target = $region16
      $region15: #{decoder_layer_pallas.1} parent=11 // pred_region
        _
      $region16: #{decoder_layer_pallas.1} parent=11 // pred_fallthru
        _
      // Predicated region
      $region17: #{decoder_layer_pallas.1} parent=11 // pred_check
        %p593 = pneg %p150
      $region18: #{decoder_layer_pallas.1} parent=11 // pred_check_branch
        %595 = sbr.rel (%p593) target = $region20
      $region19: #{decoder_layer_pallas.1} parent=11 // pred_region
        _
      $region20: #{decoder_layer_pallas.1} parent=11 // pred_fallthru
        _
      // Predicated region
      $region21: #{decoder_layer_pallas.1} parent=11 // pred_check
        %p596 = pneg %p171
      $region22: #{decoder_layer_pallas.1} parent=11 // pred_check_branch
        %598 = sbr.rel (%p596) target = $region24
      $region23: #{decoder_layer_pallas.1} parent=11 // pred_region
        _
      $region24: #{decoder_layer_pallas.1} parent=11 // pred_fallthru
        _
      // Predicated region
      $region25: #{decoder_layer_pallas.1} parent=11 // pred_check
        %p599 = pneg %p192
      $region26: #{decoder_layer_pallas.1} parent=11 // pred_check_branch
        %601 = sbr.rel (%p599) target = $region28
      $region27: #{decoder_layer_pallas.1} parent=11 // pred_region
        _
      $region28: #{decoder_layer_pallas.1} parent=11 // pred_fallthru
        _
      // Predicated region
      $region29: #{decoder_layer_pallas.1} parent=11 // pred_check
        %p602 = pneg %p213
      $region30: #{decoder_layer_pallas.1} parent=11 // pred_check_branch
        %604 = sbr.rel (%p602) target = $region32
      $region31: #{decoder_layer_pallas.1} parent=11 // pred_region
        _
      $region32: #{decoder_layer_pallas.1} parent=11 // pred_fallthru
        _
      // Predicated region
      $region33: #{decoder_layer_pallas.1} parent=11 // pred_check
        %p605 = pneg %p234
      $region34: #{decoder_layer_pallas.1} parent=11 // pred_check_branch
        %607 = sbr.rel (%p605) target = $region36
      $region35: #{decoder_layer_pallas.1} parent=11 // pred_region
        _
      $region36: #{decoder_layer_pallas.1} parent=11 // pred_fallthru
        _
      // Predicated region
      $region37: #{decoder_layer_pallas.1} parent=11 // pred_check
        %p608 = pneg %p255
      $region38: #{decoder_layer_pallas.1} parent=11 // pred_check_branch
        %610 = sbr.rel (%p608) target = $region40
      $region39: #{decoder_layer_pallas.1} parent=11 // pred_region
        _
      $region40: #{decoder_layer_pallas.1} parent=11 // pred_fallthru
        _
      // Predicated region
      $region41: #{decoder_layer_pallas.1} parent=11 // pred_check
        %p611 = pneg %p276
      $region42: #{decoder_layer_pallas.1} parent=11 // pred_check_branch
        %613 = sbr.rel (%p611) target = $region44
      $region43: #{decoder_layer_pallas.1} parent=11 // pred_region
        _
      $region44: #{decoder_layer_pallas.1} parent=11 // pred_fallthru
        _
      // Predicated region
      $region45: #{decoder_layer_pallas.1} parent=11 // pred_check
        %p614 = pneg %p297
      $region46: #{decoder_layer_pallas.1} parent=11 // pred_check_branch
        %616 = sbr.rel (%p614) target = $region48
      $region47: #{decoder_layer_pallas.1} parent=11 // pred_region
        _
      $region48: #{decoder_layer_pallas.1} parent=11 // pred_fallthru
        _
      // Predicated region
      $region49: #{decoder_layer_pallas.1} parent=11 // pred_check
        %p617 = pneg %p318
      $region50: #{decoder_layer_pallas.1} parent=11 // pred_check_branch
        %619 = sbr.rel (%p617) target = $region52
      $region51: #{decoder_layer_pallas.1} parent=11 // pred_region
        _
      $region52: #{decoder_layer_pallas.1} parent=11 // pred_fallthru
        _
      // Predicated region
      $region53: #{decoder_layer_pallas.1} parent=11 // pred_check
        %p620 = pneg %p339
      $region54: #{decoder_layer_pallas.1} parent=11 // pred_check_branch
        %622 = sbr.rel (%p620) target = $region56
      $region55: #{decoder_layer_pallas.1} parent=11 // pred_region
        _
      $region56: #{decoder_layer_pallas.1} parent=11 // pred_fallthru
        _
      // Predicated region
      $region57: #{decoder_layer_pallas.1} parent=11 // pred_check
        %p623 = pneg %p360
      $region58: #{decoder_layer_pallas.1} parent=11 // pred_check_branch
        %625 = sbr.rel (%p623) target = $region60
      $region59: #{decoder_layer_pallas.1} parent=11 // pred_region
        _
      $region60: #{decoder_layer_pallas.1} parent=11 // pred_fallthru
        _
      // Predicated region
      $region61: #{decoder_layer_pallas.1} parent=11 // pred_check
        %p626 = pneg %p381
      $region62: #{decoder_layer_pallas.1} parent=11 // pred_check_branch
        %628 = sbr.rel (%p626) target = $region64
      $region63: #{decoder_layer_pallas.1} parent=11 // pred_region
        _
      $region64: #{decoder_layer_pallas.1} parent=11 // pred_fallthru
        _
      // Predicated region
      $region65: #{decoder_layer_pallas.1} parent=11 // pred_check
        %p629 = pneg %p402
      $region66: #{decoder_layer_pallas.1} parent=11 // pred_check_branch
        %631 = sbr.rel (%p629) target = $region68
      $region67: #{decoder_layer_pallas.1} parent=11 // pred_region
        _
      $region68: #{decoder_layer_pallas.1} parent=11 // pred_fallthru
        _
      // Predicated region
      $region69: #{decoder_layer_pallas.1} parent=11 // pred_check
        %p632 = pneg %p423
      $region70: #{decoder_layer_pallas.1} parent=11 // pred_check_branch
        %634 = sbr.rel (%p632) target = $region72
      $region71: #{decoder_layer_pallas.1} parent=11 // pred_region
        _
      $region72: #{decoder_layer_pallas.1} parent=11 // pred_fallthru
        _
      // Predicated region
      $region73: #{decoder_layer_pallas.1} parent=11 // pred_check
        %p635 = pneg %p444
      $region74: #{decoder_layer_pallas.1} parent=11 // pred_check_branch
        %637 = sbr.rel (%p635) target = $region76
      $region75: #{decoder_layer_pallas.1} parent=11 // pred_region
        _
      $region76: #{decoder_layer_pallas.1} parent=11 // pred_fallthru
        _
      // Predicated region
      $region77: #{decoder_layer_pallas.1} parent=11 // pred_check
        %p638 = pneg %p465
      $region78: #{decoder_layer_pallas.1} parent=11 // pred_check_branch
        %640 = sbr.rel (%p638) target = $region80
      $region79: #{decoder_layer_pallas.1} parent=11 // pred_region
        _
      $region80: #{decoder_layer_pallas.1} parent=11 // pred_fallthru
        _
      // Predicated region
      $region81: #{decoder_layer_pallas.1} parent=11 // pred_check
        %p641 = pneg %p486
      $region82: #{decoder_layer_pallas.1} parent=11 // pred_check_branch
        %643 = sbr.rel (%p641) target = $region84
      $region83: #{decoder_layer_pallas.1} parent=11 // pred_region
        _
      $region84: #{decoder_layer_pallas.1} parent=11 // pred_fallthru
        _
      // Predicated region
      $region85: #{decoder_layer_pallas.1} parent=11 // pred_check
        %p644 = pneg %p507
      $region86: #{decoder_layer_pallas.1} parent=11 // pred_check_branch
        %646 = sbr.rel (%p644) target = $region88
      $region87: #{decoder_layer_pallas.1} parent=11 // pred_region
        _
      $region88: #{decoder_layer_pallas.1} parent=11 // pred_fallthru
        _
      // Predicated region
      $region89: #{decoder_layer_pallas.1} parent=11 // pred_check
        %p647 = pneg %p528
      $region90: #{decoder_layer_pallas.1} parent=11 // pred_check_branch
        %649 = sbr.rel (%p647) target = $region92
      $region91: #{decoder_layer_pallas.1} parent=11 // pred_region
        _
      $region92: #{decoder_layer_pallas.1} parent=11 // pred_fallthru
        _
      // Predicated region
      $region93: #{decoder_layer_pallas.1} parent=11 // pred_check
        %p650 = pneg %p549
      $region94: #{decoder_layer_pallas.1} parent=11 // pred_check_branch
        %652 = sbr.rel (%p650) target = $region96
      $region95: #{decoder_layer_pallas.1} parent=11 // pred_region
        _
      $region96: #{decoder_layer_pallas.1} parent=11 // pred_fallthru
        _
    $region12: #{decoder_layer_pallas.1} parent=5 // pred_fallthru
      _
    %p653 = scmp.lt.s32.totalorder %s30, 2
    // Predicated region
    $region97: #{decoder_layer_pallas.1} parent=5 // pred_check
      %p654 = pneg %p653
    $region98: #{decoder_layer_pallas.1} parent=5 // pred_check_branch
      %656 = sbr.rel (%p654) target = $region100
    $region99: #{decoder_layer_pallas.1} parent=5 // pred_region
      // Predicated region
      $region101: #{decoder_layer_pallas.1} parent=99 // pred_check
        %p657 = pneg %p50
      $region102: #{decoder_layer_pallas.1} parent=99 // pred_check_branch
        %659 = sbr.rel (%p657) target = $region104
      $region103: #{decoder_layer_pallas.1} parent=99 // pred_region
        %p660 = scmp.lt.s32.totalorder %s30, 1
        %s661 = scalar_select %p660, %s30, 1
        %s662 = smul.addr %s661, 8
        %s663 = scalar_lea.vmem %s0, %s662
      $region104: #{decoder_layer_pallas.1} parent=99 // pred_fallthru
        _
      // Predicated region
      $region105: #{decoder_layer_pallas.1} parent=99 // pred_check
        %p664 = pneg %p76
      $region106: #{decoder_layer_pallas.1} parent=99 // pred_check_branch
        %666 = sbr.rel (%p664) target = $region108
      $region107: #{decoder_layer_pallas.1} parent=99 // pred_region
        %p667 = scmp.lt.s32.totalorder %s30, 1
        %s668 = scalar_select %p667, %s30, 1
        %s669 = smul.addr %s668, 8
        %s670 = scalar_lea.vmem %s1, %s669
      $region108: #{decoder_layer_pallas.1} parent=99 // pred_fallthru
        _
      // Predicated region
      $region109: #{decoder_layer_pallas.1} parent=99 // pred_check
        %p671 = pneg %p102
      $region110: #{decoder_layer_pallas.1} parent=99 // pred_check_branch
        %673 = sbr.rel (%p671) target = $region112
      $region111: #{decoder_layer_pallas.1} parent=99 // pred_region
        %p674 = scmp.lt.s32.totalorder %s30, 1
        %s675 = scalar_select %p674, %s30, 1
        %s676 = scalar_lea.vmem %s2, %s675
      $region112: #{decoder_layer_pallas.1} parent=99 // pred_fallthru
        _
    $region100: #{decoder_layer_pallas.1} parent=5 // pred_fallthru
      _
    %p677 = scmp.le.s32.totalorder 1, %s30
    %p678 = scmp.lt.s32.totalorder %s30, 3
    %p679 = pnand %p677, %p678
    %p680 = pneg %p679
    // Predicated region
    $region113: #{decoder_layer_pallas.1} parent=5 // pred_check
      _
    $region114: #{decoder_layer_pallas.1} parent=5 // pred_check_branch
      %682 = sbr.rel (%p679) target = $region116
    $region115: #{decoder_layer_pallas.1} parent=5 // pred_region
      %s683 = ssub.s32 %s30, 1
      %p684 = scmp.lt.s32.totalorder %s35, 1
      %s685 = scalar_select %p684, %s35, 1
      %s686 = smul.addr %s685, 8
      %s687 = scalar_lea.vmem %s0, %s686
      %p688 = pneg %p56
      %p689 = pneg %p53
      %p690 = scmp.lt.s32.totalorder %s35, 1
      %s691 = scalar_select %p690, %s35, 1
      %s692 = smul.addr %s691, 8
      %s693 = scalar_lea.vmem %s1, %s692
      %p694 = pneg %p82
      %p695 = pneg %p79
      %p696 = scmp.lt.s32.totalorder %s35, 1
      %s697 = scalar_select %p696, %s35, 1
      %s698 = scalar_lea.vmem %s2, %s697
      %p699 = pneg %p108
      %p700 = pneg %p105
      %p701 = pneg %p129
      %p702 = pneg %p126
      %p703 = pneg %p150
      %p704 = pneg %p147
      %p705 = pneg %p171
      %p706 = pneg %p168
      %p707 = pneg %p192
      %p708 = pneg %p189
      %p709 = pneg %p213
      %p710 = pneg %p210
      %p711 = pneg %p234
      %p712 = pneg %p231
      %p713 = pneg %p255
      %p714 = pneg %p252
      %p715 = pneg %p276
      %p716 = pneg %p273
      %p717 = pneg %p297
      %p718 = pneg %p294
      %p719 = pneg %p318
      %p720 = pneg %p315
      %p721 = pneg %p339
      %p722 = pneg %p336
      %p723 = pneg %p360
      %p724 = pneg %p357
      %p725 = pneg %p381
      %p726 = pneg %p378
      %p727 = pneg %p402
      %p728 = pneg %p399
      %p729 = pneg %p423
      %p730 = pneg %p420
      %p731 = pneg %p444
      %p732 = pneg %p441
      %p733 = pneg %p465
      %p734 = pneg %p462
      %p735 = pneg %p486
      %p736 = pneg %p483
      %p737 = pneg %p507
      %p738 = pneg %p504
      %p739 = pneg %p528
      %p740 = pneg %p525
      %p741 = pneg %p549
      %p742 = pneg %p546
      %p743 = pneg %p575
      %p744 = pneg %p572
      %p745 = scmp.lt.s32.totalorder %s35, 1
      %s746 = scalar_select %p745, %s35, 1
      %s747 = smul.addr %s746, 8
      %s748 = scalar_lea.vmem %s24, %s747
      %p749 = scmp.lt.s32.totalorder %s35, 1
      %s750 = scalar_select %p749, %s35, 1
      %s751 = smul.addr %s750, 8
      %s752 = scalar_lea.vmem %s0, %s751
      %p753 = scmp.lt.s32.totalorder %s35, 1
      %s754 = scalar_select %p753, %s35, 1
      %s755 = smul.addr %s754, 8
      %s756 = scalar_lea.vmem %s1, %s755
      %p757 = scmp.lt.s32.totalorder %s35, 1
      %s758 = scalar_select %p757, %s35, 1
      %s759 = scalar_lea.vmem %s2, %s758
      %p760 = scmp.lt.s32.totalorder %s35, 1
      %s761 = scalar_select %p760, %s35, 1
      %s762 = smul.addr %s761, 8
      %s763 = scalar_lea.vmem %s24, %s762
      %v764 = vld [vmem:[%s752] sm:$0xff]
      %v765 = vld [vmem:[%s756] sm:$0xff]
      %vm766 = vcmask 261120
      %v767 = vsel %vm766, %v764, 0.0
      %768 = vadd.xlane.f32.xlu0 %v767
      %v769 = vpop.xlane.xlu0 %768
      %v770 = vrcp.pop 32.0
      %v771 = vmul.f32 %v769, %v770
      %v772 = vsub.f32 %v764, %v771
      %v773 = vmul.f32 %v772, %v772
      %v774 = vsel %vm766, %v773, 0.0
      %775 = vadd.xlane.f32.xlu0 %v774
      %v776 = vpop.xlane.xlu0 %775
      %v777 = vmul.f32 %v776, %v770
      %v778 = vadd.f32 %v777, 1e-05
      %v779 = vrsqrt.pop %v778
      %v780 = vmul.f32 %v772, %v779
      %v781 = vld [vmem:[%s4] sm:$0x1]
      %v783 = vlaneseq
      %v784 = vshrl.u32 %v783, 7
      %v785 = vsub.s32 0, %v784
      %v786 = vrot.slane %v781, %v785
      %v788 = vmul.f32 %v780, %v786
      %v789 = vld [vmem:[%s5] sm:$0x1]
      %v791 = vlaneseq
      %v792 = vshrl.u32 %v791, 7
      %v793 = vsub.s32 0, %v792
      %v794 = vrot.slane %v789, %v793
      %v796 = vadd.f32 %v788, %v794
      %v797 = vld [vmem:[%s6] sm:$0xff]
      %v798 = vld [vmem:[%s6 + $0x8] sm:$0xff]
      %v799 = vld [vmem:[%s6 + $0x10] sm:$0xff]
      %v800 = vld [vmem:[%s6 + $0x18] sm:$0xff]
      %v801 = vld [vmem:[%s6 + $0x20] sm:$0xff]
      %v802 = vld [vmem:[%s6 + $0x28] sm:$0xff]
      %v803 = vld [vmem:[%s6 + $0x30] sm:$0xff]
      %v804 = vld [vmem:[%s6 + $0x38] sm:$0xff]
      %v805 = vld [vmem:[%s6 + $0x40] sm:$0xff]
      %v806 = vld [vmem:[%s6 + $0x48] sm:$0xff]
      %v807 = vld [vmem:[%s6 + $0x50] sm:$0xff]
      %v808 = vld [vmem:[%s6 + $0x58] sm:$0xff]
      %v809 = vld [vmem:[%s6 + $0x60] sm:$0xff]
      %v810 = vld [vmem:[%s6 + $0x68] sm:$0xff]
      %v811 = vld [vmem:[%s6 + $0x70] sm:$0xff]
      %v812 = vld [vmem:[%s6 + $0x78] sm:$0xff]
      %v813 = vld [vmem:[%s7] sm:$0x1]
      %v814 = vld [vmem:[%s7 + $0x1] sm:$0x1]
      %v815 = vld [vmem:[%s7 + $0x2] sm:$0x1]
      %v816 = vld [vmem:[%s7 + $0x3] sm:$0x1]
      %v821 = vlaneseq
      %v822 = vshrl.u32 %v821, 7
      %v823 = vsub.s32 0, %v822
      %v824 = vrot.slane %v813, %v823
      %v825 = vlaneseq
      %v826 = vshrl.u32 %v825, 7
      %v827 = vsub.s32 0, %v826
      %v828 = vrot.slane %v814, %v827
      %v829 = vlaneseq
      %v830 = vshrl.u32 %v829, 7
      %v831 = vsub.s32 0, %v830
      %v832 = vrot.slane %v815, %v831
      %v833 = vlaneseq
      %v834 = vshrl.u32 %v833, 7
      %v835 = vsub.s32 0, %v834
      %v836 = vrot.slane %v816, %v835
      %v842 = vsel %vm766, %v796, 0
      %844 = vmatprep.subr.mxu0 0.0
      %845 = vmatpush1.msra.mxu0 %v797
      %846 = vmatprep.subr.mxu0 0.0
      %847 = vmatpush1.msra.mxu0 %v798
      %848 = vmatprep.subr.mxu0 0.0
      %849 = vmatpush1.msra.mxu0 %v799
      %850 = vmatprep.subr.mxu0 0.0
      %851 = vmatpush1.msra.mxu0 %v800
      %852 = vmatprep.subr.mxu0 0.0
      %853 = vmatpush1.msra.mxu0 0.0
      %854 = vmatprep.subr.mxu0 0.0
      %855 = vmatpush1.msra.mxu0 0.0
      %856 = vmatprep.subr.mxu0 0.0
      %857 = vmatpush1.msra.mxu0 0.0
      %858 = vmatprep.subr.mxu0 0.0
      %859 = vmatpush1.msra.mxu0 0.0
      %860 = vmatprep.subr.mxu0 0.0
      %861 = vmatpush1.msra.mxu0 0.0
      %862 = vmatprep.subr.mxu0 0.0
      %863 = vmatpush1.msra.mxu0 0.0
      %864 = vmatprep.subr.mxu0 0.0
      %865 = vmatpush1.msra.mxu0 0.0
      %866 = vmatprep.subr.mxu0 0.0
      %867 = vmatpush1.msra.mxu0 0.0
      %868 = vmatprep.subr.mxu0 0.0
      %869 = vmatpush1.msra.mxu0 0.0
      %870 = vmatprep.subr.mxu0 0.0
      %871 = vmatpush1.msra.mxu0 0.0
      %872 = vmatprep.subr.mxu0 0.0
      %873 = vmatpush1.msra.mxu0 0.0
      %874 = vmatprep.subr.mxu0 0.0
      %875 = vmatpush1.msra.mxu0 0.0
      %876 = vmatprep.subr.mxu0 0.0
      %877 = vmatpush1.msra.mxu0 0.0
      %878 = vmatprep.subr.mxu0 0.0
      %879 = vmatpush1.msra.mxu0 0.0
      %880 = vmatprep.subr.mxu0 0.0
      %881 = vmatpush1.msra.mxu0 0.0
      %882 = vmatprep.subr.mxu0 0.0
      %883 = vmatpush1.msra.mxu0 0.0
      %884 = vmatprep.subr.mxu0 0.0
      %885 = vmatpush1.msra.mxu0 0.0
      %886 = vmatprep.subr.mxu0 0.0
      %887 = vmatpush1.msra.mxu0 0.0
      %888 = vmatprep.subr.mxu0 0.0
      %889 = vmatpush1.msra.mxu0 0.0
      %890 = vmatprep.subr.mxu0 0.0
      %891 = vmatpush1.msra.mxu0 0.0
      %892 = vmatprep.subr.mxu0 0.0
      %893 = vmatpush1.msra.mxu0 0.0
      %894 = vmatprep.subr.mxu0 0.0
      %895 = vmatpush1.msra.mxu0 0.0
      %896 = vmatprep.subr.mxu0 0.0
      %897 = vmatpush1.msra.mxu0 0.0
      %898 = vmatprep.subr.mxu0 0.0
      %899 = vmatpush1.msra.mxu0 0.0
      %900 = vmatprep.subr.mxu0 0.0
      %901 = vmatpush1.msra.mxu0 0.0
      %902 = vmatprep.subr.mxu0 0.0
      %903 = vmatpush1.msra.mxu0 0.0
      %904 = vmatprep.subr.mxu0 0.0
      %905 = vmatpush1.msra.mxu0 0.0
      %906 = vmatprep.subr.mxu0 0.0
      %907 = vmatpush1.msra.mxu0 0.0
      %908 = vmatprep.mubr.f32.mxu0 0.0
      %909 = vmatmul.mubr.f32.gmra.mrb[0].mxu0 %v842
      %v910 = vpop.f32.mrb[0].mxu0
      %v911 = vadd.f32 %v824, %v910
      %v912 = vpop.f32.mrb[0].mxu0
      %913 = vdwg.mxu0
      %914 = vmatprep.subr.mxu0 0.0
      %915 = vmatpush1.msra.mxu0 %v801
      %916 = vmatprep.subr.mxu0 0.0
      %917 = vmatpush1.msra.mxu0 %v802
      %918 = vmatprep.subr.mxu0 0.0
      %919 = vmatpush1.msra.mxu0 %v803
      %920 = vmatprep.subr.mxu0 0.0
      %921 = vmatpush1.msra.mxu0 %v804
      %922 = vmatprep.subr.mxu0 0.0
      %923 = vmatpush1.msra.mxu0 0.0
      %924 = vmatprep.subr.mxu0 0.0
      %925 = vmatpush1.msra.mxu0 0.0
      %926 = vmatprep.subr.mxu0 0.0
      %927 = vmatpush1.msra.mxu0 0.0
      %928 = vmatprep.subr.mxu0 0.0
      %929 = vmatpush1.msra.mxu0 0.0
      %930 = vmatprep.subr.mxu0 0.0
      %931 = vmatpush1.msra.mxu0 0.0
      %932 = vmatprep.subr.mxu0 0.0
      %933 = vmatpush1.msra.mxu0 0.0
      %934 = vmatprep.subr.mxu0 0.0
      %935 = vmatpush1.msra.mxu0 0.0
      %936 = vmatprep.subr.mxu0 0.0
      %937 = vmatpush1.msra.mxu0 0.0
      %938 = vmatprep.subr.mxu0 0.0
      %939 = vmatpush1.msra.mxu0 0.0
      %940 = vmatprep.subr.mxu0 0.0
      %941 = vmatpush1.msra.mxu0 0.0
      %942 = vmatprep.subr.mxu0 0.0
      %943 = vmatpush1.msra.mxu0 0.0
      %944 = vmatprep.subr.mxu0 0.0
      %945 = vmatpush1.msra.mxu0 0.0
      %946 = vmatprep.subr.mxu0 0.0
      %947 = vmatpush1.msra.mxu0 0.0
      %948 = vmatprep.subr.mxu0 0.0
      %949 = vmatpush1.msra.mxu0 0.0
      %950 = vmatprep.subr.mxu0 0.0
      %951 = vmatpush1.msra.mxu0 0.0
      %952 = vmatprep.subr.mxu0 0.0
      %953 = vmatpush1.msra.mxu0 0.0
      %954 = vmatprep.subr.mxu0 0.0
      %955 = vmatpush1.msra.mxu0 0.0
      %956 = vmatprep.subr.mxu0 0.0
      %957 = vmatpush1.msra.mxu0 0.0
      %958 = vmatprep.subr.mxu0 0.0
      %959 = vmatpush1.msra.mxu0 0.0
      %960 = vmatprep.subr.mxu0 0.0
      %961 = vmatpush1.msra.mxu0 0.0
      %962 = vmatprep.subr.mxu0 0.0
      %963 = vmatpush1.msra.mxu0 0.0
      %964 = vmatprep.subr.mxu0 0.0
      %965 = vmatpush1.msra.mxu0 0.0
      %966 = vmatprep.subr.mxu0 0.0
      %967 = vmatpush1.msra.mxu0 0.0
      %968 = vmatprep.subr.mxu0 0.0
      %969 = vmatpush1.msra.mxu0 0.0
      %970 = vmatprep.subr.mxu0 0.0
      %971 = vmatpush1.msra.mxu0 0.0
      %972 = vmatprep.subr.mxu0 0.0
      %973 = vmatpush1.msra.mxu0 0.0
      %974 = vmatprep.subr.mxu0 0.0
      %975 = vmatpush1.msra.mxu0 0.0
      %976 = vmatprep.subr.mxu0 0.0
      %977 = vmatpush1.msra.mxu0 0.0
      %978 = vmatprep.mubr.f32.mxu0 0.0
      %979 = vmatmul.mubr.f32.gmra.mrb[0].mxu0 %v842
      %v980 = vpop.f32.mrb[0].mxu0
      %v981 = vadd.f32 %v828, %v980
      %v982 = vpop.f32.mrb[0].mxu0
      %983 = vdwg.mxu0
      %984 = vmatprep.subr.mxu0 0.0
      %985 = vmatpush1.msra.mxu0 %v805
      %986 = vmatprep.subr.mxu0 0.0
      %987 = vmatpush1.msra.mxu0 %v806
      %988 = vmatprep.subr.mxu0 0.0
      %989 = vmatpush1.msra.mxu0 %v807
      %990 = vmatprep.subr.mxu0 0.0
      %991 = vmatpush1.msra.mxu0 %v808
      %992 = vmatprep.subr.mxu0 0.0
      %993 = vmatpush1.msra.mxu0 0.0
      %994 = vmatprep.subr.mxu0 0.0
      %995 = vmatpush1.msra.mxu0 0.0
      %996 = vmatprep.subr.mxu0 0.0
      %997 = vmatpush1.msra.mxu0 0.0
      %998 = vmatprep.subr.mxu0 0.0
      %999 = vmatpush1.msra.mxu0 0.0
      %1000 = vmatprep.subr.mxu0 0.0
      %1001 = vmatpush1.msra.mxu0 0.0
      %1002 = vmatprep.subr.mxu0 0.0
      %1003 = vmatpush1.msra.mxu0 0.0
      %1004 = vmatprep.subr.mxu0 0.0
      %1005 = vmatpush1.msra.mxu0 0.0
      %1006 = vmatprep.subr.mxu0 0.0
      %1007 = vmatpush1.msra.mxu0 0.0
      %1008 = vmatprep.subr.mxu0 0.0
      %1009 = vmatpush1.msra.mxu0 0.0
      %1010 = vmatprep.subr.mxu0 0.0
      %1011 = vmatpush1.msra.mxu0 0.0
      %1012 = vmatprep.subr.mxu0 0.0
      %1013 = vmatpush1.msra.mxu0 0.0
      %1014 = vmatprep.subr.mxu0 0.0
      %1015 = vmatpush1.msra.mxu0 0.0
      %1016 = vmatprep.subr.mxu0 0.0
      %1017 = vmatpush1.msra.mxu0 0.0
      %1018 = vmatprep.subr.mxu0 0.0
      %1019 = vmatpush1.msra.mxu0 0.0
      %1020 = vmatprep.subr.mxu0 0.0
      %1021 = vmatpush1.msra.mxu0 0.0
      %1022 = vmatprep.subr.mxu0 0.0
      %1023 = vmatpush1.msra.mxu0 0.0
      %1024 = vmatprep.subr.mxu0 0.0
      %1025 = vmatpush1.msra.mxu0 0.0
      %1026 = vmatprep.subr.mxu0 0.0
      %1027 = vmatpush1.msra.mxu0 0.0
      %1028 = vmatprep.subr.mxu0 0.0
      %1029 = vmatpush1.msra.mxu0 0.0
      %1030 = vmatprep.subr.mxu0 0.0
      %1031 = vmatpush1.msra.mxu0 0.0
      %1032 = vmatprep.subr.mxu0 0.0
      %1033 = vmatpush1.msra.mxu0 0.0
      %1034 = vmatprep.subr.mxu0 0.0
      %1035 = vmatpush1.msra.mxu0 0.0
      %1036 = vmatprep.subr.mxu0 0.0
      %1037 = vmatpush1.msra.mxu0 0.0
      %1038 = vmatprep.subr.mxu0 0.0
      %1039 = vmatpush1.msra.mxu0 0.0
      %1040 = vmatprep.subr.mxu0 0.0
      %1041 = vmatpush1.msra.mxu0 0.0
      %1042 = vmatprep.subr.mxu0 0.0
      %1043 = vmatpush1.msra.mxu0 0.0
      %1044 = vmatprep.subr.mxu0 0.0
      %1045 = vmatpush1.msra.mxu0 0.0
      %1046 = vmatprep.subr.mxu0 0.0
      %1047 = vmatpush1.msra.mxu0 0.0
      %1048 = vmatprep.mubr.f32.mxu0 0.0
      %1049 = vmatmul.mubr.f32.gmra.mrb[0].mxu0 %v842
      %v1050 = vpop.f32.mrb[0].mxu0
      %v1051 = vadd.f32 %v832, %v1050
      %v1052 = vpop.f32.mrb[0].mxu0
      %1053 = vdwg.mxu0
      %1054 = vmatprep.subr.mxu0 0.0
      %1055 = vmatpush1.msra.mxu0 %v809
      %1056 = vmatprep.subr.mxu0 0.0
      %1057 = vmatpush1.msra.mxu0 %v810
      %1058 = vmatprep.subr.mxu0 0.0
      %1059 = vmatpush1.msra.mxu0 %v811
      %1060 = vmatprep.subr.mxu0 0.0
      %1061 = vmatpush1.msra.mxu0 %v812
      %1062 = vmatprep.subr.mxu0 0.0
      %1063 = vmatpush1.msra.mxu0 0.0
      %1064 = vmatprep.subr.mxu0 0.0
      %1065 = vmatpush1.msra.mxu0 0.0
      %1066 = vmatprep.subr.mxu0 0.0
      %1067 = vmatpush1.msra.mxu0 0.0
      %1068 = vmatprep.subr.mxu0 0.0
      %1069 = vmatpush1.msra.mxu0 0.0
      %1070 = vmatprep.subr.mxu0 0.0
      %1071 = vmatpush1.msra.mxu0 0.0
      %1072 = vmatprep.subr.mxu0 0.0
      %1073 = vmatpush1.msra.mxu0 0.0
      %1074 = vmatprep.subr.mxu0 0.0
      %1075 = vmatpush1.msra.mxu0 0.0
      %1076 = vmatprep.subr.mxu0 0.0
      %1077 = vmatpush1.msra.mxu0 0.0
      %1078 = vmatprep.subr.mxu0 0.0
      %1079 = vmatpush1.msra.mxu0 0.0
      %1080 = vmatprep.subr.mxu0 0.0
      %1081 = vmatpush1.msra.mxu0 0.0
      %1082 = vmatprep.subr.mxu0 0.0
      %1083 = vmatpush1.msra.mxu0 0.0
      %1084 = vmatprep.subr.mxu0 0.0
      %1085 = vmatpush1.msra.mxu0 0.0
      %1086 = vmatprep.subr.mxu0 0.0
      %1087 = vmatpush1.msra.mxu0 0.0
      %1088 = vmatprep.subr.mxu0 0.0
      %1089 = vmatpush1.msra.mxu0 0.0
      %1090 = vmatprep.subr.mxu0 0.0
      %1091 = vmatpush1.msra.mxu0 0.0
      %1092 = vmatprep.subr.mxu0 0.0
      %1093 = vmatpush1.msra.mxu0 0.0
      %1094 = vmatprep.subr.mxu0 0.0
      %1095 = vmatpush1.msra.mxu0 0.0
      %1096 = vmatprep.subr.mxu0 0.0
      %1097 = vmatpush1.msra.mxu0 0.0
      %1098 = vmatprep.subr.mxu0 0.0
      %1099 = vmatpush1.msra.mxu0 0.0
      %1100 = vmatprep.subr.mxu0 0.0
      %1101 = vmatpush1.msra.mxu0 0.0
      %1102 = vmatprep.subr.mxu0 0.0
      %1103 = vmatpush1.msra.mxu0 0.0
      %1104 = vmatprep.subr.mxu0 0.0
      %1105 = vmatpush1.msra.mxu0 0.0
      %1106 = vmatprep.subr.mxu0 0.0
      %1107 = vmatpush1.msra.mxu0 0.0
      %1108 = vmatprep.subr.mxu0 0.0
      %1109 = vmatpush1.msra.mxu0 0.0
      %1110 = vmatprep.subr.mxu0 0.0
      %1111 = vmatpush1.msra.mxu0 0.0
      %1112 = vmatprep.subr.mxu0 0.0
      %1113 = vmatpush1.msra.mxu0 0.0
      %1114 = vmatprep.subr.mxu0 0.0
      %1115 = vmatpush1.msra.mxu0 0.0
      %1116 = vmatprep.subr.mxu0 0.0
      %1117 = vmatpush1.msra.mxu0 0.0
      %1118 = vmatprep.mubr.f32.mxu0 0.0
      %1119 = vmatmul.mubr.f32.gmra.mrb[0].mxu0 %v842
      %v1120 = vpop.f32.mrb[0].mxu0
      %v1121 = vadd.f32 %v836, %v1120
      %v1122 = vpop.f32.mrb[0].mxu0
      %1123 = vdwg.mxu0
      %v1124 = vld [vmem:[%s3] sm:$0xff]
      %vm1125 = vcmp.gt.f32.partialorder %v1124, 0.5
      %1127 = vrot.lane.b32.xlu0 %v911, 120
      %v1128 = vpop.permute.xlu0 %1127
      %vm1129 = vcmask 64512
      %v1130 = vsel %vm1129, %v911, 0
      %v1132 = vsel %vm1129, %v1128, 0
      %1134 = vmatprep.subr.mxu0 0.0
      %1135 = vmatpush1.xpose.msra.mxu0 %v1132
      %1136 = vmatprep.subr.mxu0 0.0
      %1137 = vmatpush1.xpose.msra.mxu0 0.0
      %1138 = vmatprep.subr.mxu0 0.0
      %1139 = vmatpush1.xpose.msra.mxu0 0.0
      %1140 = vmatprep.subr.mxu0 0.0
      %1141 = vmatpush1.xpose.msra.mxu0 0.0
      %1142 = vmatprep.subr.mxu0 0.0
      %1143 = vmatpush1.xpose.msra.mxu0 0.0
      %1144 = vmatprep.subr.mxu0 0.0
      %1145 = vmatpush1.xpose.msra.mxu0 0.0
      %1146 = vmatprep.subr.mxu0 0.0
      %1147 = vmatpush1.xpose.msra.mxu0 0.0
      %1148 = vmatprep.subr.mxu0 0.0
      %1149 = vmatpush1.xpose.msra.mxu0 0.0
      %1150 = vmatprep.subr.mxu0 0.0
      %1151 = vmatpush1.xpose.msra.mxu0 0.0
      %1152 = vmatprep.subr.mxu0 0.0
      %1153 = vmatpush1.xpose.msra.mxu0 0.0
      %1154 = vmatprep.subr.mxu0 0.0
      %1155 = vmatpush1.xpose.msra.mxu0 0.0
      %1156 = vmatprep.subr.mxu0 0.0
      %1157 = vmatpush1.xpose.msra.mxu0 0.0
      %1158 = vmatprep.subr.mxu0 0.0
      %1159 = vmatpush1.xpose.msra.mxu0 0.0
      %1160 = vmatprep.subr.mxu0 0.0
      %1161 = vmatpush1.xpose.msra.mxu0 0.0
      %1162 = vmatprep.subr.mxu0 0.0
      %1163 = vmatpush1.xpose.msra.mxu0 0.0
      %1164 = vmatprep.subr.mxu0 0.0
      %1165 = vmatpush1.xpose.msra.mxu0 0.0
      %1166 = vmatprep.subr.mxu0 0.0
      %1167 = vmatpush1.xpose.msra.mxu0 0.0
      %1168 = vmatprep.subr.mxu0 0.0
      %1169 = vmatpush1.xpose.msra.mxu0 0.0
      %1170 = vmatprep.subr.mxu0 0.0
      %1171 = vmatpush1.xpose.msra.mxu0 0.0
      %1172 = vmatprep.subr.mxu0 0.0
      %1173 = vmatpush1.xpose.msra.mxu0 0.0
      %1174 = vmatprep.subr.mxu0 0.0
      %1175 = vmatpush1.xpose.msra.mxu0 0.0
      %1176 = vmatprep.subr.mxu0 0.0
      %1177 = vmatpush1.xpose.msra.mxu0 0.0
      %1178 = vmatprep.subr.mxu0 0.0
      %1179 = vmatpush1.xpose.msra.mxu0 0.0
      %1180 = vmatprep.subr.mxu0 0.0
      %1181 = vmatpush1.xpose.msra.mxu0 0.0
      %1182 = vmatprep.subr.mxu0 0.0
      %1183 = vmatpush1.xpose.msra.mxu0 0.0
      %1184 = vmatprep.subr.mxu0 0.0
      %1185 = vmatpush1.xpose.msra.mxu0 0.0
      %1186 = vmatprep.subr.mxu0 0.0
      %1187 = vmatpush1.xpose.msra.mxu0 0.0
      %1188 = vmatprep.subr.mxu0 0.0
      %1189 = vmatpush1.xpose.msra.mxu0 0.0
      %1190 = vmatprep.subr.mxu0 0.0
      %1191 = vmatpush1.xpose.msra.mxu0 0.0
      %1192 = vmatprep.subr.mxu0 0.0
      %1193 = vmatpush1.xpose.msra.mxu0 0.0
      %1194 = vmatprep.subr.mxu0 0.0
      %1195 = vmatpush1.xpose.msra.mxu0 0.0
      %1196 = vmatprep.subr.mxu0 0.0
      %1197 = vmatpush1.xpose.msra.mxu0 0.0
      %1198 = vmatprep.mubr.f32.mxu0 0.0
      %1199 = vmatmul.mubr.f32.gmra.mrb[0].mxu0 %v1130
      %v1200 = vpop.f32.mrb[0].mxu0
      %v1201 = vadd.f32 0.0, %v1200
      %v1202 = vpop.f32.mrb[0].mxu0
      %1203 = vdwg.mxu0
      %1205 = vrot.lane.b32.xlu0 %v981, 120
      %v1206 = vpop.permute.xlu0 %1205
      %v1207 = vsel %vm1129, %v981, 0
      %v1209 = vsel %vm1129, %v1206, 0
      %1211 = vmatprep.subr.mxu0 0.0
      %1212 = vmatpush1.xpose.msra.mxu0 %v1209
      %1213 = vmatprep.subr.mxu0 0.0
      %1214 = vmatpush1.xpose.msra.mxu0 0.0
      %1215 = vmatprep.subr.mxu0 0.0
      %1216 = vmatpush1.xpose.msra.mxu0 0.0
      %1217 = vmatprep.subr.mxu0 0.0
      %1218 = vmatpush1.xpose.msra.mxu0 0.0
      %1219 = vmatprep.subr.mxu0 0.0
      %1220 = vmatpush1.xpose.msra.mxu0 0.0
      %1221 = vmatprep.subr.mxu0 0.0
      %1222 = vmatpush1.xpose.msra.mxu0 0.0
      %1223 = vmatprep.subr.mxu0 0.0
      %1224 = vmatpush1.xpose.msra.mxu0 0.0
      %1225 = vmatprep.subr.mxu0 0.0
      %1226 = vmatpush1.xpose.msra.mxu0 0.0
      %1227 = vmatprep.subr.mxu0 0.0
      %1228 = vmatpush1.xpose.msra.mxu0 0.0
      %1229 = vmatprep.subr.mxu0 0.0
      %1230 = vmatpush1.xpose.msra.mxu0 0.0
      %1231 = vmatprep.subr.mxu0 0.0
      %1232 = vmatpush1.xpose.msra.mxu0 0.0
      %1233 = vmatprep.subr.mxu0 0.0
      %1234 = vmatpush1.xpose.msra.mxu0 0.0
      %1235 = vmatprep.subr.mxu0 0.0
      %1236 = vmatpush1.xpose.msra.mxu0 0.0
      %1237 = vmatprep.subr.mxu0 0.0
      %1238 = vmatpush1.xpose.msra.mxu0 0.0
      %1239 = vmatprep.subr.mxu0 0.0
      %1240 = vmatpush1.xpose.msra.mxu0 0.0
      %1241 = vmatprep.subr.mxu0 0.0
      %1242 = vmatpush1.xpose.msra.mxu0 0.0
      %1243 = vmatprep.subr.mxu0 0.0
      %1244 = vmatpush1.xpose.msra.mxu0 0.0
      %1245 = vmatprep.subr.mxu0 0.0
      %1246 = vmatpush1.xpose.msra.mxu0 0.0
      %1247 = vmatprep.subr.mxu0 0.0
      %1248 = vmatpush1.xpose.msra.mxu0 0.0
      %1249 = vmatprep.subr.mxu0 0.0
      %1250 = vmatpush1.xpose.msra.mxu0 0.0
      %1251 = vmatprep.subr.mxu0 0.0
      %1252 = vmatpush1.xpose.msra.mxu0 0.0
      %1253 = vmatprep.subr.mxu0 0.0
      %1254 = vmatpush1.xpose.msra.mxu0 0.0
      %1255 = vmatprep.subr.mxu0 0.0
      %1256 = vmatpush1.xpose.msra.mxu0 0.0
      %1257 = vmatprep.subr.mxu0 0.0
      %1258 = vmatpush1.xpose.msra.mxu0 0.0
      %1259 = vmatprep.subr.mxu0 0.0
      %1260 = vmatpush1.xpose.msra.mxu0 0.0
      %1261 = vmatprep.subr.mxu0 0.0
      %1262 = vmatpush1.xpose.msra.mxu0 0.0
      %1263 = vmatprep.subr.mxu0 0.0
      %1264 = vmatpush1.xpose.msra.mxu0 0.0
      %1265 = vmatprep.subr.mxu0 0.0
      %1266 = vmatpush1.xpose.msra.mxu0 0.0
      %1267 = vmatprep.subr.mxu0 0.0
      %1268 = vmatpush1.xpose.msra.mxu0 0.0
      %1269 = vmatprep.subr.mxu0 0.0
      %1270 = vmatpush1.xpose.msra.mxu0 0.0
      %1271 = vmatprep.subr.mxu0 0.0
      %1272 = vmatpush1.xpose.msra.mxu0 0.0
      %1273 = vmatprep.subr.mxu0 0.0
      %1274 = vmatpush1.xpose.msra.mxu0 0.0
      %1275 = vmatprep.mubr.f32.mxu0 0.0
      %1276 = vmatmul.mubr.f32.gmra.mrb[0].mxu0 %v1207
      %v1277 = vpop.f32.mrb[0].mxu0
      %v1278 = vadd.f32 0.0, %v1277
      %v1279 = vpop.f32.mrb[0].mxu0
      %1280 = vdwg.mxu0
      %1282 = vrot.lane.b32.xlu0 %v1051, 120
      %v1283 = vpop.permute.xlu0 %1282
      %v1284 = vsel %vm1129, %v1051, 0
      %v1286 = vsel %vm1129, %v1283, 0
      %1288 = vmatprep.subr.mxu0 0.0
      %1289 = vmatpush1.xpose.msra.mxu0 %v1286
      %1290 = vmatprep.subr.mxu0 0.0
      %1291 = vmatpush1.xpose.msra.mxu0 0.0
      %1292 = vmatprep.subr.mxu0 0.0
      %1293 = vmatpush1.xpose.msra.mxu0 0.0
      %1294 = vmatprep.subr.mxu0 0.0
      %1295 = vmatpush1.xpose.msra.mxu0 0.0
      %1296 = vmatprep.subr.mxu0 0.0
      %1297 = vmatpush1.xpose.msra.mxu0 0.0
      %1298 = vmatprep.subr.mxu0 0.0
      %1299 = vmatpush1.xpose.msra.mxu0 0.0
      %1300 = vmatprep.subr.mxu0 0.0
      %1301 = vmatpush1.xpose.msra.mxu0 0.0
      %1302 = vmatprep.subr.mxu0 0.0
      %1303 = vmatpush1.xpose.msra.mxu0 0.0
      %1304 = vmatprep.subr.mxu0 0.0
      %1305 = vmatpush1.xpose.msra.mxu0 0.0
      %1306 = vmatprep.subr.mxu0 0.0
      %1307 = vmatpush1.xpose.msra.mxu0 0.0
      %1308 = vmatprep.subr.mxu0 0.0
      %1309 = vmatpush1.xpose.msra.mxu0 0.0
      %1310 = vmatprep.subr.mxu0 0.0
      %1311 = vmatpush1.xpose.msra.mxu0 0.0
      %1312 = vmatprep.subr.mxu0 0.0
      %1313 = vmatpush1.xpose.msra.mxu0 0.0
      %1314 = vmatprep.subr.mxu0 0.0
      %1315 = vmatpush1.xpose.msra.mxu0 0.0
      %1316 = vmatprep.subr.mxu0 0.0
      %1317 = vmatpush1.xpose.msra.mxu0 0.0
      %1318 = vmatprep.subr.mxu0 0.0
      %1319 = vmatpush1.xpose.msra.mxu0 0.0
      %1320 = vmatprep.subr.mxu0 0.0
      %1321 = vmatpush1.xpose.msra.mxu0 0.0
      %1322 = vmatprep.subr.mxu0 0.0
      %1323 = vmatpush1.xpose.msra.mxu0 0.0
      %1324 = vmatprep.subr.mxu0 0.0
      %1325 = vmatpush1.xpose.msra.mxu0 0.0
      %1326 = vmatprep.subr.mxu0 0.0
      %1327 = vmatpush1.xpose.msra.mxu0 0.0
      %1328 = vmatprep.subr.mxu0 0.0
      %1329 = vmatpush1.xpose.msra.mxu0 0.0
      %1330 = vmatprep.subr.mxu0 0.0
      %1331 = vmatpush1.xpose.msra.mxu0 0.0
      %1332 = vmatprep.subr.mxu0 0.0
      %1333 = vmatpush1.xpose.msra.mxu0 0.0
      %1334 = vmatprep.subr.mxu0 0.0
      %1335 = vmatpush1.xpose.msra.mxu0 0.0
      %1336 = vmatprep.subr.mxu0 0.0
      %1337 = vmatpush1.xpose.msra.mxu0 0.0
      %1338 = vmatprep.subr.mxu0 0.0
      %1339 = vmatpush1.xpose.msra.mxu0 0.0
      %1340 = vmatprep.subr.mxu0 0.0
      %1341 = vmatpush1.xpose.msra.mxu0 0.0
      %1342 = vmatprep.subr.mxu0 0.0
      %1343 = vmatpush1.xpose.msra.mxu0 0.0
      %1344 = vmatprep.subr.mxu0 0.0
      %1345 = vmatpush1.xpose.msra.mxu0 0.0
      %1346 = vmatprep.subr.mxu0 0.0
      %1347 = vmatpush1.xpose.msra.mxu0 0.0
      %1348 = vmatprep.subr.mxu0 0.0
      %1349 = vmatpush1.xpose.msra.mxu0 0.0
      %1350 = vmatprep.subr.mxu0 0.0
      %1351 = vmatpush1.xpose.msra.mxu0 0.0
      %1352 = vmatprep.mubr.f32.mxu0 0.0
      %1353 = vmatmul.mubr.f32.gmra.mrb[0].mxu0 %v1284
      %v1354 = vpop.f32.mrb[0].mxu0
      %v1355 = vadd.f32 0.0, %v1354
      %v1356 = vpop.f32.mrb[0].mxu0
      %1357 = vdwg.mxu0
      %1359 = vrot.lane.b32.xlu0 %v1121, 120
      %v1360 = vpop.permute.xlu0 %1359
      %v1361 = vsel %vm1129, %v1121, 0
      %v1363 = vsel %vm1129, %v1360, 0
      %1365 = vmatprep.subr.mxu0 0.0
      %1366 = vmatpush1.xpose.msra.mxu0 %v1363
      %1367 = vmatprep.subr.mxu0 0.0
      %1368 = vmatpush1.xpose.msra.mxu0 0.0
      %1369 = vmatprep.subr.mxu0 0.0
      %1370 = vmatpush1.xpose.msra.mxu0 0.0
      %1371 = vmatprep.subr.mxu0 0.0
      %1372 = vmatpush1.xpose.msra.mxu0 0.0
      %1373 = vmatprep.subr.mxu0 0.0
      %1374 = vmatpush1.xpose.msra.mxu0 0.0
      %1375 = vmatprep.subr.mxu0 0.0
      %1376 = vmatpush1.xpose.msra.mxu0 0.0
      %1377 = vmatprep.subr.mxu0 0.0
      %1378 = vmatpush1.xpose.msra.mxu0 0.0
      %1379 = vmatprep.subr.mxu0 0.0
      %1380 = vmatpush1.xpose.msra.mxu0 0.0
      %1381 = vmatprep.subr.mxu0 0.0
      %1382 = vmatpush1.xpose.msra.mxu0 0.0
      %1383 = vmatprep.subr.mxu0 0.0
      %1384 = vmatpush1.xpose.msra.mxu0 0.0
      %1385 = vmatprep.subr.mxu0 0.0
      %1386 = vmatpush1.xpose.msra.mxu0 0.0
      %1387 = vmatprep.subr.mxu0 0.0
      %1388 = vmatpush1.xpose.msra.mxu0 0.0
      %1389 = vmatprep.subr.mxu0 0.0
      %1390 = vmatpush1.xpose.msra.mxu0 0.0
      %1391 = vmatprep.subr.mxu0 0.0
      %1392 = vmatpush1.xpose.msra.mxu0 0.0
      %1393 = vmatprep.subr.mxu0 0.0
      %1394 = vmatpush1.xpose.msra.mxu0 0.0
      %1395 = vmatprep.subr.mxu0 0.0
      %1396 = vmatpush1.xpose.msra.mxu0 0.0
      %1397 = vmatprep.subr.mxu0 0.0
      %1398 = vmatpush1.xpose.msra.mxu0 0.0
      %1399 = vmatprep.subr.mxu0 0.0
      %1400 = vmatpush1.xpose.msra.mxu0 0.0
      %1401 = vmatprep.subr.mxu0 0.0
      %1402 = vmatpush1.xpose.msra.mxu0 0.0
      %1403 = vmatprep.subr.mxu0 0.0
      %1404 = vmatpush1.xpose.msra.mxu0 0.0
      %1405 = vmatprep.subr.mxu0 0.0
      %1406 = vmatpush1.xpose.msra.mxu0 0.0
      %1407 = vmatprep.subr.mxu0 0.0
      %1408 = vmatpush1.xpose.msra.mxu0 0.0
      %1409 = vmatprep.subr.mxu0 0.0
      %1410 = vmatpush1.xpose.msra.mxu0 0.0
      %1411 = vmatprep.subr.mxu0 0.0
      %1412 = vmatpush1.xpose.msra.mxu0 0.0
      %1413 = vmatprep.subr.mxu0 0.0
      %1414 = vmatpush1.xpose.msra.mxu0 0.0
      %1415 = vmatprep.subr.mxu0 0.0
      %1416 = vmatpush1.xpose.msra.mxu0 0.0
      %1417 = vmatprep.subr.mxu0 0.0
      %1418 = vmatpush1.xpose.msra.mxu0 0.0
      %1419 = vmatprep.subr.mxu0 0.0
      %1420 = vmatpush1.xpose.msra.mxu0 0.0
      %1421 = vmatprep.subr.mxu0 0.0
      %1422 = vmatpush1.xpose.msra.mxu0 0.0
      %1423 = vmatprep.subr.mxu0 0.0
      %1424 = vmatpush1.xpose.msra.mxu0 0.0
      %1425 = vmatprep.subr.mxu0 0.0
      %1426 = vmatpush1.xpose.msra.mxu0 0.0
      %1427 = vmatprep.subr.mxu0 0.0
      %1428 = vmatpush1.xpose.msra.mxu0 0.0
      %1429 = vmatprep.mubr.f32.mxu0 0.0
      %1430 = vmatmul.mubr.f32.gmra.mrb[0].mxu0 %v1361
      %v1431 = vpop.f32.mrb[0].mxu0
      %v1432 = vadd.f32 0.0, %v1431
      %v1433 = vpop.f32.mrb[0].mxu0
      %1434 = vdwg.mxu0
      %v1435 = vmul.f32 %v1201, 0.17677669
      %v1436 = vmul.f32 %v1278, 0.17677669
      %v1437 = vmul.f32 %v1355, 0.17677669
      %v1438 = vmul.f32 %v1432, 0.17677669
      %v1439 = vsel %vm1125, 1, 0
      %vm1440 = vcmp.eq.s32.totalorder %v1439, 1
      %v1441 = vsel %vm1440, -100000.0, %v1435
      %v1442 = vsel %vm1440, -100000.0, %v1436
      %v1443 = vsel %vm1440, -100000.0, %v1437
      %v1444 = vsel %vm1440, -100000.0, %v1438
      %v1445 = vsel %vm1129, %v1441, -inf
      %1446 = vmax.xlane.f32.xlu0 %v1445
      %v1447 = vpop.xlane.xlu0 %1446
      %v1448 = vsel %vm1129, %v1442, -inf
      %1449 = vmax.xlane.f32.xlu0 %v1448
      %v1450 = vpop.xlane.xlu0 %1449
      %v1451 = vsel %vm1129, %v1443, -inf
      %1452 = vmax.xlane.f32.xlu0 %v1451
      %v1453 = vpop.xlane.xlu0 %1452
      %v1454 = vsel %vm1129, %v1444, -inf
      %1455 = vmax.xlane.f32.xlu0 %v1454
      %v1456 = vpop.xlane.xlu0 %1455
      %v1457 = vsub.f32 %v1441, %v1447
      %v1458 = vsub.f32 %v1442, %v1450
      %v1459 = vsub.f32 %v1443, %v1453
      %v1460 = vsub.f32 %v1444, %v1456
      %v1461 = vmul.f32 %v1457, 1.442695
      %v1462 = vpow.pop %v1461
      %v1463 = vmul.f32 %v1458, 1.442695
      %v1464 = vpow.pop %v1463
      %v1465 = vmul.f32 %v1459, 1.442695
      %v1466 = vpow.pop %v1465
      %v1467 = vmul.f32 %v1460, 1.442695
      %v1468 = vpow.pop %v1467
      %v1469 = vsel %vm1129, %v1462, 0.0
      %1470 = vadd.xlane.f32.xlu0 %v1469
      %v1471 = vpop.xlane.xlu0 %1470
      %v1472 = vsel %vm1129, %v1464, 0.0
      %1473 = vadd.xlane.f32.xlu0 %v1472
      %v1474 = vpop.xlane.xlu0 %1473
      %v1475 = vsel %vm1129, %v1466, 0.0
      %1476 = vadd.xlane.f32.xlu0 %v1475
      %v1477 = vpop.xlane.xlu0 %1476
      %v1478 = vsel %vm1129, %v1468, 0.0
      %1479 = vadd.xlane.f32.xlu0 %v1478
      %v1480 = vpop.xlane.xlu0 %1479
      %v1481 = vrcp.pop %v1471
      %v1482 = vrcp.pop %v1474
      %v1483 = vrcp.pop %v1477
      %v1484 = vrcp.pop %v1480
      %v1485 = vmul.f32 %v1462, %v1481
      %v1486 = vmul.f32 %v1464, %v1482
      %v1487 = vmul.f32 %v1466, %v1483
      %v1488 = vmul.f32 %v1468, %v1484
      %1489 = vrot.lane.b32.xlu0 %v911, 112
      %v1490 = vpop.permute.xlu0 %1489
      %v1493 = vsel %vm1129, %v1485, 0
      %1495 = vmatprep.subr.mxu0 0.0
      %1496 = vmatpush1.msra.mxu0 %v1490
      %1497 = vmatprep.subr.mxu0 0.0
      %1498 = vmatpush1.msra.mxu0 0.0
      %1499 = vmatprep.subr.mxu0 0.0
      %1500 = vmatpush1.msra.mxu0 0.0
      %1501 = vmatprep.subr.mxu0 0.0
      %1502 = vmatpush1.msra.mxu0 0.0
      %1503 = vmatprep.subr.mxu0 0.0
      %1504 = vmatpush1.msra.mxu0 0.0
      %1505 = vmatprep.subr.mxu0 0.0
      %1506 = vmatpush1.msra.mxu0 0.0
      %1507 = vmatprep.subr.mxu0 0.0
      %1508 = vmatpush1.msra.mxu0 0.0
      %1509 = vmatprep.subr.mxu0 0.0
      %1510 = vmatpush1.msra.mxu0 0.0
      %1511 = vmatprep.subr.mxu0 0.0
      %1512 = vmatpush1.msra.mxu0 0.0
      %1513 = vmatprep.subr.mxu0 0.0
      %1514 = vmatpush1.msra.mxu0 0.0
      %1515 = vmatprep.subr.mxu0 0.0
      %1516 = vmatpush1.msra.mxu0 0.0
      %1517 = vmatprep.subr.mxu0 0.0
      %1518 = vmatpush1.msra.mxu0 0.0
      %1519 = vmatprep.subr.mxu0 0.0
      %1520 = vmatpush1.msra.mxu0 0.0
      %1521 = vmatprep.subr.mxu0 0.0
      %1522 = vmatpush1.msra.mxu0 0.0
      %1523 = vmatprep.subr.mxu0 0.0
      %1524 = vmatpush1.msra.mxu0 0.0
      %1525 = vmatprep.subr.mxu0 0.0
      %1526 = vmatpush1.msra.mxu0 0.0
      %1527 = vmatprep.subr.mxu0 0.0
      %1528 = vmatpush1.msra.mxu0 0.0
      %1529 = vmatprep.subr.mxu0 0.0
      %1530 = vmatpush1.msra.mxu0 0.0
      %1531 = vmatprep.subr.mxu0 0.0
      %1532 = vmatpush1.msra.mxu0 0.0
      %1533 = vmatprep.subr.mxu0 0.0
      %1534 = vmatpush1.msra.mxu0 0.0
      %1535 = vmatprep.subr.mxu0 0.0
      %1536 = vmatpush1.msra.mxu0 0.0
      %1537 = vmatprep.subr.mxu0 0.0
      %1538 = vmatpush1.msra.mxu0 0.0
      %1539 = vmatprep.subr.mxu0 0.0
      %1540 = vmatpush1.msra.mxu0 0.0
      %1541 = vmatprep.subr.mxu0 0.0
      %1542 = vmatpush1.msra.mxu0 0.0
      %1543 = vmatprep.subr.mxu0 0.0
      %1544 = vmatpush1.msra.mxu0 0.0
      %1545 = vmatprep.subr.mxu0 0.0
      %1546 = vmatpush1.msra.mxu0 0.0
      %1547 = vmatprep.subr.mxu0 0.0
      %1548 = vmatpush1.msra.mxu0 0.0
      %1549 = vmatprep.subr.mxu0 0.0
      %1550 = vmatpush1.msra.mxu0 0.0
      %1551 = vmatprep.subr.mxu0 0.0
      %1552 = vmatpush1.msra.mxu0 0.0
      %1553 = vmatprep.subr.mxu0 0.0
      %1554 = vmatpush1.msra.mxu0 0.0
      %1555 = vmatprep.subr.mxu0 0.0
      %1556 = vmatpush1.msra.mxu0 0.0
      %1557 = vmatprep.subr.mxu0 0.0
      %1558 = vmatpush1.msra.mxu0 0.0
      %1559 = vmatprep.mubr.f32.mxu0 0.0
      %1560 = vmatmul.mubr.f32.gmra.mrb[0].mxu0 %v1493
      %v1561 = vpop.f32.mrb[0].mxu0
      %v1562 = vadd.f32 0.0, %v1561
      %v1563 = vpop.f32.mrb[0].mxu0
      %1564 = vdwg.mxu0
      %1565 = vrot.lane.b32.xlu0 %v981, 112
      %v1566 = vpop.permute.xlu0 %1565
      %v1569 = vsel %vm1129, %v1486, 0
      %1571 = vmatprep.subr.mxu0 0.0
      %1572 = vmatpush1.msra.mxu0 %v1566
      %1573 = vmatprep.subr.mxu0 0.0
      %1574 = vmatpush1.msra.mxu0 0.0
      %1575 = vmatprep.subr.mxu0 0.0
      %1576 = vmatpush1.msra.mxu0 0.0
      %1577 = vmatprep.subr.mxu0 0.0
      %1578 = vmatpush1.msra.mxu0 0.0
      %1579 = vmatprep.subr.mxu0 0.0
      %1580 = vmatpush1.msra.mxu0 0.0
      %1581 = vmatprep.subr.mxu0 0.0
      %1582 = vmatpush1.msra.mxu0 0.0
      %1583 = vmatprep.subr.mxu0 0.0
      %1584 = vmatpush1.msra.mxu0 0.0
      %1585 = vmatprep.subr.mxu0 0.0
      %1586 = vmatpush1.msra.mxu0 0.0
      %1587 = vmatprep.subr.mxu0 0.0
      %1588 = vmatpush1.msra.mxu0 0.0
      %1589 = vmatprep.subr.mxu0 0.0
      %1590 = vmatpush1.msra.mxu0 0.0
      %1591 = vmatprep.subr.mxu0 0.0
      %1592 = vmatpush1.msra.mxu0 0.0
      %1593 = vmatprep.subr.mxu0 0.0
      %1594 = vmatpush1.msra.mxu0 0.0
      %1595 = vmatprep.subr.mxu0 0.0
      %1596 = vmatpush1.msra.mxu0 0.0
      %1597 = vmatprep.subr.mxu0 0.0
      %1598 = vmatpush1.msra.mxu0 0.0
      %1599 = vmatprep.subr.mxu0 0.0
      %1600 = vmatpush1.msra.mxu0 0.0
      %1601 = vmatprep.subr.mxu0 0.0
      %1602 = vmatpush1.msra.mxu0 0.0
      %1603 = vmatprep.subr.mxu0 0.0
      %1604 = vmatpush1.msra.mxu0 0.0
      %1605 = vmatprep.subr.mxu0 0.0
      %1606 = vmatpush1.msra.mxu0 0.0
      %1607 = vmatprep.subr.mxu0 0.0
      %1608 = vmatpush1.msra.mxu0 0.0
      %1609 = vmatprep.subr.mxu0 0.0
      %1610 = vmatpush1.msra.mxu0 0.0
      %1611 = vmatprep.subr.mxu0 0.0
      %1612 = vmatpush1.msra.mxu0 0.0
      %1613 = vmatprep.subr.mxu0 0.0
      %1614 = vmatpush1.msra.mxu0 0.0
      %1615 = vmatprep.subr.mxu0 0.0
      %1616 = vmatpush1.msra.mxu0 0.0
      %1617 = vmatprep.subr.mxu0 0.0
      %1618 = vmatpush1.msra.mxu0 0.0
      %1619 = vmatprep.subr.mxu0 0.0
      %1620 = vmatpush1.msra.mxu0 0.0
      %1621 = vmatprep.subr.mxu0 0.0
      %1622 = vmatpush1.msra.mxu0 0.0
      %1623 = vmatprep.subr.mxu0 0.0
      %1624 = vmatpush1.msra.mxu0 0.0
      %1625 = vmatprep.subr.mxu0 0.0
      %1626 = vmatpush1.msra.mxu0 0.0
      %1627 = vmatprep.subr.mxu0 0.0
      %1628 = vmatpush1.msra.mxu0 0.0
      %1629 = vmatprep.subr.mxu0 0.0
      %1630 = vmatpush1.msra.mxu0 0.0
      %1631 = vmatprep.subr.mxu0 0.0
      %1632 = vmatpush1.msra.mxu0 0.0
      %1633 = vmatprep.subr.mxu0 0.0
      %1634 = vmatpush1.msra.mxu0 0.0
      %1635 = vmatprep.mubr.f32.mxu0 0.0
      %1636 = vmatmul.mubr.f32.gmra.mrb[0].mxu0 %v1569
      %v1637 = vpop.f32.mrb[0].mxu0
      %v1638 = vadd.f32 0.0, %v1637
      %v1639 = vpop.f32.mrb[0].mxu0
      %1640 = vdwg.mxu0
      %1641 = vrot.lane.b32.xlu0 %v1051, 112
      %v1642 = vpop.permute.xlu0 %1641
      %v1645 = vsel %vm1129, %v1487, 0
      %1647 = vmatprep.subr.mxu0 0.0
      %1648 = vmatpush1.msra.mxu0 %v1642
      %1649 = vmatprep.subr.mxu0 0.0
      %1650 = vmatpush1.msra.mxu0 0.0
      %1651 = vmatprep.subr.mxu0 0.0
      %1652 = vmatpush1.msra.mxu0 0.0
      %1653 = vmatprep.subr.mxu0 0.0
      %1654 = vmatpush1.msra.mxu0 0.0
      %1655 = vmatprep.subr.mxu0 0.0
      %1656 = vmatpush1.msra.mxu0 0.0
      %1657 = vmatprep.subr.mxu0 0.0
      %1658 = vmatpush1.msra.mxu0 0.0
      %1659 = vmatprep.subr.mxu0 0.0
      %1660 = vmatpush1.msra.mxu0 0.0
      %1661 = vmatprep.subr.mxu0 0.0
      %1662 = vmatpush1.msra.mxu0 0.0
      %1663 = vmatprep.subr.mxu0 0.0
      %1664 = vmatpush1.msra.mxu0 0.0
      %1665 = vmatprep.subr.mxu0 0.0
      %1666 = vmatpush1.msra.mxu0 0.0
      %1667 = vmatprep.subr.mxu0 0.0
      %1668 = vmatpush1.msra.mxu0 0.0
      %1669 = vmatprep.subr.mxu0 0.0
      %1670 = vmatpush1.msra.mxu0 0.0
      %1671 = vmatprep.subr.mxu0 0.0
      %1672 = vmatpush1.msra.mxu0 0.0
      %1673 = vmatprep.subr.mxu0 0.0
      %1674 = vmatpush1.msra.mxu0 0.0
      %1675 = vmatprep.subr.mxu0 0.0
      %1676 = vmatpush1.msra.mxu0 0.0
      %1677 = vmatprep.subr.mxu0 0.0
      %1678 = vmatpush1.msra.mxu0 0.0
      %1679 = vmatprep.subr.mxu0 0.0
      %1680 = vmatpush1.msra.mxu0 0.0
      %1681 = vmatprep.subr.mxu0 0.0
      %1682 = vmatpush1.msra.mxu0 0.0
      %1683 = vmatprep.subr.mxu0 0.0
      %1684 = vmatpush1.msra.mxu0 0.0
      %1685 = vmatprep.subr.mxu0 0.0
      %1686 = vmatpush1.msra.mxu0 0.0
      %1687 = vmatprep.subr.mxu0 0.0
      %1688 = vmatpush1.msra.mxu0 0.0
      %1689 = vmatprep.subr.mxu0 0.0
      %1690 = vmatpush1.msra.mxu0 0.0
      %1691 = vmatprep.subr.mxu0 0.0
      %1692 = vmatpush1.msra.mxu0 0.0
      %1693 = vmatprep.subr.mxu0 0.0
      %1694 = vmatpush1.msra.mxu0 0.0
      %1695 = vmatprep.subr.mxu0 0.0
      %1696 = vmatpush1.msra.mxu0 0.0
      %1697 = vmatprep.subr.mxu0 0.0
      %1698 = vmatpush1.msra.mxu0 0.0
      %1699 = vmatprep.subr.mxu0 0.0
      %1700 = vmatpush1.msra.mxu0 0.0
      %1701 = vmatprep.subr.mxu0 0.0
      %1702 = vmatpush1.msra.mxu0 0.0
      %1703 = vmatprep.subr.mxu0 0.0
      %1704 = vmatpush1.msra.mxu0 0.0
      %1705 = vmatprep.subr.mxu0 0.0
      %1706 = vmatpush1.msra.mxu0 0.0
      %1707 = vmatprep.subr.mxu0 0.0
      %1708 = vmatpush1.msra.mxu0 0.0
      %1709 = vmatprep.subr.mxu0 0.0
      %1710 = vmatpush1.msra.mxu0 0.0
      %1711 = vmatprep.mubr.f32.mxu0 0.0
      %1712 = vmatmul.mubr.f32.gmra.mrb[0].mxu0 %v1645
      %v1713 = vpop.f32.mrb[0].mxu0
      %v1714 = vadd.f32 0.0, %v1713
      %v1715 = vpop.f32.mrb[0].mxu0
      %1716 = vdwg.mxu0
      %1717 = vrot.lane.b32.xlu0 %v1121, 112
      %v1718 = vpop.permute.xlu0 %1717
      %v1721 = vsel %vm1129, %v1488, 0
      %1723 = vmatprep.subr.mxu0 0.0
      %1724 = vmatpush1.msra.mxu0 %v1718
      %1725 = vmatprep.subr.mxu0 0.0
      %1726 = vmatpush1.msra.mxu0 0.0
      %1727 = vmatprep.subr.mxu0 0.0
      %1728 = vmatpush1.msra.mxu0 0.0
      %1729 = vmatprep.subr.mxu0 0.0
      %1730 = vmatpush1.msra.mxu0 0.0
      %1731 = vmatprep.subr.mxu0 0.0
      %1732 = vmatpush1.msra.mxu0 0.0
      %1733 = vmatprep.subr.mxu0 0.0
      %1734 = vmatpush1.msra.mxu0 0.0
      %1735 = vmatprep.subr.mxu0 0.0
      %1736 = vmatpush1.msra.mxu0 0.0
      %1737 = vmatprep.subr.mxu0 0.0
      %1738 = vmatpush1.msra.mxu0 0.0
      %1739 = vmatprep.subr.mxu0 0.0
      %1740 = vmatpush1.msra.mxu0 0.0
      %1741 = vmatprep.subr.mxu0 0.0
      %1742 = vmatpush1.msra.mxu0 0.0
      %1743 = vmatprep.subr.mxu0 0.0
      %1744 = vmatpush1.msra.mxu0 0.0
      %1745 = vmatprep.subr.mxu0 0.0
      %1746 = vmatpush1.msra.mxu0 0.0
      %1747 = vmatprep.subr.mxu0 0.0
      %1748 = vmatpush1.msra.mxu0 0.0
      %1749 = vmatprep.subr.mxu0 0.0
      %1750 = vmatpush1.msra.mxu0 0.0
      %1751 = vmatprep.subr.mxu0 0.0
      %1752 = vmatpush1.msra.mxu0 0.0
      %1753 = vmatprep.subr.mxu0 0.0
      %1754 = vmatpush1.msra.mxu0 0.0
      %1755 = vmatprep.subr.mxu0 0.0
      %1756 = vmatpush1.msra.mxu0 0.0
      %1757 = vmatprep.subr.mxu0 0.0
      %1758 = vmatpush1.msra.mxu0 0.0
      %1759 = vmatprep.subr.mxu0 0.0
      %1760 = vmatpush1.msra.mxu0 0.0
      %1761 = vmatprep.subr.mxu0 0.0
      %1762 = vmatpush1.msra.mxu0 0.0
      %1763 = vmatprep.subr.mxu0 0.0
      %1764 = vmatpush1.msra.mxu0 0.0
      %1765 = vmatprep.subr.mxu0 0.0
      %1766 = vmatpush1.msra.mxu0 0.0
      %1767 = vmatprep.subr.mxu0 0.0
      %1768 = vmatpush1.msra.mxu0 0.0
      %1769 = vmatprep.subr.mxu0 0.0
      %1770 = vmatpush1.msra.mxu0 0.0
      %1771 = vmatprep.subr.mxu0 0.0
      %1772 = vmatpush1.msra.mxu0 0.0
      %1773 = vmatprep.subr.mxu0 0.0
      %1774 = vmatpush1.msra.mxu0 0.0
      %1775 = vmatprep.subr.mxu0 0.0
      %1776 = vmatpush1.msra.mxu0 0.0
      %1777 = vmatprep.subr.mxu0 0.0
      %1778 = vmatpush1.msra.mxu0 0.0
      %1779 = vmatprep.subr.mxu0 0.0
      %1780 = vmatpush1.msra.mxu0 0.0
      %1781 = vmatprep.subr.mxu0 0.0
      %1782 = vmatpush1.msra.mxu0 0.0
      %1783 = vmatprep.subr.mxu0 0.0
      %1784 = vmatpush1.msra.mxu0 0.0
      %1785 = vmatprep.subr.mxu0 0.0
      %1786 = vmatpush1.msra.mxu0 0.0
      %1787 = vmatprep.mubr.f32.mxu0 0.0
      %1788 = vmatmul.mubr.f32.gmra.mrb[0].mxu0 %v1721
      %v1789 = vpop.f32.mrb[0].mxu0
      %v1790 = vadd.f32 0.0, %v1789
      %v1791 = vpop.f32.mrb[0].mxu0
      %1792 = vdwg.mxu0
      %v1793 = vld [vmem:[%s8] sm:$0xff]
      %v1794 = vld [vmem:[%s8 + $0x8] sm:$0xff]
      %v1795 = vld [vmem:[%s8 + $0x10] sm:$0xff]
      %v1796 = vld [vmem:[%s8 + $0x18] sm:$0xff]
      %v1798 = vsel %vm1129, %v1562, 0
      %1800 = vmatprep.subr.mxu0 0.0
      %1801 = vmatpush1.msra.mxu0 %v1793
      %1802 = vmatprep.subr.mxu0 0.0
      %1803 = vmatpush1.msra.mxu0 0.0
      %1804 = vmatprep.subr.mxu0 0.0
      %1805 = vmatpush1.msra.mxu0 0.0
      %1806 = vmatprep.subr.mxu0 0.0
      %1807 = vmatpush1.msra.mxu0 0.0
      %1808 = vmatprep.subr.mxu0 0.0
      %1809 = vmatpush1.msra.mxu0 0.0
      %1810 = vmatprep.subr.mxu0 0.0
      %1811 = vmatpush1.msra.mxu0 0.0
      %1812 = vmatprep.subr.mxu0 0.0
      %1813 = vmatpush1.msra.mxu0 0.0
      %1814 = vmatprep.subr.mxu0 0.0
      %1815 = vmatpush1.msra.mxu0 0.0
      %1816 = vmatprep.subr.mxu0 0.0
      %1817 = vmatpush1.msra.mxu0 0.0
      %1818 = vmatprep.subr.mxu0 0.0
      %1819 = vmatpush1.msra.mxu0 0.0
      %1820 = vmatprep.subr.mxu0 0.0
      %1821 = vmatpush1.msra.mxu0 0.0
      %1822 = vmatprep.subr.mxu0 0.0
      %1823 = vmatpush1.msra.mxu0 0.0
      %1824 = vmatprep.subr.mxu0 0.0
      %1825 = vmatpush1.msra.mxu0 0.0
      %1826 = vmatprep.subr.mxu0 0.0
      %1827 = vmatpush1.msra.mxu0 0.0
      %1828 = vmatprep.subr.mxu0 0.0
      %1829 = vmatpush1.msra.mxu0 0.0
      %1830 = vmatprep.subr.mxu0 0.0
      %1831 = vmatpush1.msra.mxu0 0.0
      %1832 = vmatprep.subr.mxu0 0.0
      %1833 = vmatpush1.msra.mxu0 0.0
      %1834 = vmatprep.subr.mxu0 0.0
      %1835 = vmatpush1.msra.mxu0 0.0
      %1836 = vmatprep.subr.mxu0 0.0
      %1837 = vmatpush1.msra.mxu0 0.0
      %1838 = vmatprep.subr.mxu0 0.0
      %1839 = vmatpush1.msra.mxu0 0.0
      %1840 = vmatprep.subr.mxu0 0.0
      %1841 = vmatpush1.msra.mxu0 0.0
      %1842 = vmatprep.subr.mxu0 0.0
      %1843 = vmatpush1.msra.mxu0 0.0
      %1844 = vmatprep.subr.mxu0 0.0
      %1845 = vmatpush1.msra.mxu0 0.0
      %1846 = vmatprep.subr.mxu0 0.0
      %1847 = vmatpush1.msra.mxu0 0.0
      %1848 = vmatprep.subr.mxu0 0.0
      %1849 = vmatpush1.msra.mxu0 0.0
      %1850 = vmatprep.subr.mxu0 0.0
      %1851 = vmatpush1.msra.mxu0 0.0
      %1852 = vmatprep.subr.mxu0 0.0
      %1853 = vmatpush1.msra.mxu0 0.0
      %1854 = vmatprep.subr.mxu0 0.0
      %1855 = vmatpush1.msra.mxu0 0.0
      %1856 = vmatprep.subr.mxu0 0.0
      %1857 = vmatpush1.msra.mxu0 0.0
      %1858 = vmatprep.subr.mxu0 0.0
      %1859 = vmatpush1.msra.mxu0 0.0
      %1860 = vmatprep.subr.mxu0 0.0
      %1861 = vmatpush1.msra.mxu0 0.0
      %1862 = vmatprep.subr.mxu0 0.0
      %1863 = vmatpush1.msra.mxu0 0.0
      %1864 = vmatprep.mubr.f32.mxu0 0.0
      %1865 = vmatmul.mubr.f32.gmra.mrb[0].mxu0 %v1798
      %v1866 = vpop.f32.mrb[0].mxu0
      %v1867 = vadd.f32 0.0, %v1866
      %v1868 = vpop.f32.mrb[0].mxu0
      %1869 = vdwg.mxu0
      %v1871 = vsel %vm1129, %v1638, 0
      %1873 = vmatprep.subr.mxu0 0.0
      %1874 = vmatpush1.msra.mxu0 %v1794
      %1875 = vmatprep.subr.mxu0 0.0
      %1876 = vmatpush1.msra.mxu0 0.0
      %1877 = vmatprep.subr.mxu0 0.0
      %1878 = vmatpush1.msra.mxu0 0.0
      %1879 = vmatprep.subr.mxu0 0.0
      %1880 = vmatpush1.msra.mxu0 0.0
      %1881 = vmatprep.subr.mxu0 0.0
      %1882 = vmatpush1.msra.mxu0 0.0
      %1883 = vmatprep.subr.mxu0 0.0
      %1884 = vmatpush1.msra.mxu0 0.0
      %1885 = vmatprep.subr.mxu0 0.0
      %1886 = vmatpush1.msra.mxu0 0.0
      %1887 = vmatprep.subr.mxu0 0.0
      %1888 = vmatpush1.msra.mxu0 0.0
      %1889 = vmatprep.subr.mxu0 0.0
      %1890 = vmatpush1.msra.mxu0 0.0
      %1891 = vmatprep.subr.mxu0 0.0
      %1892 = vmatpush1.msra.mxu0 0.0
      %1893 = vmatprep.subr.mxu0 0.0
      %1894 = vmatpush1.msra.mxu0 0.0
      %1895 = vmatprep.subr.mxu0 0.0
      %1896 = vmatpush1.msra.mxu0 0.0
      %1897 = vmatprep.subr.mxu0 0.0
      %1898 = vmatpush1.msra.mxu0 0.0
      %1899 = vmatprep.subr.mxu0 0.0
      %1900 = vmatpush1.msra.mxu0 0.0
      %1901 = vmatprep.subr.mxu0 0.0
      %1902 = vmatpush1.msra.mxu0 0.0
      %1903 = vmatprep.subr.mxu0 0.0
      %1904 = vmatpush1.msra.mxu0 0.0
      %1905 = vmatprep.subr.mxu0 0.0
      %1906 = vmatpush1.msra.mxu0 0.0
      %1907 = vmatprep.subr.mxu0 0.0
      %1908 = vmatpush1.msra.mxu0 0.0
      %1909 = vmatprep.subr.mxu0 0.0
      %1910 = vmatpush1.msra.mxu0 0.0
      %1911 = vmatprep.subr.mxu0 0.0
      %1912 = vmatpush1.msra.mxu0 0.0
      %1913 = vmatprep.subr.mxu0 0.0
      %1914 = vmatpush1.msra.mxu0 0.0
      %1915 = vmatprep.subr.mxu0 0.0
      %1916 = vmatpush1.msra.mxu0 0.0
      %1917 = vmatprep.subr.mxu0 0.0
      %1918 = vmatpush1.msra.mxu0 0.0
      %1919 = vmatprep.subr.mxu0 0.0
      %1920 = vmatpush1.msra.mxu0 0.0
      %1921 = vmatprep.subr.mxu0 0.0
      %1922 = vmatpush1.msra.mxu0 0.0
      %1923 = vmatprep.subr.mxu0 0.0
      %1924 = vmatpush1.msra.mxu0 0.0
      %1925 = vmatprep.subr.mxu0 0.0
      %1926 = vmatpush1.msra.mxu0 0.0
      %1927 = vmatprep.subr.mxu0 0.0
      %1928 = vmatpush1.msra.mxu0 0.0
      %1929 = vmatprep.subr.mxu0 0.0
      %1930 = vmatpush1.msra.mxu0 0.0
      %1931 = vmatprep.subr.mxu0 0.0
      %1932 = vmatpush1.msra.mxu0 0.0
      %1933 = vmatprep.subr.mxu0 0.0
      %1934 = vmatpush1.msra.mxu0 0.0
      %1935 = vmatprep.subr.mxu0 0.0
      %1936 = vmatpush1.msra.mxu0 0.0
      %1937 = vmatprep.mubr.f32.mxu0 0.0
      %1938 = vmatmul.mubr.f32.gmra.mrb[0].mxu0 %v1871
      %v1939 = vpop.f32.mrb[0].mxu0
      %v1940 = vadd.f32 0.0, %v1939
      %v1941 = vpop.f32.mrb[0].mxu0
      %1942 = vdwg.mxu0
      %v1944 = vsel %vm1129, %v1714, 0
      %1946 = vmatprep.subr.mxu0 0.0
      %1947 = vmatpush1.msra.mxu0 %v1795
      %1948 = vmatprep.subr.mxu0 0.0
      %1949 = vmatpush1.msra.mxu0 0.0
      %1950 = vmatprep.subr.mxu0 0.0
      %1951 = vmatpush1.msra.mxu0 0.0
      %1952 = vmatprep.subr.mxu0 0.0
      %1953 = vmatpush1.msra.mxu0 0.0
      %1954 = vmatprep.subr.mxu0 0.0
      %1955 = vmatpush1.msra.mxu0 0.0
      %1956 = vmatprep.subr.mxu0 0.0
      %1957 = vmatpush1.msra.mxu0 0.0
      %1958 = vmatprep.subr.mxu0 0.0
      %1959 = vmatpush1.msra.mxu0 0.0
      %1960 = vmatprep.subr.mxu0 0.0
      %1961 = vmatpush1.msra.mxu0 0.0
      %1962 = vmatprep.subr.mxu0 0.0
      %1963 = vmatpush1.msra.mxu0 0.0
      %1964 = vmatprep.subr.mxu0 0.0
      %1965 = vmatpush1.msra.mxu0 0.0
      %1966 = vmatprep.subr.mxu0 0.0
      %1967 = vmatpush1.msra.mxu0 0.0
      %1968 = vmatprep.subr.mxu0 0.0
      %1969 = vmatpush1.msra.mxu0 0.0
      %1970 = vmatprep.subr.mxu0 0.0
      %1971 = vmatpush1.msra.mxu0 0.0
      %1972 = vmatprep.subr.mxu0 0.0
      %1973 = vmatpush1.msra.mxu0 0.0
      %1974 = vmatprep.subr.mxu0 0.0
      %1975 = vmatpush1.msra.mxu0 0.0
      %1976 = vmatprep.subr.mxu0 0.0
      %1977 = vmatpush1.msra.mxu0 0.0
      %1978 = vmatprep.subr.mxu0 0.0
      %1979 = vmatpush1.msra.mxu0 0.0
      %1980 = vmatprep.subr.mxu0 0.0
      %1981 = vmatpush1.msra.mxu0 0.0
      %1982 = vmatprep.subr.mxu0 0.0
      %1983 = vmatpush1.msra.mxu0 0.0
      %1984 = vmatprep.subr.mxu0 0.0
      %1985 = vmatpush1.msra.mxu0 0.0
      %1986 = vmatprep.subr.mxu0 0.0
      %1987 = vmatpush1.msra.mxu0 0.0
      %1988 = vmatprep.subr.mxu0 0.0
      %1989 = vmatpush1.msra.mxu0 0.0
      %1990 = vmatprep.subr.mxu0 0.0
      %1991 = vmatpush1.msra.mxu0 0.0
      %1992 = vmatprep.subr.mxu0 0.0
      %1993 = vmatpush1.msra.mxu0 0.0
      %1994 = vmatprep.subr.mxu0 0.0
      %1995 = vmatpush1.msra.mxu0 0.0
      %1996 = vmatprep.subr.mxu0 0.0
      %1997 = vmatpush1.msra.mxu0 0.0
      %1998 = vmatprep.subr.mxu0 0.0
      %1999 = vmatpush1.msra.mxu0 0.0
      %2000 = vmatprep.subr.mxu0 0.0
      %2001 = vmatpush1.msra.mxu0 0.0
      %2002 = vmatprep.subr.mxu0 0.0
      %2003 = vmatpush1.msra.mxu0 0.0
      %2004 = vmatprep.subr.mxu0 0.0
      %2005 = vmatpush1.msra.mxu0 0.0
      %2006 = vmatprep.subr.mxu0 0.0
      %2007 = vmatpush1.msra.mxu0 0.0
      %2008 = vmatprep.subr.mxu0 0.0
      %2009 = vmatpush1.msra.mxu0 0.0
      %2010 = vmatprep.mubr.f32.mxu0 0.0
      %2011 = vmatmul.mubr.f32.gmra.mrb[0].mxu0 %v1944
      %v2012 = vpop.f32.mrb[0].mxu0
      %v2013 = vadd.f32 0.0, %v2012
      %v2014 = vpop.f32.mrb[0].mxu0
      %2015 = vdwg.mxu0
      %v2017 = vsel %vm1129, %v1790, 0
      %2019 = vmatprep.subr.mxu0 0.0
      %2020 = vmatpush1.msra.mxu0 %v1796
      %2021 = vmatprep.subr.mxu0 0.0
      %2022 = vmatpush1.msra.mxu0 0.0
      %2023 = vmatprep.subr.mxu0 0.0
      %2024 = vmatpush1.msra.mxu0 0.0
      %2025 = vmatprep.subr.mxu0 0.0
      %2026 = vmatpush1.msra.mxu0 0.0
      %2027 = vmatprep.subr.mxu0 0.0
      %2028 = vmatpush1.msra.mxu0 0.0
      %2029 = vmatprep.subr.mxu0 0.0
      %2030 = vmatpush1.msra.mxu0 0.0
      %2031 = vmatprep.subr.mxu0 0.0
      %2032 = vmatpush1.msra.mxu0 0.0
      %2033 = vmatprep.subr.mxu0 0.0
      %2034 = vmatpush1.msra.mxu0 0.0
      %2035 = vmatprep.subr.mxu0 0.0
      %2036 = vmatpush1.msra.mxu0 0.0
      %2037 = vmatprep.subr.mxu0 0.0
      %2038 = vmatpush1.msra.mxu0 0.0
      %2039 = vmatprep.subr.mxu0 0.0
      %2040 = vmatpush1.msra.mxu0 0.0
      %2041 = vmatprep.subr.mxu0 0.0
      %2042 = vmatpush1.msra.mxu0 0.0
      %2043 = vmatprep.subr.mxu0 0.0
      %2044 = vmatpush1.msra.mxu0 0.0
      %2045 = vmatprep.subr.mxu0 0.0
      %2046 = vmatpush1.msra.mxu0 0.0
      %2047 = vmatprep.subr.mxu0 0.0
      %2048 = vmatpush1.msra.mxu0 0.0
      %2049 = vmatprep.subr.mxu0 0.0
      %2050 = vmatpush1.msra.mxu0 0.0
      %2051 = vmatprep.subr.mxu0 0.0
      %2052 = vmatpush1.msra.mxu0 0.0
      %2053 = vmatprep.subr.mxu0 0.0
      %2054 = vmatpush1.msra.mxu0 0.0
      %2055 = vmatprep.subr.mxu0 0.0
      %2056 = vmatpush1.msra.mxu0 0.0
      %2057 = vmatprep.subr.mxu0 0.0
      %2058 = vmatpush1.msra.mxu0 0.0
      %2059 = vmatprep.subr.mxu0 0.0
      %2060 = vmatpush1.msra.mxu0 0.0
      %2061 = vmatprep.subr.mxu0 0.0
      %2062 = vmatpush1.msra.mxu0 0.0
      %2063 = vmatprep.subr.mxu0 0.0
      %2064 = vmatpush1.msra.mxu0 0.0
      %2065 = vmatprep.subr.mxu0 0.0
      %2066 = vmatpush1.msra.mxu0 0.0
      %2067 = vmatprep.subr.mxu0 0.0
      %2068 = vmatpush1.msra.mxu0 0.0
      %2069 = vmatprep.subr.mxu0 0.0
      %2070 = vmatpush1.msra.mxu0 0.0
      %2071 = vmatprep.subr.mxu0 0.0
      %2072 = vmatpush1.msra.mxu0 0.0
      %2073 = vmatprep.subr.mxu0 0.0
      %2074 = vmatpush1.msra.mxu0 0.0
      %2075 = vmatprep.subr.mxu0 0.0
      %2076 = vmatpush1.msra.mxu0 0.0
      %2077 = vmatprep.subr.mxu0 0.0
      %2078 = vmatpush1.msra.mxu0 0.0
      %2079 = vmatprep.subr.mxu0 0.0
      %2080 = vmatpush1.msra.mxu0 0.0
      %2081 = vmatprep.subr.mxu0 0.0
      %2082 = vmatpush1.msra.mxu0 0.0
      %2083 = vmatprep.mubr.f32.mxu0 0.0
      %2084 = vmatmul.mubr.f32.gmra.mrb[0].mxu0 %v2017
      %v2085 = vpop.f32.mrb[0].mxu0
      %v2086 = vadd.f32 0.0, %v2085
      %v2087 = vpop.f32.mrb[0].mxu0
      %2088 = vdwg.mxu0
      %v2089 = vsel %vm766, %v1867, 0.0
      %v2090 = vsel %vm766, %v1940, 0.0
      %v2091 = vadd.f32 %v2089, %v2090
      %v2092 = vsel %vm766, %v2013, 0.0
      %v2093 = vadd.f32 %v2091, %v2092
      %v2094 = vsel %vm766, %v2086, 0.0
      %v2095 = vadd.f32 %v2093, %v2094
      %v2096 = vld [vmem:[%s9] sm:$0x1]
      %v2098 = vlaneseq
      %v2099 = vshrl.u32 %v2098, 7
      %v2100 = vsub.s32 0, %v2099
      %v2101 = vrot.slane %v2096, %v2100
      %v2103 = vadd.f32 %v2095, %v2101
      %v2104 = vadd.f32 %v764, %v2103
      %v2105 = vsel %vm766, %v2104, 0.0
      %2106 = vadd.xlane.f32.xlu0 %v2105
      %v2107 = vpop.xlane.xlu0 %2106
      %v2108 = vmul.f32 %v2107, %v770
      %v2109 = vsub.f32 %v2104, %v2108
      %v2110 = vmul.f32 %v2109, %v2109
      %v2111 = vsel %vm766, %v2110, 0.0
      %2112 = vadd.xlane.f32.xlu0 %v2111
      %v2113 = vpop.xlane.xlu0 %2112
      %v2114 = vmul.f32 %v2113, %v770
      %v2115 = vadd.f32 %v2114, 1e-05
      %v2116 = vrsqrt.pop %v2115
      %v2117 = vmul.f32 %v2109, %v2116
      %v2118 = vld [vmem:[%s10] sm:$0x1]
      %v2120 = vlaneseq
      %v2121 = vshrl.u32 %v2120, 7
      %v2122 = vsub.s32 0, %v2121
      %v2123 = vrot.slane %v2118, %v2122
      %v2125 = vmul.f32 %v2117, %v2123
      %v2126 = vld [vmem:[%s11] sm:$0x1]
      %v2128 = vlaneseq
      %v2129 = vshrl.u32 %v2128, 7
      %v2130 = vsub.s32 0, %v2129
      %v2131 = vrot.slane %v2126, %v2130
      %v2133 = vadd.f32 %v2125, %v2131
      %v2134 = vld [vmem:[%s12] sm:$0xff]
      %v2135 = vld [vmem:[%s12 + $0x8] sm:$0xff]
      %v2136 = vld [vmem:[%s12 + $0x10] sm:$0xff]
      %v2137 = vld [vmem:[%s12 + $0x18] sm:$0xff]
      %v2138 = vld [vmem:[%s12 + $0x20] sm:$0xff]
      %v2139 = vld [vmem:[%s12 + $0x28] sm:$0xff]
      %v2140 = vld [vmem:[%s12 + $0x30] sm:$0xff]
      %v2141 = vld [vmem:[%s12 + $0x38] sm:$0xff]
      %v2142 = vld [vmem:[%s12 + $0x40] sm:$0xff]
      %v2143 = vld [vmem:[%s12 + $0x48] sm:$0xff]
      %v2144 = vld [vmem:[%s12 + $0x50] sm:$0xff]
      %v2145 = vld [vmem:[%s12 + $0x58] sm:$0xff]
      %v2146 = vld [vmem:[%s12 + $0x60] sm:$0xff]
      %v2147 = vld [vmem:[%s12 + $0x68] sm:$0xff]
      %v2148 = vld [vmem:[%s12 + $0x70] sm:$0xff]
      %v2149 = vld [vmem:[%s12 + $0x78] sm:$0xff]
      %v2150 = vld [vmem:[%s13] sm:$0x1]
      %v2151 = vld [vmem:[%s13 + $0x1] sm:$0x1]
      %v2152 = vld [vmem:[%s13 + $0x2] sm:$0x1]
      %v2153 = vld [vmem:[%s13 + $0x3] sm:$0x1]
      %v2158 = vlaneseq
      %v2159 = vshrl.u32 %v2158, 7
      %v2160 = vsub.s32 0, %v2159
      %v2161 = vrot.slane %v2150, %v2160
      %v2162 = vlaneseq
      %v2163 = vshrl.u32 %v2162, 7
      %v2164 = vsub.s32 0, %v2163
      %v2165 = vrot.slane %v2151, %v2164
      %v2166 = vlaneseq
      %v2167 = vshrl.u32 %v2166, 7
      %v2168 = vsub.s32 0, %v2167
      %v2169 = vrot.slane %v2152, %v2168
      %v2170 = vlaneseq
      %v2171 = vshrl.u32 %v2170, 7
      %v2172 = vsub.s32 0, %v2171
      %v2173 = vrot.slane %v2153, %v2172
      %v2179 = vsel %vm766, %v2133, 0
      %2181 = vmatprep.subr.mxu0 0.0
      %2182 = vmatpush1.msra.mxu0 %v2134
      %2183 = vmatprep.subr.mxu0 0.0
      %2184 = vmatpush1.msra.mxu0 %v2135
      %2185 = vmatprep.subr.mxu0 0.0
      %2186 = vmatpush1.msra.mxu0 %v2136
      %2187 = vmatprep.subr.mxu0 0.0
      %2188 = vmatpush1.msra.mxu0 %v2137
      %2189 = vmatprep.subr.mxu0 0.0
      %2190 = vmatpush1.msra.mxu0 0.0
      %2191 = vmatprep.subr.mxu0 0.0
      %2192 = vmatpush1.msra.mxu0 0.0
      %2193 = vmatprep.subr.mxu0 0.0
      %2194 = vmatpush1.msra.mxu0 0.0
      %2195 = vmatprep.subr.mxu0 0.0
      %2196 = vmatpush1.msra.mxu0 0.0
      %2197 = vmatprep.subr.mxu0 0.0
      %2198 = vmatpush1.msra.mxu0 0.0
      %2199 = vmatprep.subr.mxu0 0.0
      %2200 = vmatpush1.msra.mxu0 0.0
      %2201 = vmatprep.subr.mxu0 0.0
      %2202 = vmatpush1.msra.mxu0 0.0
      %2203 = vmatprep.subr.mxu0 0.0
      %2204 = vmatpush1.msra.mxu0 0.0
      %2205 = vmatprep.subr.mxu0 0.0
      %2206 = vmatpush1.msra.mxu0 0.0
      %2207 = vmatprep.subr.mxu0 0.0
      %2208 = vmatpush1.msra.mxu0 0.0
      %2209 = vmatprep.subr.mxu0 0.0
      %2210 = vmatpush1.msra.mxu0 0.0
      %2211 = vmatprep.subr.mxu0 0.0
      %2212 = vmatpush1.msra.mxu0 0.0
      %2213 = vmatprep.subr.mxu0 0.0
      %2214 = vmatpush1.msra.mxu0 0.0
      %2215 = vmatprep.subr.mxu0 0.0
      %2216 = vmatpush1.msra.mxu0 0.0
      %2217 = vmatprep.subr.mxu0 0.0
      %2218 = vmatpush1.msra.mxu0 0.0
      %2219 = vmatprep.subr.mxu0 0.0
      %2220 = vmatpush1.msra.mxu0 0.0
      %2221 = vmatprep.subr.mxu0 0.0
      %2222 = vmatpush1.msra.mxu0 0.0
      %2223 = vmatprep.subr.mxu0 0.0
      %2224 = vmatpush1.msra.mxu0 0.0
      %2225 = vmatprep.subr.mxu0 0.0
      %2226 = vmatpush1.msra.mxu0 0.0
      %2227 = vmatprep.subr.mxu0 0.0
      %2228 = vmatpush1.msra.mxu0 0.0
      %2229 = vmatprep.subr.mxu0 0.0
      %2230 = vmatpush1.msra.mxu0 0.0
      %2231 = vmatprep.subr.mxu0 0.0
      %2232 = vmatpush1.msra.mxu0 0.0
      %2233 = vmatprep.subr.mxu0 0.0
      %2234 = vmatpush1.msra.mxu0 0.0
      %2235 = vmatprep.subr.mxu0 0.0
      %2236 = vmatpush1.msra.mxu0 0.0
      %2237 = vmatprep.subr.mxu0 0.0
      %2238 = vmatpush1.msra.mxu0 0.0
      %2239 = vmatprep.subr.mxu0 0.0
      %2240 = vmatpush1.msra.mxu0 0.0
      %2241 = vmatprep.subr.mxu0 0.0
      %2242 = vmatpush1.msra.mxu0 0.0
      %2243 = vmatprep.subr.mxu0 0.0
      %2244 = vmatpush1.msra.mxu0 0.0
      %2245 = vmatprep.mubr.f32.mxu0 0.0
      %2246 = vmatmul.mubr.f32.gmra.mrb[0].mxu0 %v2179
      %v2247 = vpop.f32.mrb[0].mxu0
      %v2248 = vadd.f32 %v2161, %v2247
      %v2249 = vpop.f32.mrb[0].mxu0
      %2250 = vdwg.mxu0
      %2251 = vmatprep.subr.mxu0 0.0
      %2252 = vmatpush1.msra.mxu0 %v2138
      %2253 = vmatprep.subr.mxu0 0.0
      %2254 = vmatpush1.msra.mxu0 %v2139
      %2255 = vmatprep.subr.mxu0 0.0
      %2256 = vmatpush1.msra.mxu0 %v2140
      %2257 = vmatprep.subr.mxu0 0.0
      %2258 = vmatpush1.msra.mxu0 %v2141
      %2259 = vmatprep.subr.mxu0 0.0
      %2260 = vmatpush1.msra.mxu0 0.0
      %2261 = vmatprep.subr.mxu0 0.0
      %2262 = vmatpush1.msra.mxu0 0.0
      %2263 = vmatprep.subr.mxu0 0.0
      %2264 = vmatpush1.msra.mxu0 0.0
      %2265 = vmatprep.subr.mxu0 0.0
      %2266 = vmatpush1.msra.mxu0 0.0
      %2267 = vmatprep.subr.mxu0 0.0
      %2268 = vmatpush1.msra.mxu0 0.0
      %2269 = vmatprep.subr.mxu0 0.0
      %2270 = vmatpush1.msra.mxu0 0.0
      %2271 = vmatprep.subr.mxu0 0.0
      %2272 = vmatpush1.msra.mxu0 0.0
      %2273 = vmatprep.subr.mxu0 0.0
      %2274 = vmatpush1.msra.mxu0 0.0
      %2275 = vmatprep.subr.mxu0 0.0
      %2276 = vmatpush1.msra.mxu0 0.0
      %2277 = vmatprep.subr.mxu0 0.0
      %2278 = vmatpush1.msra.mxu0 0.0
      %2279 = vmatprep.subr.mxu0 0.0
      %2280 = vmatpush1.msra.mxu0 0.0
      %2281 = vmatprep.subr.mxu0 0.0
      %2282 = vmatpush1.msra.mxu0 0.0
      %2283 = vmatprep.subr.mxu0 0.0
      %2284 = vmatpush1.msra.mxu0 0.0
      %2285 = vmatprep.subr.mxu0 0.0
      %2286 = vmatpush1.msra.mxu0 0.0
      %2287 = vmatprep.subr.mxu0 0.0
      %2288 = vmatpush1.msra.mxu0 0.0
      %2289 = vmatprep.subr.mxu0 0.0
      %2290 = vmatpush1.msra.mxu0 0.0
      %2291 = vmatprep.subr.mxu0 0.0
      %2292 = vmatpush1.msra.mxu0 0.0
      %2293 = vmatprep.subr.mxu0 0.0
      %2294 = vmatpush1.msra.mxu0 0.0
      %2295 = vmatprep.subr.mxu0 0.0
      %2296 = vmatpush1.msra.mxu0 0.0
      %2297 = vmatprep.subr.mxu0 0.0
      %2298 = vmatpush1.msra.mxu0 0.0
      %2299 = vmatprep.subr.mxu0 0.0
      %2300 = vmatpush1.msra.mxu0 0.0
      %2301 = vmatprep.subr.mxu0 0.0
      %2302 = vmatpush1.msra.mxu0 0.0
      %2303 = vmatprep.subr.mxu0 0.0
      %2304 = vmatpush1.msra.mxu0 0.0
      %2305 = vmatprep.subr.mxu0 0.0
      %2306 = vmatpush1.msra.mxu0 0.0
      %2307 = vmatprep.subr.mxu0 0.0
      %2308 = vmatpush1.msra.mxu0 0.0
      %2309 = vmatprep.subr.mxu0 0.0
      %2310 = vmatpush1.msra.mxu0 0.0
      %2311 = vmatprep.subr.mxu0 0.0
      %2312 = vmatpush1.msra.mxu0 0.0
      %2313 = vmatprep.subr.mxu0 0.0
      %2314 = vmatpush1.msra.mxu0 0.0
      %2315 = vmatprep.mubr.f32.mxu0 0.0
      %2316 = vmatmul.mubr.f32.gmra.mrb[0].mxu0 %v2179
      %v2317 = vpop.f32.mrb[0].mxu0
      %v2318 = vadd.f32 %v2165, %v2317
      %v2319 = vpop.f32.mrb[0].mxu0
      %2320 = vdwg.mxu0
      %2321 = vmatprep.subr.mxu0 0.0
      %2322 = vmatpush1.msra.mxu0 %v2142
      %2323 = vmatprep.subr.mxu0 0.0
      %2324 = vmatpush1.msra.mxu0 %v2143
      %2325 = vmatprep.subr.mxu0 0.0
      %2326 = vmatpush1.msra.mxu0 %v2144
      %2327 = vmatprep.subr.mxu0 0.0
      %2328 = vmatpush1.msra.mxu0 %v2145
      %2329 = vmatprep.subr.mxu0 0.0
      %2330 = vmatpush1.msra.mxu0 0.0
      %2331 = vmatprep.subr.mxu0 0.0
      %2332 = vmatpush1.msra.mxu0 0.0
      %2333 = vmatprep.subr.mxu0 0.0
      %2334 = vmatpush1.msra.mxu0 0.0
      %2335 = vmatprep.subr.mxu0 0.0
      %2336 = vmatpush1.msra.mxu0 0.0
      %2337 = vmatprep.subr.mxu0 0.0
      %2338 = vmatpush1.msra.mxu0 0.0
      %2339 = vmatprep.subr.mxu0 0.0
      %2340 = vmatpush1.msra.mxu0 0.0
      %2341 = vmatprep.subr.mxu0 0.0
      %2342 = vmatpush1.msra.mxu0 0.0
      %2343 = vmatprep.subr.mxu0 0.0
      %2344 = vmatpush1.msra.mxu0 0.0
      %2345 = vmatprep.subr.mxu0 0.0
      %2346 = vmatpush1.msra.mxu0 0.0
      %2347 = vmatprep.subr.mxu0 0.0
      %2348 = vmatpush1.msra.mxu0 0.0
      %2349 = vmatprep.subr.mxu0 0.0
      %2350 = vmatpush1.msra.mxu0 0.0
      %2351 = vmatprep.subr.mxu0 0.0
      %2352 = vmatpush1.msra.mxu0 0.0
      %2353 = vmatprep.subr.mxu0 0.0
      %2354 = vmatpush1.msra.mxu0 0.0
      %2355 = vmatprep.subr.mxu0 0.0
      %2356 = vmatpush1.msra.mxu0 0.0
      %2357 = vmatprep.subr.mxu0 0.0
      %2358 = vmatpush1.msra.mxu0 0.0
      %2359 = vmatprep.subr.mxu0 0.0
      %2360 = vmatpush1.msra.mxu0 0.0
      %2361 = vmatprep.subr.mxu0 0.0
      %2362 = vmatpush1.msra.mxu0 0.0
      %2363 = vmatprep.subr.mxu0 0.0
      %2364 = vmatpush1.msra.mxu0 0.0
      %2365 = vmatprep.subr.mxu0 0.0
      %2366 = vmatpush1.msra.mxu0 0.0
      %2367 = vmatprep.subr.mxu0 0.0
      %2368 = vmatpush1.msra.mxu0 0.0
      %2369 = vmatprep.subr.mxu0 0.0
      %2370 = vmatpush1.msra.mxu0 0.0
      %2371 = vmatprep.subr.mxu0 0.0
      %2372 = vmatpush1.msra.mxu0 0.0
      %2373 = vmatprep.subr.mxu0 0.0
      %2374 = vmatpush1.msra.mxu0 0.0
      %2375 = vmatprep.subr.mxu0 0.0
      %2376 = vmatpush1.msra.mxu0 0.0
      %2377 = vmatprep.subr.mxu0 0.0
      %2378 = vmatpush1.msra.mxu0 0.0
      %2379 = vmatprep.subr.mxu0 0.0
      %2380 = vmatpush1.msra.mxu0 0.0
      %2381 = vmatprep.subr.mxu0 0.0
      %2382 = vmatpush1.msra.mxu0 0.0
      %2383 = vmatprep.subr.mxu0 0.0
      %2384 = vmatpush1.msra.mxu0 0.0
      %2385 = vmatprep.mubr.f32.mxu0 0.0
      %2386 = vmatmul.mubr.f32.gmra.mrb[0].mxu0 %v2179
      %v2387 = vpop.f32.mrb[0].mxu0
      %v2388 = vadd.f32 %v2169, %v2387
      %v2389 = vpop.f32.mrb[0].mxu0
      %2390 = vdwg.mxu0
      %2391 = vmatprep.subr.mxu0 0.0
      %2392 = vmatpush1.msra.mxu0 %v2146
      %2393 = vmatprep.subr.mxu0 0.0
      %2394 = vmatpush1.msra.mxu0 %v2147
      %2395 = vmatprep.subr.mxu0 0.0
      %2396 = vmatpush1.msra.mxu0 %v2148
      %2397 = vmatprep.subr.mxu0 0.0
      %2398 = vmatpush1.msra.mxu0 %v2149
      %2399 = vmatprep.subr.mxu0 0.0
      %2400 = vmatpush1.msra.mxu0 0.0
      %2401 = vmatprep.subr.mxu0 0.0
      %2402 = vmatpush1.msra.mxu0 0.0
      %2403 = vmatprep.subr.mxu0 0.0
      %2404 = vmatpush1.msra.mxu0 0.0
      %2405 = vmatprep.subr.mxu0 0.0
      %2406 = vmatpush1.msra.mxu0 0.0
      %2407 = vmatprep.subr.mxu0 0.0
      %2408 = vmatpush1.msra.mxu0 0.0
      %2409 = vmatprep.subr.mxu0 0.0
      %2410 = vmatpush1.msra.mxu0 0.0
      %2411 = vmatprep.subr.mxu0 0.0
      %2412 = vmatpush1.msra.mxu0 0.0
      %2413 = vmatprep.subr.mxu0 0.0
      %2414 = vmatpush1.msra.mxu0 0.0
      %2415 = vmatprep.subr.mxu0 0.0
      %2416 = vmatpush1.msra.mxu0 0.0
      %2417 = vmatprep.subr.mxu0 0.0
      %2418 = vmatpush1.msra.mxu0 0.0
      %2419 = vmatprep.subr.mxu0 0.0
      %2420 = vmatpush1.msra.mxu0 0.0
      %2421 = vmatprep.subr.mxu0 0.0
      %2422 = vmatpush1.msra.mxu0 0.0
      %2423 = vmatprep.subr.mxu0 0.0
      %2424 = vmatpush1.msra.mxu0 0.0
      %2425 = vmatprep.subr.mxu0 0.0
      %2426 = vmatpush1.msra.mxu0 0.0
      %2427 = vmatprep.subr.mxu0 0.0
      %2428 = vmatpush1.msra.mxu0 0.0
      %2429 = vmatprep.subr.mxu0 0.0
      %2430 = vmatpush1.msra.mxu0 0.0
      %2431 = vmatprep.subr.mxu0 0.0
      %2432 = vmatpush1.msra.mxu0 0.0
      %2433 = vmatprep.subr.mxu0 0.0
      %2434 = vmatpush1.msra.mxu0 0.0
      %2435 = vmatprep.subr.mxu0 0.0
      %2436 = vmatpush1.msra.mxu0 0.0
      %2437 = vmatprep.subr.mxu0 0.0
      %2438 = vmatpush1.msra.mxu0 0.0
      %2439 = vmatprep.subr.mxu0 0.0
      %2440 = vmatpush1.msra.mxu0 0.0
      %2441 = vmatprep.subr.mxu0 0.0
      %2442 = vmatpush1.msra.mxu0 0.0
      %2443 = vmatprep.subr.mxu0 0.0
      %2444 = vmatpush1.msra.mxu0 0.0
      %2445 = vmatprep.subr.mxu0 0.0
      %2446 = vmatpush1.msra.mxu0 0.0
      %2447 = vmatprep.subr.mxu0 0.0
      %2448 = vmatpush1.msra.mxu0 0.0
      %2449 = vmatprep.subr.mxu0 0.0
      %2450 = vmatpush1.msra.mxu0 0.0
      %2451 = vmatprep.subr.mxu0 0.0
      %2452 = vmatpush1.msra.mxu0 0.0
      %2453 = vmatprep.subr.mxu0 0.0
      %2454 = vmatpush1.msra.mxu0 0.0
      %2455 = vmatprep.mubr.f32.mxu0 0.0
      %2456 = vmatmul.mubr.f32.gmra.mrb[0].mxu0 %v2179
      %v2457 = vpop.f32.mrb[0].mxu0
      %v2458 = vadd.f32 %v2173, %v2457
      %v2459 = vpop.f32.mrb[0].mxu0
      %2460 = vdwg.mxu0
      %v2461 = vld [vmem:[%s14] sm:$0xff]
      %v2462 = vld [vmem:[%s14 + $0x8] sm:$0xff]
      %v2463 = vld [vmem:[%s14 + $0x10] sm:$0xff]
      %v2464 = vld [vmem:[%s14 + $0x18] sm:$0xff]
      %v2465 = vld [vmem:[%s14 + $0x20] sm:$0xff]
      %v2466 = vld [vmem:[%s14 + $0x28] sm:$0xff]
      %v2467 = vld [vmem:[%s14 + $0x30] sm:$0xff]
      %v2468 = vld [vmem:[%s14 + $0x38] sm:$0xff]
      %v2469 = vld [vmem:[%s14 + $0x40] sm:$0xff]
      %v2470 = vld [vmem:[%s14 + $0x48] sm:$0xff]
      %v2471 = vld [vmem:[%s14 + $0x50] sm:$0xff]
      %v2472 = vld [vmem:[%s14 + $0x58] sm:$0xff]
      %v2473 = vld [vmem:[%s14 + $0x60] sm:$0xff]
      %v2474 = vld [vmem:[%s14 + $0x68] sm:$0xff]
      %v2475 = vld [vmem:[%s14 + $0x70] sm:$0xff]
      %v2476 = vld [vmem:[%s14 + $0x78] sm:$0xff]
      %v2477 = vld [vmem:[%s15] sm:$0x1]
      %v2478 = vld [vmem:[%s15 + $0x1] sm:$0x1]
      %v2479 = vld [vmem:[%s15 + $0x2] sm:$0x1]
      %v2480 = vld [vmem:[%s15 + $0x3] sm:$0x1]
      %v2485 = vlaneseq
      %v2486 = vshrl.u32 %v2485, 7
      %v2487 = vsub.s32 0, %v2486
      %v2488 = vrot.slane %v2477, %v2487
      %v2489 = vlaneseq
      %v2490 = vshrl.u32 %v2489, 7
      %v2491 = vsub.s32 0, %v2490
      %v2492 = vrot.slane %v2478, %v2491
      %v2493 = vlaneseq
      %v2494 = vshrl.u32 %v2493, 7
      %v2495 = vsub.s32 0, %v2494
      %v2496 = vrot.slane %v2479, %v2495
      %v2497 = vlaneseq
      %v2498 = vshrl.u32 %v2497, 7
      %v2499 = vsub.s32 0, %v2498
      %v2500 = vrot.slane %v2480, %v2499
      %v2506 = vsel %vm766, %v765, 0
      %2508 = vmatprep.subr.mxu0 0.0
      %2509 = vmatpush1.msra.mxu0 %v2461
      %2510 = vmatprep.subr.mxu0 0.0
      %2511 = vmatpush1.msra.mxu0 %v2462
      %2512 = vmatprep.subr.mxu0 0.0
      %2513 = vmatpush1.msra.mxu0 %v2463
      %2514 = vmatprep.subr.mxu0 0.0
      %2515 = vmatpush1.msra.mxu0 %v2464
      %2516 = vmatprep.subr.mxu0 0.0
      %2517 = vmatpush1.msra.mxu0 0.0
      %2518 = vmatprep.subr.mxu0 0.0
      %2519 = vmatpush1.msra.mxu0 0.0
      %2520 = vmatprep.subr.mxu0 0.0
      %2521 = vmatpush1.msra.mxu0 0.0
      %2522 = vmatprep.subr.mxu0 0.0
      %2523 = vmatpush1.msra.mxu0 0.0
      %2524 = vmatprep.subr.mxu0 0.0
      %2525 = vmatpush1.msra.mxu0 0.0
      %2526 = vmatprep.subr.mxu0 0.0
      %2527 = vmatpush1.msra.mxu0 0.0
      %2528 = vmatprep.subr.mxu0 0.0
      %2529 = vmatpush1.msra.mxu0 0.0
      %2530 = vmatprep.subr.mxu0 0.0
      %2531 = vmatpush1.msra.mxu0 0.0
      %2532 = vmatprep.subr.mxu0 0.0
      %2533 = vmatpush1.msra.mxu0 0.0
      %2534 = vmatprep.subr.mxu0 0.0
      %2535 = vmatpush1.msra.mxu0 0.0
      %2536 = vmatprep.subr.mxu0 0.0
      %2537 = vmatpush1.msra.mxu0 0.0
      %2538 = vmatprep.subr.mxu0 0.0
      %2539 = vmatpush1.msra.mxu0 0.0
      %2540 = vmatprep.subr.mxu0 0.0
      %2541 = vmatpush1.msra.mxu0 0.0
      %2542 = vmatprep.subr.mxu0 0.0
      %2543 = vmatpush1.msra.mxu0 0.0
      %2544 = vmatprep.subr.mxu0 0.0
      %2545 = vmatpush1.msra.mxu0 0.0
      %2546 = vmatprep.subr.mxu0 0.0
      %2547 = vmatpush1.msra.mxu0 0.0
      %2548 = vmatprep.subr.mxu0 0.0
      %2549 = vmatpush1.msra.mxu0 0.0
      %2550 = vmatprep.subr.mxu0 0.0
      %2551 = vmatpush1.msra.mxu0 0.0
      %2552 = vmatprep.subr.mxu0 0.0
      %2553 = vmatpush1.msra.mxu0 0.0
      %2554 = vmatprep.subr.mxu0 0.0
      %2555 = vmatpush1.msra.mxu0 0.0
      %2556 = vmatprep.subr.mxu0 0.0
      %2557 = vmatpush1.msra.mxu0 0.0
      %2558 = vmatprep.subr.mxu0 0.0
      %2559 = vmatpush1.msra.mxu0 0.0
      %2560 = vmatprep.subr.mxu0 0.0
      %2561 = vmatpush1.msra.mxu0 0.0
      %2562 = vmatprep.subr.mxu0 0.0
      %2563 = vmatpush1.msra.mxu0 0.0
      %2564 = vmatprep.subr.mxu0 0.0
      %2565 = vmatpush1.msra.mxu0 0.0
      %2566 = vmatprep.subr.mxu0 0.0
      %2567 = vmatpush1.msra.mxu0 0.0
      %2568 = vmatprep.subr.mxu0 0.0
      %2569 = vmatpush1.msra.mxu0 0.0
      %2570 = vmatprep.subr.mxu0 0.0
      %2571 = vmatpush1.msra.mxu0 0.0
      %2572 = vmatprep.mubr.f32.mxu0 0.0
      %2573 = vmatmul.mubr.f32.gmra.mrb[0].mxu0 %v2506
      %v2574 = vpop.f32.mrb[0].mxu0
      %v2575 = vadd.f32 %v2488, %v2574
      %v2576 = vpop.f32.mrb[0].mxu0
      %2577 = vdwg.mxu0
      %2578 = vmatprep.subr.mxu0 0.0
      %2579 = vmatpush1.msra.mxu0 %v2465
      %2580 = vmatprep.subr.mxu0 0.0
      %2581 = vmatpush1.msra.mxu0 %v2466
      %2582 = vmatprep.subr.mxu0 0.0
      %2583 = vmatpush1.msra.mxu0 %v2467
      %2584 = vmatprep.subr.mxu0 0.0
      %2585 = vmatpush1.msra.mxu0 %v2468
      %2586 = vmatprep.subr.mxu0 0.0
      %2587 = vmatpush1.msra.mxu0 0.0
      %2588 = vmatprep.subr.mxu0 0.0
      %2589 = vmatpush1.msra.mxu0 0.0
      %2590 = vmatprep.subr.mxu0 0.0
      %2591 = vmatpush1.msra.mxu0 0.0
      %2592 = vmatprep.subr.mxu0 0.0
      %2593 = vmatpush1.msra.mxu0 0.0
      %2594 = vmatprep.subr.mxu0 0.0
      %2595 = vmatpush1.msra.mxu0 0.0
      %2596 = vmatprep.subr.mxu0 0.0
      %2597 = vmatpush1.msra.mxu0 0.0
      %2598 = vmatprep.subr.mxu0 0.0
      %2599 = vmatpush1.msra.mxu0 0.0
      %2600 = vmatprep.subr.mxu0 0.0
      %2601 = vmatpush1.msra.mxu0 0.0
      %2602 = vmatprep.subr.mxu0 0.0
      %2603 = vmatpush1.msra.mxu0 0.0
      %2604 = vmatprep.subr.mxu0 0.0
      %2605 = vmatpush1.msra.mxu0 0.0
      %2606 = vmatprep.subr.mxu0 0.0
      %2607 = vmatpush1.msra.mxu0 0.0
      %2608 = vmatprep.subr.mxu0 0.0
      %2609 = vmatpush1.msra.mxu0 0.0
      %2610 = vmatprep.subr.mxu0 0.0
      %2611 = vmatpush1.msra.mxu0 0.0
      %2612 = vmatprep.subr.mxu0 0.0
      %2613 = vmatpush1.msra.mxu0 0.0
      %2614 = vmatprep.subr.mxu0 0.0
      %2615 = vmatpush1.msra.mxu0 0.0
      %2616 = vmatprep.subr.mxu0 0.0
      %2617 = vmatpush1.msra.mxu0 0.0
      %2618 = vmatprep.subr.mxu0 0.0
      %2619 = vmatpush1.msra.mxu0 0.0
      %2620 = vmatprep.subr.mxu0 0.0
      %2621 = vmatpush1.msra.mxu0 0.0
      %2622 = vmatprep.subr.mxu0 0.0
      %2623 = vmatpush1.msra.mxu0 0.0
      %2624 = vmatprep.subr.mxu0 0.0
      %2625 = vmatpush1.msra.mxu0 0.0
      %2626 = vmatprep.subr.mxu0 0.0
      %2627 = vmatpush1.msra.mxu0 0.0
      %2628 = vmatprep.subr.mxu0 0.0
      %2629 = vmatpush1.msra.mxu0 0.0
      %2630 = vmatprep.subr.mxu0 0.0
      %2631 = vmatpush1.msra.mxu0 0.0
      %2632 = vmatprep.subr.mxu0 0.0
      %2633 = vmatpush1.msra.mxu0 0.0
      %2634 = vmatprep.subr.mxu0 0.0
      %2635 = vmatpush1.msra.mxu0 0.0
      %2636 = vmatprep.subr.mxu0 0.0
      %2637 = vmatpush1.msra.mxu0 0.0
      %2638 = vmatprep.subr.mxu0 0.0
      %2639 = vmatpush1.msra.mxu0 0.0
      %2640 = vmatprep.subr.mxu0 0.0
      %2641 = vmatpush1.msra.mxu0 0.0
      %2642 = vmatprep.mubr.f32.mxu0 0.0
      %2643 = vmatmul.mubr.f32.gmra.mrb[0].mxu0 %v2506
      %v2644 = vpop.f32.mrb[0].mxu0
      %v2645 = vadd.f32 %v2492, %v2644
      %v2646 = vpop.f32.mrb[0].mxu0
      %2647 = vdwg.mxu0
      %2648 = vmatprep.subr.mxu0 0.0
      %2649 = vmatpush1.msra.mxu0 %v2469
      %2650 = vmatprep.subr.mxu0 0.0
      %2651 = vmatpush1.msra.mxu0 %v2470
      %2652 = vmatprep.subr.mxu0 0.0
      %2653 = vmatpush1.msra.mxu0 %v2471
      %2654 = vmatprep.subr.mxu0 0.0
      %2655 = vmatpush1.msra.mxu0 %v2472
      %2656 = vmatprep.subr.mxu0 0.0
      %2657 = vmatpush1.msra.mxu0 0.0
      %2658 = vmatprep.subr.mxu0 0.0
      %2659 = vmatpush1.msra.mxu0 0.0
      %2660 = vmatprep.subr.mxu0 0.0
      %2661 = vmatpush1.msra.mxu0 0.0
      %2662 = vmatprep.subr.mxu0 0.0
      %2663 = vmatpush1.msra.mxu0 0.0
      %2664 = vmatprep.subr.mxu0 0.0
      %2665 = vmatpush1.msra.mxu0 0.0
      %2666 = vmatprep.subr.mxu0 0.0
      %2667 = vmatpush1.msra.mxu0 0.0
      %2668 = vmatprep.subr.mxu0 0.0
      %2669 = vmatpush1.msra.mxu0 0.0
      %2670 = vmatprep.subr.mxu0 0.0
      %2671 = vmatpush1.msra.mxu0 0.0
      %2672 = vmatprep.subr.mxu0 0.0
      %2673 = vmatpush1.msra.mxu0 0.0
      %2674 = vmatprep.subr.mxu0 0.0
      %2675 = vmatpush1.msra.mxu0 0.0
      %2676 = vmatprep.subr.mxu0 0.0
      %2677 = vmatpush1.msra.mxu0 0.0
      %2678 = vmatprep.subr.mxu0 0.0
      %2679 = vmatpush1.msra.mxu0 0.0
      %2680 = vmatprep.subr.mxu0 0.0
      %2681 = vmatpush1.msra.mxu0 0.0
      %2682 = vmatprep.subr.mxu0 0.0
      %2683 = vmatpush1.msra.mxu0 0.0
      %2684 = vmatprep.subr.mxu0 0.0
      %2685 = vmatpush1.msra.mxu0 0.0
      %2686 = vmatprep.subr.mxu0 0.0
      %2687 = vmatpush1.msra.mxu0 0.0
      %2688 = vmatprep.subr.mxu0 0.0
      %2689 = vmatpush1.msra.mxu0 0.0
      %2690 = vmatprep.subr.mxu0 0.0
      %2691 = vmatpush1.msra.mxu0 0.0
      %2692 = vmatprep.subr.mxu0 0.0
      %2693 = vmatpush1.msra.mxu0 0.0
      %2694 = vmatprep.subr.mxu0 0.0
      %2695 = vmatpush1.msra.mxu0 0.0
      %2696 = vmatprep.subr.mxu0 0.0
      %2697 = vmatpush1.msra.mxu0 0.0
      %2698 = vmatprep.subr.mxu0 0.0
      %2699 = vmatpush1.msra.mxu0 0.0
      %2700 = vmatprep.subr.mxu0 0.0
      %2701 = vmatpush1.msra.mxu0 0.0
      %2702 = vmatprep.subr.mxu0 0.0
      %2703 = vmatpush1.msra.mxu0 0.0
      %2704 = vmatprep.subr.mxu0 0.0
      %2705 = vmatpush1.msra.mxu0 0.0
      %2706 = vmatprep.subr.mxu0 0.0
      %2707 = vmatpush1.msra.mxu0 0.0
      %2708 = vmatprep.subr.mxu0 0.0
      %2709 = vmatpush1.msra.mxu0 0.0
      %2710 = vmatprep.subr.mxu0 0.0
      %2711 = vmatpush1.msra.mxu0 0.0
      %2712 = vmatprep.mubr.f32.mxu0 0.0
      %2713 = vmatmul.mubr.f32.gmra.mrb[0].mxu0 %v2506
      %v2714 = vpop.f32.mrb[0].mxu0
      %v2715 = vadd.f32 %v2496, %v2714
      %v2716 = vpop.f32.mrb[0].mxu0
      %2717 = vdwg.mxu0
      %2718 = vmatprep.subr.mxu0 0.0
      %2719 = vmatpush1.msra.mxu0 %v2473
      %2720 = vmatprep.subr.mxu0 0.0
      %2721 = vmatpush1.msra.mxu0 %v2474
      %2722 = vmatprep.subr.mxu0 0.0
      %2723 = vmatpush1.msra.mxu0 %v2475
      %2724 = vmatprep.subr.mxu0 0.0
      %2725 = vmatpush1.msra.mxu0 %v2476
      %2726 = vmatprep.subr.mxu0 0.0
      %2727 = vmatpush1.msra.mxu0 0.0
      %2728 = vmatprep.subr.mxu0 0.0
      %2729 = vmatpush1.msra.mxu0 0.0
      %2730 = vmatprep.subr.mxu0 0.0
      %2731 = vmatpush1.msra.mxu0 0.0
      %2732 = vmatprep.subr.mxu0 0.0
      %2733 = vmatpush1.msra.mxu0 0.0
      %2734 = vmatprep.subr.mxu0 0.0
      %2735 = vmatpush1.msra.mxu0 0.0
      %2736 = vmatprep.subr.mxu0 0.0
      %2737 = vmatpush1.msra.mxu0 0.0
      %2738 = vmatprep.subr.mxu0 0.0
      %2739 = vmatpush1.msra.mxu0 0.0
      %2740 = vmatprep.subr.mxu0 0.0
      %2741 = vmatpush1.msra.mxu0 0.0
      %2742 = vmatprep.subr.mxu0 0.0
      %2743 = vmatpush1.msra.mxu0 0.0
      %2744 = vmatprep.subr.mxu0 0.0
      %2745 = vmatpush1.msra.mxu0 0.0
      %2746 = vmatprep.subr.mxu0 0.0
      %2747 = vmatpush1.msra.mxu0 0.0
      %2748 = vmatprep.subr.mxu0 0.0
      %2749 = vmatpush1.msra.mxu0 0.0
      %2750 = vmatprep.subr.mxu0 0.0
      %2751 = vmatpush1.msra.mxu0 0.0
      %2752 = vmatprep.subr.mxu0 0.0
      %2753 = vmatpush1.msra.mxu0 0.0
      %2754 = vmatprep.subr.mxu0 0.0
      %2755 = vmatpush1.msra.mxu0 0.0
      %2756 = vmatprep.subr.mxu0 0.0
      %2757 = vmatpush1.msra.mxu0 0.0
      %2758 = vmatprep.subr.mxu0 0.0
      %2759 = vmatpush1.msra.mxu0 0.0
      %2760 = vmatprep.subr.mxu0 0.0
      %2761 = vmatpush1.msra.mxu0 0.0
      %2762 = vmatprep.subr.mxu0 0.0
      %2763 = vmatpush1.msra.mxu0 0.0
      %2764 = vmatprep.subr.mxu0 0.0
      %2765 = vmatpush1.msra.mxu0 0.0
      %2766 = vmatprep.subr.mxu0 0.0
      %2767 = vmatpush1.msra.mxu0 0.0
      %2768 = vmatprep.subr.mxu0 0.0
      %2769 = vmatpush1.msra.mxu0 0.0
      %2770 = vmatprep.subr.mxu0 0.0
      %2771 = vmatpush1.msra.mxu0 0.0
      %2772 = vmatprep.subr.mxu0 0.0
      %2773 = vmatpush1.msra.mxu0 0.0
      %2774 = vmatprep.subr.mxu0 0.0
      %2775 = vmatpush1.msra.mxu0 0.0
      %2776 = vmatprep.subr.mxu0 0.0
      %2777 = vmatpush1.msra.mxu0 0.0
      %2778 = vmatprep.subr.mxu0 0.0
      %2779 = vmatpush1.msra.mxu0 0.0
      %2780 = vmatprep.subr.mxu0 0.0
      %2781 = vmatpush1.msra.mxu0 0.0
      %2782 = vmatprep.mubr.f32.mxu0 0.0
      %2783 = vmatmul.mubr.f32.gmra.mrb[0].mxu0 %v2506
      %v2784 = vpop.f32.mrb[0].mxu0
      %v2785 = vadd.f32 %v2500, %v2784
      %v2786 = vpop.f32.mrb[0].mxu0
      %2787 = vdwg.mxu0
      %v2788 = vld [vmem:[%s759] sm:$0x1]
      %vm2789 = vcmp.gt.f32.partialorder %v2788, 0.5
      %v2791 = vsel %vm1129, %v2248, 0
      %v2794 = vsel %vm1129, %v2575, 0
      %2796 = vmatprep.subr.mxu0 0.0
      %2797 = vmatpush1.xpose.msra.mxu0 %v2794
      %2798 = vmatprep.subr.mxu0 0.0
      %2799 = vmatpush1.xpose.msra.mxu0 0.0
      %2800 = vmatprep.subr.mxu0 0.0
      %2801 = vmatpush1.xpose.msra.mxu0 0.0
      %2802 = vmatprep.subr.mxu0 0.0
      %2803 = vmatpush1.xpose.msra.mxu0 0.0
      %2804 = vmatprep.subr.mxu0 0.0
      %2805 = vmatpush1.xpose.msra.mxu0 0.0
      %2806 = vmatprep.subr.mxu0 0.0
      %2807 = vmatpush1.xpose.msra.mxu0 0.0
      %2808 = vmatprep.subr.mxu0 0.0
      %2809 = vmatpush1.xpose.msra.mxu0 0.0
      %2810 = vmatprep.subr.mxu0 0.0
      %2811 = vmatpush1.xpose.msra.mxu0 0.0
      %2812 = vmatprep.subr.mxu0 0.0
      %2813 = vmatpush1.xpose.msra.mxu0 0.0
      %2814 = vmatprep.subr.mxu0 0.0
      %2815 = vmatpush1.xpose.msra.mxu0 0.0
      %2816 = vmatprep.subr.mxu0 0.0
      %2817 = vmatpush1.xpose.msra.mxu0 0.0
      %2818 = vmatprep.subr.mxu0 0.0
      %2819 = vmatpush1.xpose.msra.mxu0 0.0
      %2820 = vmatprep.subr.mxu0 0.0
      %2821 = vmatpush1.xpose.msra.mxu0 0.0
      %2822 = vmatprep.subr.mxu0 0.0
      %2823 = vmatpush1.xpose.msra.mxu0 0.0
      %2824 = vmatprep.subr.mxu0 0.0
      %2825 = vmatpush1.xpose.msra.mxu0 0.0
      %2826 = vmatprep.subr.mxu0 0.0
      %2827 = vmatpush1.xpose.msra.mxu0 0.0
      %2828 = vmatprep.subr.mxu0 0.0
      %2829 = vmatpush1.xpose.msra.mxu0 0.0
      %2830 = vmatprep.subr.mxu0 0.0
      %2831 = vmatpush1.xpose.msra.mxu0 0.0
      %2832 = vmatprep.subr.mxu0 0.0
      %2833 = vmatpush1.xpose.msra.mxu0 0.0
      %2834 = vmatprep.subr.mxu0 0.0
      %2835 = vmatpush1.xpose.msra.mxu0 0.0
      %2836 = vmatprep.subr.mxu0 0.0
      %2837 = vmatpush1.xpose.msra.mxu0 0.0
      %2838 = vmatprep.subr.mxu0 0.0
      %2839 = vmatpush1.xpose.msra.mxu0 0.0
      %2840 = vmatprep.subr.mxu0 0.0
      %2841 = vmatpush1.xpose.msra.mxu0 0.0
      %2842 = vmatprep.subr.mxu0 0.0
      %2843 = vmatpush1.xpose.msra.mxu0 0.0
      %2844 = vmatprep.subr.mxu0 0.0
      %2845 = vmatpush1.xpose.msra.mxu0 0.0
      %2846 = vmatprep.subr.mxu0 0.0
      %2847 = vmatpush1.xpose.msra.mxu0 0.0
      %2848 = vmatprep.subr.mxu0 0.0
      %2849 = vmatpush1.xpose.msra.mxu0 0.0
      %2850 = vmatprep.subr.mxu0 0.0
      %2851 = vmatpush1.xpose.msra.mxu0 0.0
      %2852 = vmatprep.subr.mxu0 0.0
      %2853 = vmatpush1.xpose.msra.mxu0 0.0
      %2854 = vmatprep.subr.mxu0 0.0
      %2855 = vmatpush1.xpose.msra.mxu0 0.0
      %2856 = vmatprep.subr.mxu0 0.0
      %2857 = vmatpush1.xpose.msra.mxu0 0.0
      %2858 = vmatprep.subr.mxu0 0.0
      %2859 = vmatpush1.xpose.msra.mxu0 0.0
      %2860 = vmatprep.mubr.f32.mxu0 0.0
      %2861 = vmatmul.mubr.f32.gmra.mrb[0].mxu0 %v2791
      %v2862 = vpop.f32.mrb[0].mxu0
      %v2863 = vadd.f32 0.0, %v2862
      %v2864 = vpop.f32.mrb[0].mxu0
      %2865 = vdwg.mxu0
      %v2867 = vsel %vm1129, %v2318, 0
      %v2870 = vsel %vm1129, %v2645, 0
      %2872 = vmatprep.subr.mxu0 0.0
      %2873 = vmatpush1.xpose.msra.mxu0 %v2870
      %2874 = vmatprep.subr.mxu0 0.0
      %2875 = vmatpush1.xpose.msra.mxu0 0.0
      %2876 = vmatprep.subr.mxu0 0.0
      %2877 = vmatpush1.xpose.msra.mxu0 0.0
      %2878 = vmatprep.subr.mxu0 0.0
      %2879 = vmatpush1.xpose.msra.mxu0 0.0
      %2880 = vmatprep.subr.mxu0 0.0
      %2881 = vmatpush1.xpose.msra.mxu0 0.0
      %2882 = vmatprep.subr.mxu0 0.0
      %2883 = vmatpush1.xpose.msra.mxu0 0.0
      %2884 = vmatprep.subr.mxu0 0.0
      %2885 = vmatpush1.xpose.msra.mxu0 0.0
      %2886 = vmatprep.subr.mxu0 0.0
      %2887 = vmatpush1.xpose.msra.mxu0 0.0
      %2888 = vmatprep.subr.mxu0 0.0
      %2889 = vmatpush1.xpose.msra.mxu0 0.0
      %2890 = vmatprep.subr.mxu0 0.0
      %2891 = vmatpush1.xpose.msra.mxu0 0.0
      %2892 = vmatprep.subr.mxu0 0.0
      %2893 = vmatpush1.xpose.msra.mxu0 0.0
      %2894 = vmatprep.subr.mxu0 0.0
      %2895 = vmatpush1.xpose.msra.mxu0 0.0
      %2896 = vmatprep.subr.mxu0 0.0
      %2897 = vmatpush1.xpose.msra.mxu0 0.0
      %2898 = vmatprep.subr.mxu0 0.0
      %2899 = vmatpush1.xpose.msra.mxu0 0.0
      %2900 = vmatprep.subr.mxu0 0.0
      %2901 = vmatpush1.xpose.msra.mxu0 0.0
      %2902 = vmatprep.subr.mxu0 0.0
      %2903 = vmatpush1.xpose.msra.mxu0 0.0
      %2904 = vmatprep.subr.mxu0 0.0
      %2905 = vmatpush1.xpose.msra.mxu0 0.0
      %2906 = vmatprep.subr.mxu0 0.0
      %2907 = vmatpush1.xpose.msra.mxu0 0.0
      %2908 = vmatprep.subr.mxu0 0.0
      %2909 = vmatpush1.xpose.msra.mxu0 0.0
      %2910 = vmatprep.subr.mxu0 0.0
      %2911 = vmatpush1.xpose.msra.mxu0 0.0
      %2912 = vmatprep.subr.mxu0 0.0
      %2913 = vmatpush1.xpose.msra.mxu0 0.0
      %2914 = vmatprep.subr.mxu0 0.0
      %2915 = vmatpush1.xpose.msra.mxu0 0.0
      %2916 = vmatprep.subr.mxu0 0.0
      %2917 = vmatpush1.xpose.msra.mxu0 0.0
      %2918 = vmatprep.subr.mxu0 0.0
      %2919 = vmatpush1.xpose.msra.mxu0 0.0
      %2920 = vmatprep.subr.mxu0 0.0
      %2921 = vmatpush1.xpose.msra.mxu0 0.0
      %2922 = vmatprep.subr.mxu0 0.0
      %2923 = vmatpush1.xpose.msra.mxu0 0.0
      %2924 = vmatprep.subr.mxu0 0.0
      %2925 = vmatpush1.xpose.msra.mxu0 0.0
      %2926 = vmatprep.subr.mxu0 0.0
      %2927 = vmatpush1.xpose.msra.mxu0 0.0
      %2928 = vmatprep.subr.mxu0 0.0
      %2929 = vmatpush1.xpose.msra.mxu0 0.0
      %2930 = vmatprep.subr.mxu0 0.0
      %2931 = vmatpush1.xpose.msra.mxu0 0.0
      %2932 = vmatprep.subr.mxu0 0.0
      %2933 = vmatpush1.xpose.msra.mxu0 0.0
      %2934 = vmatprep.subr.mxu0 0.0
      %2935 = vmatpush1.xpose.msra.mxu0 0.0
      %2936 = vmatprep.mubr.f32.mxu0 0.0
      %2937 = vmatmul.mubr.f32.gmra.mrb[0].mxu0 %v2867
      %v2938 = vpop.f32.mrb[0].mxu0
      %v2939 = vadd.f32 0.0, %v2938
      %v2940 = vpop.f32.mrb[0].mxu0
      %2941 = vdwg.mxu0
      %v2943 = vsel %vm1129, %v2388, 0
      %v2946 = vsel %vm1129, %v2715, 0
      %2948 = vmatprep.subr.mxu0 0.0
      %2949 = vmatpush1.xpose.msra.mxu0 %v2946
      %2950 = vmatprep.subr.mxu0 0.0
      %2951 = vmatpush1.xpose.msra.mxu0 0.0
      %2952 = vmatprep.subr.mxu0 0.0
      %2953 = vmatpush1.xpose.msra.mxu0 0.0
      %2954 = vmatprep.subr.mxu0 0.0
      %2955 = vmatpush1.xpose.msra.mxu0 0.0
      %2956 = vmatprep.subr.mxu0 0.0
      %2957 = vmatpush1.xpose.msra.mxu0 0.0
      %2958 = vmatprep.subr.mxu0 0.0
      %2959 = vmatpush1.xpose.msra.mxu0 0.0
      %2960 = vmatprep.subr.mxu0 0.0
      %2961 = vmatpush1.xpose.msra.mxu0 0.0
      %2962 = vmatprep.subr.mxu0 0.0
      %2963 = vmatpush1.xpose.msra.mxu0 0.0
      %2964 = vmatprep.subr.mxu0 0.0
      %2965 = vmatpush1.xpose.msra.mxu0 0.0
      %2966 = vmatprep.subr.mxu0 0.0
      %2967 = vmatpush1.xpose.msra.mxu0 0.0
      %2968 = vmatprep.subr.mxu0 0.0
      %2969 = vmatpush1.xpose.msra.mxu0 0.0
      %2970 = vmatprep.subr.mxu0 0.0
      %2971 = vmatpush1.xpose.msra.mxu0 0.0
      %2972 = vmatprep.subr.mxu0 0.0
      %2973 = vmatpush1.xpose.msra.mxu0 0.0
      %2974 = vmatprep.subr.mxu0 0.0
      %2975 = vmatpush1.xpose.msra.mxu0 0.0
      %2976 = vmatprep.subr.mxu0 0.0
      %2977 = vmatpush1.xpose.msra.mxu0 0.0
      %2978 = vmatprep.subr.mxu0 0.0
      %2979 = vmatpush1.xpose.msra.mxu0 0.0
      %2980 = vmatprep.subr.mxu0 0.0
      %2981 = vmatpush1.xpose.msra.mxu0 0.0
      %2982 = vmatprep.subr.mxu0 0.0
      %2983 = vmatpush1.xpose.msra.mxu0 0.0
      %2984 = vmatprep.subr.mxu0 0.0
      %2985 = vmatpush1.xpose.msra.mxu0 0.0
      %2986 = vmatprep.subr.mxu0 0.0
      %2987 = vmatpush1.xpose.msra.mxu0 0.0
      %2988 = vmatprep.subr.mxu0 0.0
      %2989 = vmatpush1.xpose.msra.mxu0 0.0
      %2990 = vmatprep.subr.mxu0 0.0
      %2991 = vmatpush1.xpose.msra.mxu0 0.0
      %2992 = vmatprep.subr.mxu0 0.0
      %2993 = vmatpush1.xpose.msra.mxu0 0.0
      %2994 = vmatprep.subr.mxu0 0.0
      %2995 = vmatpush1.xpose.msra.mxu0 0.0
      %2996 = vmatprep.subr.mxu0 0.0
      %2997 = vmatpush1.xpose.msra.mxu0 0.0
      %2998 = vmatprep.subr.mxu0 0.0
      %2999 = vmatpush1.xpose.msra.mxu0 0.0
      %3000 = vmatprep.subr.mxu0 0.0
      %3001 = vmatpush1.xpose.msra.mxu0 0.0
      %3002 = vmatprep.subr.mxu0 0.0
      %3003 = vmatpush1.xpose.msra.mxu0 0.0
      %3004 = vmatprep.subr.mxu0 0.0
      %3005 = vmatpush1.xpose.msra.mxu0 0.0
      %3006 = vmatprep.subr.mxu0 0.0
      %3007 = vmatpush1.xpose.msra.mxu0 0.0
      %3008 = vmatprep.subr.mxu0 0.0
      %3009 = vmatpush1.xpose.msra.mxu0 0.0
      %3010 = vmatprep.subr.mxu0 0.0
      %3011 = vmatpush1.xpose.msra.mxu0 0.0
      %3012 = vmatprep.mubr.f32.mxu0 0.0
      %3013 = vmatmul.mubr.f32.gmra.mrb[0].mxu0 %v2943
      %v3014 = vpop.f32.mrb[0].mxu0
      %v3015 = vadd.f32 0.0, %v3014
      %v3016 = vpop.f32.mrb[0].mxu0
      %3017 = vdwg.mxu0
      %v3019 = vsel %vm1129, %v2458, 0
      %v3022 = vsel %vm1129, %v2785, 0
      %3024 = vmatprep.subr.mxu0 0.0
      %3025 = vmatpush1.xpose.msra.mxu0 %v3022
      %3026 = vmatprep.subr.mxu0 0.0
      %3027 = vmatpush1.xpose.msra.mxu0 0.0
      %3028 = vmatprep.subr.mxu0 0.0
      %3029 = vmatpush1.xpose.msra.mxu0 0.0
      %3030 = vmatprep.subr.mxu0 0.0
      %3031 = vmatpush1.xpose.msra.mxu0 0.0
      %3032 = vmatprep.subr.mxu0 0.0
      %3033 = vmatpush1.xpose.msra.mxu0 0.0
      %3034 = vmatprep.subr.mxu0 0.0
      %3035 = vmatpush1.xpose.msra.mxu0 0.0
      %3036 = vmatprep.subr.mxu0 0.0
      %3037 = vmatpush1.xpose.msra.mxu0 0.0
      %3038 = vmatprep.subr.mxu0 0.0
      %3039 = vmatpush1.xpose.msra.mxu0 0.0
      %3040 = vmatprep.subr.mxu0 0.0
      %3041 = vmatpush1.xpose.msra.mxu0 0.0
      %3042 = vmatprep.subr.mxu0 0.0
      %3043 = vmatpush1.xpose.msra.mxu0 0.0
      %3044 = vmatprep.subr.mxu0 0.0
      %3045 = vmatpush1.xpose.msra.mxu0 0.0
      %3046 = vmatprep.subr.mxu0 0.0
      %3047 = vmatpush1.xpose.msra.mxu0 0.0
      %3048 = vmatprep.subr.mxu0 0.0
      %3049 = vmatpush1.xpose.msra.mxu0 0.0
      %3050 = vmatprep.subr.mxu0 0.0
      %3051 = vmatpush1.xpose.msra.mxu0 0.0
      %3052 = vmatprep.subr.mxu0 0.0
      %3053 = vmatpush1.xpose.msra.mxu0 0.0
      %3054 = vmatprep.subr.mxu0 0.0
      %3055 = vmatpush1.xpose.msra.mxu0 0.0
      %3056 = vmatprep.subr.mxu0 0.0
      %3057 = vmatpush1.xpose.msra.mxu0 0.0
      %3058 = vmatprep.subr.mxu0 0.0
      %3059 = vmatpush1.xpose.msra.mxu0 0.0
      %3060 = vmatprep.subr.mxu0 0.0
      %3061 = vmatpush1.xpose.msra.mxu0 0.0
      %3062 = vmatprep.subr.mxu0 0.0
      %3063 = vmatpush1.xpose.msra.mxu0 0.0
      %3064 = vmatprep.subr.mxu0 0.0
      %3065 = vmatpush1.xpose.msra.mxu0 0.0
      %3066 = vmatprep.subr.mxu0 0.0
      %3067 = vmatpush1.xpose.msra.mxu0 0.0
      %3068 = vmatprep.subr.mxu0 0.0
      %3069 = vmatpush1.xpose.msra.mxu0 0.0
      %3070 = vmatprep.subr.mxu0 0.0
      %3071 = vmatpush1.xpose.msra.mxu0 0.0
      %3072 = vmatprep.subr.mxu0 0.0
      %3073 = vmatpush1.xpose.msra.mxu0 0.0
      %3074 = vmatprep.subr.mxu0 0.0
      %3075 = vmatpush1.xpose.msra.mxu0 0.0
      %3076 = vmatprep.subr.mxu0 0.0
      %3077 = vmatpush1.xpose.msra.mxu0 0.0
      %3078 = vmatprep.subr.mxu0 0.0
      %3079 = vmatpush1.xpose.msra.mxu0 0.0
      %3080 = vmatprep.subr.mxu0 0.0
      %3081 = vmatpush1.xpose.msra.mxu0 0.0
      %3082 = vmatprep.subr.mxu0 0.0
      %3083 = vmatpush1.xpose.msra.mxu0 0.0
      %3084 = vmatprep.subr.mxu0 0.0
      %3085 = vmatpush1.xpose.msra.mxu0 0.0
      %3086 = vmatprep.subr.mxu0 0.0
      %3087 = vmatpush1.xpose.msra.mxu0 0.0
      %3088 = vmatprep.mubr.f32.mxu0 0.0
      %3089 = vmatmul.mubr.f32.gmra.mrb[0].mxu0 %v3019
      %v3090 = vpop.f32.mrb[0].mxu0
      %v3091 = vadd.f32 0.0, %v3090
      %v3092 = vpop.f32.mrb[0].mxu0
      %3093 = vdwg.mxu0
      %v3094 = vmul.f32 %v2863, 0.17677669
      %v3095 = vmul.f32 %v2939, 0.17677669
      %v3096 = vmul.f32 %v3015, 0.17677669
      %v3097 = vmul.f32 %v3091, 0.17677669
      %v3098 = vsel %vm2789, 1, 0
      %v3099 = vlaneseq
      %v3100 = vshrl.u32 %v3099, 7
      %v3101 = vsub.s32 0, %v3100
      %v3102 = vrot.slane %v3098, %v3101
      %vm3103 = vcmp.eq.s32.totalorder %v3102, 1
      %v3104 = vsel %vm3103, -100000.0, %v3094
      %v3105 = vsel %vm3103, -100000.0, %v3095
      %v3106 = vsel %vm3103, -100000.0, %v3096
      %v3107 = vsel %vm3103, -100000.0, %v3097
      %v3108 = vsel %vm1129, %v3104, -inf
      %3109 = vmax.xlane.f32.xlu0 %v3108
      %v3110 = vpop.xlane.xlu0 %3109
      %v3111 = vsel %vm1129, %v3105, -inf
      %3112 = vmax.xlane.f32.xlu0 %v3111
      %v3113 = vpop.xlane.xlu0 %3112
      %v3114 = vsel %vm1129, %v3106, -inf
      %3115 = vmax.xlane.f32.xlu0 %v3114
      %v3116 = vpop.xlane.xlu0 %3115
      %v3117 = vsel %vm1129, %v3107, -inf
      %3118 = vmax.xlane.f32.xlu0 %v3117
      %v3119 = vpop.xlane.xlu0 %3118
      %v3120 = vsub.f32 %v3104, %v3110
      %v3121 = vsub.f32 %v3105, %v3113
      %v3122 = vsub.f32 %v3106, %v3116
      %v3123 = vsub.f32 %v3107, %v3119
      %v3124 = vmul.f32 %v3120, 1.442695
      %v3125 = vpow.pop %v3124
      %v3126 = vmul.f32 %v3121, 1.442695
      %v3127 = vpow.pop %v3126
      %v3128 = vmul.f32 %v3122, 1.442695
      %v3129 = vpow.pop %v3128
      %v3130 = vmul.f32 %v3123, 1.442695
      %v3131 = vpow.pop %v3130
      %v3132 = vsel %vm1129, %v3125, 0.0
      %3133 = vadd.xlane.f32.xlu0 %v3132
      %v3134 = vpop.xlane.xlu0 %3133
      %v3135 = vsel %vm1129, %v3127, 0.0
      %3136 = vadd.xlane.f32.xlu0 %v3135
      %v3137 = vpop.xlane.xlu0 %3136
      %v3138 = vsel %vm1129, %v3129, 0.0
      %3139 = vadd.xlane.f32.xlu0 %v3138
      %v3140 = vpop.xlane.xlu0 %3139
      %v3141 = vsel %vm1129, %v3131, 0.0
      %3142 = vadd.xlane.f32.xlu0 %v3141
      %v3143 = vpop.xlane.xlu0 %3142
      %v3144 = vrcp.pop %v3134
      %v3145 = vrcp.pop %v3137
      %v3146 = vrcp.pop %v3140
      %v3147 = vrcp.pop %v3143
      %v3148 = vmul.f32 %v3125, %v3144
      %v3149 = vmul.f32 %v3127, %v3145
      %v3150 = vmul.f32 %v3129, %v3146
      %v3151 = vmul.f32 %v3131, %v3147
      %3152 = vrot.lane.b32.xlu0 %v2575, 120
      %v3153 = vpop.permute.xlu0 %3152
      %v3156 = vsel %vm1129, %v3148, 0
      %3158 = vmatprep.subr.mxu0 0.0
      %3159 = vmatpush1.msra.mxu0 %v3153
      %3160 = vmatprep.subr.mxu0 0.0
      %3161 = vmatpush1.msra.mxu0 0.0
      %3162 = vmatprep.subr.mxu0 0.0
      %3163 = vmatpush1.msra.mxu0 0.0
      %3164 = vmatprep.subr.mxu0 0.0
      %3165 = vmatpush1.msra.mxu0 0.0
      %3166 = vmatprep.subr.mxu0 0.0
      %3167 = vmatpush1.msra.mxu0 0.0
      %3168 = vmatprep.subr.mxu0 0.0
      %3169 = vmatpush1.msra.mxu0 0.0
      %3170 = vmatprep.subr.mxu0 0.0
      %3171 = vmatpush1.msra.mxu0 0.0
      %3172 = vmatprep.subr.mxu0 0.0
      %3173 = vmatpush1.msra.mxu0 0.0
      %3174 = vmatprep.subr.mxu0 0.0
      %3175 = vmatpush1.msra.mxu0 0.0
      %3176 = vmatprep.subr.mxu0 0.0
      %3177 = vmatpush1.msra.mxu0 0.0
      %3178 = vmatprep.subr.mxu0 0.0
      %3179 = vmatpush1.msra.mxu0 0.0
      %3180 = vmatprep.subr.mxu0 0.0
      %3181 = vmatpush1.msra.mxu0 0.0
      %3182 = vmatprep.subr.mxu0 0.0
      %3183 = vmatpush1.msra.mxu0 0.0
      %3184 = vmatprep.subr.mxu0 0.0
      %3185 = vmatpush1.msra.mxu0 0.0
      %3186 = vmatprep.subr.mxu0 0.0
      %3187 = vmatpush1.msra.mxu0 0.0
      %3188 = vmatprep.subr.mxu0 0.0
      %3189 = vmatpush1.msra.mxu0 0.0
      %3190 = vmatprep.subr.mxu0 0.0
      %3191 = vmatpush1.msra.mxu0 0.0
      %3192 = vmatprep.subr.mxu0 0.0
      %3193 = vmatpush1.msra.mxu0 0.0
      %3194 = vmatprep.subr.mxu0 0.0
      %3195 = vmatpush1.msra.mxu0 0.0
      %3196 = vmatprep.subr.mxu0 0.0
      %3197 = vmatpush1.msra.mxu0 0.0
      %3198 = vmatprep.subr.mxu0 0.0
      %3199 = vmatpush1.msra.mxu0 0.0
      %3200 = vmatprep.subr.mxu0 0.0
      %3201 = vmatpush1.msra.mxu0 0.0
      %3202 = vmatprep.subr.mxu0 0.0
      %3203 = vmatpush1.msra.mxu0 0.0
      %3204 = vmatprep.subr.mxu0 0.0
      %3205 = vmatpush1.msra.mxu0 0.0
      %3206 = vmatprep.subr.mxu0 0.0
      %3207 = vmatpush1.msra.mxu0 0.0
      %3208 = vmatprep.subr.mxu0 0.0
      %3209 = vmatpush1.msra.mxu0 0.0
      %3210 = vmatprep.subr.mxu0 0.0
      %3211 = vmatpush1.msra.mxu0 0.0
      %3212 = vmatprep.subr.mxu0 0.0
      %3213 = vmatpush1.msra.mxu0 0.0
      %3214 = vmatprep.subr.mxu0 0.0
      %3215 = vmatpush1.msra.mxu0 0.0
      %3216 = vmatprep.subr.mxu0 0.0
      %3217 = vmatpush1.msra.mxu0 0.0
      %3218 = vmatprep.subr.mxu0 0.0
      %3219 = vmatpush1.msra.mxu0 0.0
      %3220 = vmatprep.subr.mxu0 0.0
      %3221 = vmatpush1.msra.mxu0 0.0
      %3222 = vmatprep.mubr.f32.mxu0 0.0
      %3223 = vmatmul.mubr.f32.gmra.mrb[0].mxu0 %v3156
      %v3224 = vpop.f32.mrb[0].mxu0
      %v3225 = vadd.f32 0.0, %v3224
      %v3226 = vpop.f32.mrb[0].mxu0
      %3227 = vdwg.mxu0
      %3228 = vrot.lane.b32.xlu0 %v2645, 120
      %v3229 = vpop.permute.xlu0 %3228
      %v3232 = vsel %vm1129, %v3149, 0
      %3234 = vmatprep.subr.mxu0 0.0
      %3235 = vmatpush1.msra.mxu0 %v3229
      %3236 = vmatprep.subr.mxu0 0.0
      %3237 = vmatpush1.msra.mxu0 0.0
      %3238 = vmatprep.subr.mxu0 0.0
      %3239 = vmatpush1.msra.mxu0 0.0
      %3240 = vmatprep.subr.mxu0 0.0
      %3241 = vmatpush1.msra.mxu0 0.0
      %3242 = vmatprep.subr.mxu0 0.0
      %3243 = vmatpush1.msra.mxu0 0.0
      %3244 = vmatprep.subr.mxu0 0.0
      %3245 = vmatpush1.msra.mxu0 0.0
      %3246 = vmatprep.subr.mxu0 0.0
      %3247 = vmatpush1.msra.mxu0 0.0
      %3248 = vmatprep.subr.mxu0 0.0
      %3249 = vmatpush1.msra.mxu0 0.0
      %3250 = vmatprep.subr.mxu0 0.0
      %3251 = vmatpush1.msra.mxu0 0.0
      %3252 = vmatprep.subr.mxu0 0.0
      %3253 = vmatpush1.msra.mxu0 0.0
      %3254 = vmatprep.subr.mxu0 0.0
      %3255 = vmatpush1.msra.mxu0 0.0
      %3256 = vmatprep.subr.mxu0 0.0
      %3257 = vmatpush1.msra.mxu0 0.0
      %3258 = vmatprep.subr.mxu0 0.0
      %3259 = vmatpush1.msra.mxu0 0.0
      %3260 = vmatprep.subr.mxu0 0.0
      %3261 = vmatpush1.msra.mxu0 0.0
      %3262 = vmatprep.subr.mxu0 0.0
      %3263 = vmatpush1.msra.mxu0 0.0
      %3264 = vmatprep.subr.mxu0 0.0
      %3265 = vmatpush1.msra.mxu0 0.0
      %3266 = vmatprep.subr.mxu0 0.0
      %3267 = vmatpush1.msra.mxu0 0.0
      %3268 = vmatprep.subr.mxu0 0.0
      %3269 = vmatpush1.msra.mxu0 0.0
      %3270 = vmatprep.subr.mxu0 0.0
      %3271 = vmatpush1.msra.mxu0 0.0
      %3272 = vmatprep.subr.mxu0 0.0
      %3273 = vmatpush1.msra.mxu0 0.0
      %3274 = vmatprep.subr.mxu0 0.0
      %3275 = vmatpush1.msra.mxu0 0.0
      %3276 = vmatprep.subr.mxu0 0.0
      %3277 = vmatpush1.msra.mxu0 0.0
      %3278 = vmatprep.subr.mxu0 0.0
      %3279 = vmatpush1.msra.mxu0 0.0
      %3280 = vmatprep.subr.mxu0 0.0
      %3281 = vmatpush1.msra.mxu0 0.0
      %3282 = vmatprep.subr.mxu0 0.0
      %3283 = vmatpush1.msra.mxu0 0.0
      %3284 = vmatprep.subr.mxu0 0.0
      %3285 = vmatpush1.msra.mxu0 0.0
      %3286 = vmatprep.subr.mxu0 0.0
      %3287 = vmatpush1.msra.mxu0 0.0
      %3288 = vmatprep.subr.mxu0 0.0
      %3289 = vmatpush1.msra.mxu0 0.0
      %3290 = vmatprep.subr.mxu0 0.0
      %3291 = vmatpush1.msra.mxu0 0.0
      %3292 = vmatprep.subr.mxu0 0.0
      %3293 = vmatpush1.msra.mxu0 0.0
      %3294 = vmatprep.subr.mxu0 0.0
      %3295 = vmatpush1.msra.mxu0 0.0
      %3296 = vmatprep.subr.mxu0 0.0
      %3297 = vmatpush1.msra.mxu0 0.0
      %3298 = vmatprep.mubr.f32.mxu0 0.0
      %3299 = vmatmul.mubr.f32.gmra.mrb[0].mxu0 %v3232
      %v3300 = vpop.f32.mrb[0].mxu0
      %v3301 = vadd.f32 0.0, %v3300
      %v3302 = vpop.f32.mrb[0].mxu0
      %3303 = vdwg.mxu0
      %3304 = vrot.lane.b32.xlu0 %v2715, 120
      %v3305 = vpop.permute.xlu0 %3304
      %v3308 = vsel %vm1129, %v3150, 0
      %3310 = vmatprep.subr.mxu0 0.0
      %3311 = vmatpush1.msra.mxu0 %v3305
      %3312 = vmatprep.subr.mxu0 0.0
      %3313 = vmatpush1.msra.mxu0 0.0
      %3314 = vmatprep.subr.mxu0 0.0
      %3315 = vmatpush1.msra.mxu0 0.0
      %3316 = vmatprep.subr.mxu0 0.0
      %3317 = vmatpush1.msra.mxu0 0.0
      %3318 = vmatprep.subr.mxu0 0.0
      %3319 = vmatpush1.msra.mxu0 0.0
      %3320 = vmatprep.subr.mxu0 0.0
      %3321 = vmatpush1.msra.mxu0 0.0
      %3322 = vmatprep.subr.mxu0 0.0
      %3323 = vmatpush1.msra.mxu0 0.0
      %3324 = vmatprep.subr.mxu0 0.0
      %3325 = vmatpush1.msra.mxu0 0.0
      %3326 = vmatprep.subr.mxu0 0.0
      %3327 = vmatpush1.msra.mxu0 0.0
      %3328 = vmatprep.subr.mxu0 0.0
      %3329 = vmatpush1.msra.mxu0 0.0
      %3330 = vmatprep.subr.mxu0 0.0
      %3331 = vmatpush1.msra.mxu0 0.0
      %3332 = vmatprep.subr.mxu0 0.0
      %3333 = vmatpush1.msra.mxu0 0.0
      %3334 = vmatprep.subr.mxu0 0.0
      %3335 = vmatpush1.msra.mxu0 0.0
      %3336 = vmatprep.subr.mxu0 0.0
      %3337 = vmatpush1.msra.mxu0 0.0
      %3338 = vmatprep.subr.mxu0 0.0
      %3339 = vmatpush1.msra.mxu0 0.0
      %3340 = vmatprep.subr.mxu0 0.0
      %3341 = vmatpush1.msra.mxu0 0.0
      %3342 = vmatprep.subr.mxu0 0.0
      %3343 = vmatpush1.msra.mxu0 0.0
      %3344 = vmatprep.subr.mxu0 0.0
      %3345 = vmatpush1.msra.mxu0 0.0
      %3346 = vmatprep.subr.mxu0 0.0
      %3347 = vmatpush1.msra.mxu0 0.0
      %3348 = vmatprep.subr.mxu0 0.0
      %3349 = vmatpush1.msra.mxu0 0.0
      %3350 = vmatprep.subr.mxu0 0.0
      %3351 = vmatpush1.msra.mxu0 0.0
      %3352 = vmatprep.subr.mxu0 0.0
      %3353 = vmatpush1.msra.mxu0 0.0
      %3354 = vmatprep.subr.mxu0 0.0
      %3355 = vmatpush1.msra.mxu0 0.0
      %3356 = vmatprep.subr.mxu0 0.0
      %3357 = vmatpush1.msra.mxu0 0.0
      %3358 = vmatprep.subr.mxu0 0.0
      %3359 = vmatpush1.msra.mxu0 0.0
      %3360 = vmatprep.subr.mxu0 0.0
      %3361 = vmatpush1.msra.mxu0 0.0
      %3362 = vmatprep.subr.mxu0 0.0
      %3363 = vmatpush1.msra.mxu0 0.0
      %3364 = vmatprep.subr.mxu0 0.0
      %3365 = vmatpush1.msra.mxu0 0.0
      %3366 = vmatprep.subr.mxu0 0.0
      %3367 = vmatpush1.msra.mxu0 0.0
      %3368 = vmatprep.subr.mxu0 0.0
      %3369 = vmatpush1.msra.mxu0 0.0
      %3370 = vmatprep.subr.mxu0 0.0
      %3371 = vmatpush1.msra.mxu0 0.0
      %3372 = vmatprep.subr.mxu0 0.0
      %3373 = vmatpush1.msra.mxu0 0.0
      %3374 = vmatprep.mubr.f32.mxu0 0.0
      %3375 = vmatmul.mubr.f32.gmra.mrb[0].mxu0 %v3308
      %v3376 = vpop.f32.mrb[0].mxu0
      %v3377 = vadd.f32 0.0, %v3376
      %v3378 = vpop.f32.mrb[0].mxu0
      %3379 = vdwg.mxu0
      %3380 = vrot.lane.b32.xlu0 %v2785, 120
      %v3381 = vpop.permute.xlu0 %3380
      %v3384 = vsel %vm1129, %v3151, 0
      %3386 = vmatprep.subr.mxu0 0.0
      %3387 = vmatpush1.msra.mxu0 %v3381
      %3388 = vmatprep.subr.mxu0 0.0
      %3389 = vmatpush1.msra.mxu0 0.0
      %3390 = vmatprep.subr.mxu0 0.0
      %3391 = vmatpush1.msra.mxu0 0.0
      %3392 = vmatprep.subr.mxu0 0.0
      %3393 = vmatpush1.msra.mxu0 0.0
      %3394 = vmatprep.subr.mxu0 0.0
      %3395 = vmatpush1.msra.mxu0 0.0
      %3396 = vmatprep.subr.mxu0 0.0
      %3397 = vmatpush1.msra.mxu0 0.0
      %3398 = vmatprep.subr.mxu0 0.0
      %3399 = vmatpush1.msra.mxu0 0.0
      %3400 = vmatprep.subr.mxu0 0.0
      %3401 = vmatpush1.msra.mxu0 0.0
      %3402 = vmatprep.subr.mxu0 0.0
      %3403 = vmatpush1.msra.mxu0 0.0
      %3404 = vmatprep.subr.mxu0 0.0
      %3405 = vmatpush1.msra.mxu0 0.0
      %3406 = vmatprep.subr.mxu0 0.0
      %3407 = vmatpush1.msra.mxu0 0.0
      %3408 = vmatprep.subr.mxu0 0.0
      %3409 = vmatpush1.msra.mxu0 0.0
      %3410 = vmatprep.subr.mxu0 0.0
      %3411 = vmatpush1.msra.mxu0 0.0
      %3412 = vmatprep.subr.mxu0 0.0
      %3413 = vmatpush1.msra.mxu0 0.0
      %3414 = vmatprep.subr.mxu0 0.0
      %3415 = vmatpush1.msra.mxu0 0.0
      %3416 = vmatprep.subr.mxu0 0.0
      %3417 = vmatpush1.msra.mxu0 0.0
      %3418 = vmatprep.subr.mxu0 0.0
      %3419 = vmatpush1.msra.mxu0 0.0
      %3420 = vmatprep.subr.mxu0 0.0
      %3421 = vmatpush1.msra.mxu0 0.0
      %3422 = vmatprep.subr.mxu0 0.0
      %3423 = vmatpush1.msra.mxu0 0.0
      %3424 = vmatprep.subr.mxu0 0.0
      %3425 = vmatpush1.msra.mxu0 0.0
      %3426 = vmatprep.subr.mxu0 0.0
      %3427 = vmatpush1.msra.mxu0 0.0
      %3428 = vmatprep.subr.mxu0 0.0
      %3429 = vmatpush1.msra.mxu0 0.0
      %3430 = vmatprep.subr.mxu0 0.0
      %3431 = vmatpush1.msra.mxu0 0.0
      %3432 = vmatprep.subr.mxu0 0.0
      %3433 = vmatpush1.msra.mxu0 0.0
      %3434 = vmatprep.subr.mxu0 0.0
      %3435 = vmatpush1.msra.mxu0 0.0
      %3436 = vmatprep.subr.mxu0 0.0
      %3437 = vmatpush1.msra.mxu0 0.0
      %3438 = vmatprep.subr.mxu0 0.0
      %3439 = vmatpush1.msra.mxu0 0.0
      %3440 = vmatprep.subr.mxu0 0.0
      %3441 = vmatpush1.msra.mxu0 0.0
      %3442 = vmatprep.subr.mxu0 0.0
      %3443 = vmatpush1.msra.mxu0 0.0
      %3444 = vmatprep.subr.mxu0 0.0
      %3445 = vmatpush1.msra.mxu0 0.0
      %3446 = vmatprep.subr.mxu0 0.0
      %3447 = vmatpush1.msra.mxu0 0.0
      %3448 = vmatprep.subr.mxu0 0.0
      %3449 = vmatpush1.msra.mxu0 0.0
      %3450 = vmatprep.mubr.f32.mxu0 0.0
      %3451 = vmatmul.mubr.f32.gmra.mrb[0].mxu0 %v3384
      %v3452 = vpop.f32.mrb[0].mxu0
      %v3453 = vadd.f32 0.0, %v3452
      %v3454 = vpop.f32.mrb[0].mxu0
      %3455 = vdwg.mxu0
      %v3456 = vld [vmem:[%s16] sm:$0xff]
      %v3457 = vld [vmem:[%s16 + $0x8] sm:$0xff]
      %v3458 = vld [vmem:[%s16 + $0x10] sm:$0xff]
      %v3459 = vld [vmem:[%s16 + $0x18] sm:$0xff]
      %v3461 = vsel %vm1129, %v3225, 0
      %3463 = vmatprep.subr.mxu0 0.0
      %3464 = vmatpush1.msra.mxu0 %v3456
      %3465 = vmatprep.subr.mxu0 0.0
      %3466 = vmatpush1.msra.mxu0 0.0
      %3467 = vmatprep.subr.mxu0 0.0
      %3468 = vmatpush1.msra.mxu0 0.0
      %3469 = vmatprep.subr.mxu0 0.0
      %3470 = vmatpush1.msra.mxu0 0.0
      %3471 = vmatprep.subr.mxu0 0.0
      %3472 = vmatpush1.msra.mxu0 0.0
      %3473 = vmatprep.subr.mxu0 0.0
      %3474 = vmatpush1.msra.mxu0 0.0
      %3475 = vmatprep.subr.mxu0 0.0
      %3476 = vmatpush1.msra.mxu0 0.0
      %3477 = vmatprep.subr.mxu0 0.0
      %3478 = vmatpush1.msra.mxu0 0.0
      %3479 = vmatprep.subr.mxu0 0.0
      %3480 = vmatpush1.msra.mxu0 0.0
      %3481 = vmatprep.subr.mxu0 0.0
      %3482 = vmatpush1.msra.mxu0 0.0
      %3483 = vmatprep.subr.mxu0 0.0
      %3484 = vmatpush1.msra.mxu0 0.0
      %3485 = vmatprep.subr.mxu0 0.0
      %3486 = vmatpush1.msra.mxu0 0.0
      %3487 = vmatprep.subr.mxu0 0.0
      %3488 = vmatpush1.msra.mxu0 0.0
      %3489 = vmatprep.subr.mxu0 0.0
      %3490 = vmatpush1.msra.mxu0 0.0
      %3491 = vmatprep.subr.mxu0 0.0
      %3492 = vmatpush1.msra.mxu0 0.0
      %3493 = vmatprep.subr.mxu0 0.0
      %3494 = vmatpush1.msra.mxu0 0.0
      %3495 = vmatprep.subr.mxu0 0.0
      %3496 = vmatpush1.msra.mxu0 0.0
      %3497 = vmatprep.subr.mxu0 0.0
      %3498 = vmatpush1.msra.mxu0 0.0
      %3499 = vmatprep.subr.mxu0 0.0
      %3500 = vmatpush1.msra.mxu0 0.0
      %3501 = vmatprep.subr.mxu0 0.0
      %3502 = vmatpush1.msra.mxu0 0.0
      %3503 = vmatprep.subr.mxu0 0.0
      %3504 = vmatpush1.msra.mxu0 0.0
      %3505 = vmatprep.subr.mxu0 0.0
      %3506 = vmatpush1.msra.mxu0 0.0
      %3507 = vmatprep.subr.mxu0 0.0
      %3508 = vmatpush1.msra.mxu0 0.0
      %3509 = vmatprep.subr.mxu0 0.0
      %3510 = vmatpush1.msra.mxu0 0.0
      %3511 = vmatprep.subr.mxu0 0.0
      %3512 = vmatpush1.msra.mxu0 0.0
      %3513 = vmatprep.subr.mxu0 0.0
      %3514 = vmatpush1.msra.mxu0 0.0
      %3515 = vmatprep.subr.mxu0 0.0
      %3516 = vmatpush1.msra.mxu0 0.0
      %3517 = vmatprep.subr.mxu0 0.0
      %3518 = vmatpush1.msra.mxu0 0.0
      %3519 = vmatprep.subr.mxu0 0.0
      %3520 = vmatpush1.msra.mxu0 0.0
      %3521 = vmatprep.subr.mxu0 0.0
      %3522 = vmatpush1.msra.mxu0 0.0
      %3523 = vmatprep.subr.mxu0 0.0
      %3524 = vmatpush1.msra.mxu0 0.0
      %3525 = vmatprep.subr.mxu0 0.0
      %3526 = vmatpush1.msra.mxu0 0.0
      %3527 = vmatprep.mubr.f32.mxu0 0.0
      %3528 = vmatmul.mubr.f32.gmra.mrb[0].mxu0 %v3461
      %v3529 = vpop.f32.mrb[0].mxu0
      %v3530 = vadd.f32 0.0, %v3529
      %v3531 = vpop.f32.mrb[0].mxu0
      %3532 = vdwg.mxu0
      %v3534 = vsel %vm1129, %v3301, 0
      %3536 = vmatprep.subr.mxu0 0.0
      %3537 = vmatpush1.msra.mxu0 %v3457
      %3538 = vmatprep.subr.mxu0 0.0
      %3539 = vmatpush1.msra.mxu0 0.0
      %3540 = vmatprep.subr.mxu0 0.0
      %3541 = vmatpush1.msra.mxu0 0.0
      %3542 = vmatprep.subr.mxu0 0.0
      %3543 = vmatpush1.msra.mxu0 0.0
      %3544 = vmatprep.subr.mxu0 0.0
      %3545 = vmatpush1.msra.mxu0 0.0
      %3546 = vmatprep.subr.mxu0 0.0
      %3547 = vmatpush1.msra.mxu0 0.0
      %3548 = vmatprep.subr.mxu0 0.0
      %3549 = vmatpush1.msra.mxu0 0.0
      %3550 = vmatprep.subr.mxu0 0.0
      %3551 = vmatpush1.msra.mxu0 0.0
      %3552 = vmatprep.subr.mxu0 0.0
      %3553 = vmatpush1.msra.mxu0 0.0
      %3554 = vmatprep.subr.mxu0 0.0
      %3555 = vmatpush1.msra.mxu0 0.0
      %3556 = vmatprep.subr.mxu0 0.0
      %3557 = vmatpush1.msra.mxu0 0.0
      %3558 = vmatprep.subr.mxu0 0.0
      %3559 = vmatpush1.msra.mxu0 0.0
      %3560 = vmatprep.subr.mxu0 0.0
      %3561 = vmatpush1.msra.mxu0 0.0
      %3562 = vmatprep.subr.mxu0 0.0
      %3563 = vmatpush1.msra.mxu0 0.0
      %3564 = vmatprep.subr.mxu0 0.0
      %3565 = vmatpush1.msra.mxu0 0.0
      %3566 = vmatprep.subr.mxu0 0.0
      %3567 = vmatpush1.msra.mxu0 0.0
      %3568 = vmatprep.subr.mxu0 0.0
      %3569 = vmatpush1.msra.mxu0 0.0
      %3570 = vmatprep.subr.mxu0 0.0
      %3571 = vmatpush1.msra.mxu0 0.0
      %3572 = vmatprep.subr.mxu0 0.0
      %3573 = vmatpush1.msra.mxu0 0.0
      %3574 = vmatprep.subr.mxu0 0.0
      %3575 = vmatpush1.msra.mxu0 0.0
      %3576 = vmatprep.subr.mxu0 0.0
      %3577 = vmatpush1.msra.mxu0 0.0
      %3578 = vmatprep.subr.mxu0 0.0
      %3579 = vmatpush1.msra.mxu0 0.0
      %3580 = vmatprep.subr.mxu0 0.0
      %3581 = vmatpush1.msra.mxu0 0.0
      %3582 = vmatprep.subr.mxu0 0.0
      %3583 = vmatpush1.msra.mxu0 0.0
      %3584 = vmatprep.subr.mxu0 0.0
      %3585 = vmatpush1.msra.mxu0 0.0
      %3586 = vmatprep.subr.mxu0 0.0
      %3587 = vmatpush1.msra.mxu0 0.0
      %3588 = vmatprep.subr.mxu0 0.0
      %3589 = vmatpush1.msra.mxu0 0.0
      %3590 = vmatprep.subr.mxu0 0.0
      %3591 = vmatpush1.msra.mxu0 0.0
      %3592 = vmatprep.subr.mxu0 0.0
      %3593 = vmatpush1.msra.mxu0 0.0
      %3594 = vmatprep.subr.mxu0 0.0
      %3595 = vmatpush1.msra.mxu0 0.0
      %3596 = vmatprep.subr.mxu0 0.0
      %3597 = vmatpush1.msra.mxu0 0.0
      %3598 = vmatprep.subr.mxu0 0.0
      %3599 = vmatpush1.msra.mxu0 0.0
      %3600 = vmatprep.mubr.f32.mxu0 0.0
      %3601 = vmatmul.mubr.f32.gmra.mrb[0].mxu0 %v3534
      %v3602 = vpop.f32.mrb[0].mxu0
      %v3603 = vadd.f32 0.0, %v3602
      %v3604 = vpop.f32.mrb[0].mxu0
      %3605 = vdwg.mxu0
      %v3607 = vsel %vm1129, %v3377, 0
      %3609 = vmatprep.subr.mxu0 0.0
      %3610 = vmatpush1.msra.mxu0 %v3458
      %3611 = vmatprep.subr.mxu0 0.0
      %3612 = vmatpush1.msra.mxu0 0.0
      %3613 = vmatprep.subr.mxu0 0.0
      %3614 = vmatpush1.msra.mxu0 0.0
      %3615 = vmatprep.subr.mxu0 0.0
      %3616 = vmatpush1.msra.mxu0 0.0
      %3617 = vmatprep.subr.mxu0 0.0
      %3618 = vmatpush1.msra.mxu0 0.0
      %3619 = vmatprep.subr.mxu0 0.0
      %3620 = vmatpush1.msra.mxu0 0.0
      %3621 = vmatprep.subr.mxu0 0.0
      %3622 = vmatpush1.msra.mxu0 0.0
      %3623 = vmatprep.subr.mxu0 0.0
      %3624 = vmatpush1.msra.mxu0 0.0
      %3625 = vmatprep.subr.mxu0 0.0
      %3626 = vmatpush1.msra.mxu0 0.0
      %3627 = vmatprep.subr.mxu0 0.0
      %3628 = vmatpush1.msra.mxu0 0.0
      %3629 = vmatprep.subr.mxu0 0.0
      %3630 = vmatpush1.msra.mxu0 0.0
      %3631 = vmatprep.subr.mxu0 0.0
      %3632 = vmatpush1.msra.mxu0 0.0
      %3633 = vmatprep.subr.mxu0 0.0
      %3634 = vmatpush1.msra.mxu0 0.0
      %3635 = vmatprep.subr.mxu0 0.0
      %3636 = vmatpush1.msra.mxu0 0.0
      %3637 = vmatprep.subr.mxu0 0.0
      %3638 = vmatpush1.msra.mxu0 0.0
      %3639 = vmatprep.subr.mxu0 0.0
      %3640 = vmatpush1.msra.mxu0 0.0
      %3641 = vmatprep.subr.mxu0 0.0
      %3642 = vmatpush1.msra.mxu0 0.0
      %3643 = vmatprep.subr.mxu0 0.0
      %3644 = vmatpush1.msra.mxu0 0.0
      %3645 = vmatprep.subr.mxu0 0.0
      %3646 = vmatpush1.msra.mxu0 0.0
      %3647 = vmatprep.subr.mxu0 0.0
      %3648 = vmatpush1.msra.mxu0 0.0
      %3649 = vmatprep.subr.mxu0 0.0
      %3650 = vmatpush1.msra.mxu0 0.0
      %3651 = vmatprep.subr.mxu0 0.0
      %3652 = vmatpush1.msra.mxu0 0.0
      %3653 = vmatprep.subr.mxu0 0.0
      %3654 = vmatpush1.msra.mxu0 0.0
      %3655 = vmatprep.subr.mxu0 0.0
      %3656 = vmatpush1.msra.mxu0 0.0
      %3657 = vmatprep.subr.mxu0 0.0
      %3658 = vmatpush1.msra.mxu0 0.0
      %3659 = vmatprep.subr.mxu0 0.0
      %3660 = vmatpush1.msra.mxu0 0.0
      %3661 = vmatprep.subr.mxu0 0.0
      %3662 = vmatpush1.msra.mxu0 0.0
      %3663 = vmatprep.subr.mxu0 0.0
      %3664 = vmatpush1.msra.mxu0 0.0
      %3665 = vmatprep.subr.mxu0 0.0
      %3666 = vmatpush1.msra.mxu0 0.0
      %3667 = vmatprep.subr.mxu0 0.0
      %3668 = vmatpush1.msra.mxu0 0.0
      %3669 = vmatprep.subr.mxu0 0.0
      %3670 = vmatpush1.msra.mxu0 0.0
      %3671 = vmatprep.subr.mxu0 0.0
      %3672 = vmatpush1.msra.mxu0 0.0
      %3673 = vmatprep.mubr.f32.mxu0 0.0
      %3674 = vmatmul.mubr.f32.gmra.mrb[0].mxu0 %v3607
      %v3675 = vpop.f32.mrb[0].mxu0
      %v3676 = vadd.f32 0.0, %v3675
      %v3677 = vpop.f32.mrb[0].mxu0
      %3678 = vdwg.mxu0
      %v3680 = vsel %vm1129, %v3453, 0
      %3682 = vmatprep.subr.mxu0 0.0
      %3683 = vmatpush1.msra.mxu0 %v3459
      %3684 = vmatprep.subr.mxu0 0.0
      %3685 = vmatpush1.msra.mxu0 0.0
      %3686 = vmatprep.subr.mxu0 0.0
      %3687 = vmatpush1.msra.mxu0 0.0
      %3688 = vmatprep.subr.mxu0 0.0
      %3689 = vmatpush1.msra.mxu0 0.0
      %3690 = vmatprep.subr.mxu0 0.0
      %3691 = vmatpush1.msra.mxu0 0.0
      %3692 = vmatprep.subr.mxu0 0.0
      %3693 = vmatpush1.msra.mxu0 0.0
      %3694 = vmatprep.subr.mxu0 0.0
      %3695 = vmatpush1.msra.mxu0 0.0
      %3696 = vmatprep.subr.mxu0 0.0
      %3697 = vmatpush1.msra.mxu0 0.0
      %3698 = vmatprep.subr.mxu0 0.0
      %3699 = vmatpush1.msra.mxu0 0.0
      %3700 = vmatprep.subr.mxu0 0.0
      %3701 = vmatpush1.msra.mxu0 0.0
      %3702 = vmatprep.subr.mxu0 0.0
      %3703 = vmatpush1.msra.mxu0 0.0
      %3704 = vmatprep.subr.mxu0 0.0
      %3705 = vmatpush1.msra.mxu0 0.0
      %3706 = vmatprep.subr.mxu0 0.0
      %3707 = vmatpush1.msra.mxu0 0.0
      %3708 = vmatprep.subr.mxu0 0.0
      %3709 = vmatpush1.msra.mxu0 0.0
      %3710 = vmatprep.subr.mxu0 0.0
      %3711 = vmatpush1.msra.mxu0 0.0
      %3712 = vmatprep.subr.mxu0 0.0
      %3713 = vmatpush1.msra.mxu0 0.0
      %3714 = vmatprep.subr.mxu0 0.0
      %3715 = vmatpush1.msra.mxu0 0.0
      %3716 = vmatprep.subr.mxu0 0.0
      %3717 = vmatpush1.msra.mxu0 0.0
      %3718 = vmatprep.subr.mxu0 0.0
      %3719 = vmatpush1.msra.mxu0 0.0
      %3720 = vmatprep.subr.mxu0 0.0
      %3721 = vmatpush1.msra.mxu0 0.0
      %3722 = vmatprep.subr.mxu0 0.0
      %3723 = vmatpush1.msra.mxu0 0.0
      %3724 = vmatprep.subr.mxu0 0.0
      %3725 = vmatpush1.msra.mxu0 0.0
      %3726 = vmatprep.subr.mxu0 0.0
      %3727 = vmatpush1.msra.mxu0 0.0
      %3728 = vmatprep.subr.mxu0 0.0
      %3729 = vmatpush1.msra.mxu0 0.0
      %3730 = vmatprep.subr.mxu0 0.0
      %3731 = vmatpush1.msra.mxu0 0.0
      %3732 = vmatprep.subr.mxu0 0.0
      %3733 = vmatpush1.msra.mxu0 0.0
      %3734 = vmatprep.subr.mxu0 0.0
      %3735 = vmatpush1.msra.mxu0 0.0
      %3736 = vmatprep.subr.mxu0 0.0
      %3737 = vmatpush1.msra.mxu0 0.0
      %3738 = vmatprep.subr.mxu0 0.0
      %3739 = vmatpush1.msra.mxu0 0.0
      %3740 = vmatprep.subr.mxu0 0.0
      %3741 = vmatpush1.msra.mxu0 0.0
      %3742 = vmatprep.subr.mxu0 0.0
      %3743 = vmatpush1.msra.mxu0 0.0
      %3744 = vmatprep.subr.mxu0 0.0
      %3745 = vmatpush1.msra.mxu0 0.0
      %3746 = vmatprep.mubr.f32.mxu0 0.0
      %3747 = vmatmul.mubr.f32.gmra.mrb[0].mxu0 %v3680
      %v3748 = vpop.f32.mrb[0].mxu0
      %v3749 = vadd.f32 0.0, %v3748
      %v3750 = vpop.f32.mrb[0].mxu0
      %3751 = vdwg.mxu0
      %v3752 = vsel %vm766, %v3530, 0.0
      %v3753 = vsel %vm766, %v3603, 0.0
      %v3754 = vadd.f32 %v3752, %v3753
      %v3755 = vsel %vm766, %v3676, 0.0
      %v3756 = vadd.f32 %v3754, %v3755
      %v3757 = vsel %vm766, %v3749, 0.0
      %v3758 = vadd.f32 %v3756, %v3757
      %v3759 = vld [vmem:[%s17] sm:$0x1]
      %v3761 = vlaneseq
      %v3762 = vshrl.u32 %v3761, 7
      %v3763 = vsub.s32 0, %v3762
      %v3764 = vrot.slane %v3759, %v3763
      %v3766 = vadd.f32 %v3758, %v3764
      %v3767 = vadd.f32 %v2104, %v3766
      %v3768 = vsel %vm766, %v3767, 0.0
      %3769 = vadd.xlane.f32.xlu0 %v3768
      %v3770 = vpop.xlane.xlu0 %3769
      %v3771 = vmul.f32 %v3770, %v770
      %v3772 = vsub.f32 %v3767, %v3771
      %v3773 = vmul.f32 %v3772, %v3772
      %v3774 = vsel %vm766, %v3773, 0.0
      %3775 = vadd.xlane.f32.xlu0 %v3774
      %v3776 = vpop.xlane.xlu0 %3775
      %v3777 = vmul.f32 %v3776, %v770
      %v3778 = vadd.f32 %v3777, 1e-05
      %v3779 = vrsqrt.pop %v3778
      %v3780 = vmul.f32 %v3772, %v3779
      %v3781 = vld [vmem:[%s18] sm:$0x1]
      %v3783 = vlaneseq
      %v3784 = vshrl.u32 %v3783, 7
      %v3785 = vsub.s32 0, %v3784
      %v3786 = vrot.slane %v3781, %v3785
      %v3788 = vmul.f32 %v3780, %v3786
      %v3789 = vld [vmem:[%s19] sm:$0x1]
      %v3791 = vlaneseq
      %v3792 = vshrl.u32 %v3791, 7
      %v3793 = vsub.s32 0, %v3792
      %v3794 = vrot.slane %v3789, %v3793
      %v3796 = vadd.f32 %v3788, %v3794
      %v3797 = vld [vmem:[%s20] sm:$0xff]
      %v3798 = vld [vmem:[%s20 + $0x8] sm:$0xff]
      %v3799 = vld [vmem:[%s20 + $0x10] sm:$0xff]
      %v3800 = vld [vmem:[%s20 + $0x18] sm:$0xff]
      %v3801 = vld [vmem:[%s21] sm:$0x1]
      %v3803 = vlaneseq
      %v3804 = vshrl.u32 %v3803, 7
      %v3805 = vsub.s32 0, %v3804
      %v3806 = vrot.slane %v3801, %v3805
      %v3809 = vsel %vm766, %v3796, 0
      %3811 = vmatprep.subr.mxu0 0.0
      %3812 = vmatpush1.msra.mxu0 %v3797
      %3813 = vmatprep.subr.mxu0 0.0
      %3814 = vmatpush1.msra.mxu0 %v3798
      %3815 = vmatprep.subr.mxu0 0.0
      %3816 = vmatpush1.msra.mxu0 %v3799
      %3817 = vmatprep.subr.mxu0 0.0
      %3818 = vmatpush1.msra.mxu0 %v3800
      %3819 = vmatprep.subr.mxu0 0.0
      %3820 = vmatpush1.msra.mxu0 0.0
      %3821 = vmatprep.subr.mxu0 0.0
      %3822 = vmatpush1.msra.mxu0 0.0
      %3823 = vmatprep.subr.mxu0 0.0
      %3824 = vmatpush1.msra.mxu0 0.0
      %3825 = vmatprep.subr.mxu0 0.0
      %3826 = vmatpush1.msra.mxu0 0.0
      %3827 = vmatprep.subr.mxu0 0.0
      %3828 = vmatpush1.msra.mxu0 0.0
      %3829 = vmatprep.subr.mxu0 0.0
      %3830 = vmatpush1.msra.mxu0 0.0
      %3831 = vmatprep.subr.mxu0 0.0
      %3832 = vmatpush1.msra.mxu0 0.0
      %3833 = vmatprep.subr.mxu0 0.0
      %3834 = vmatpush1.msra.mxu0 0.0
      %3835 = vmatprep.subr.mxu0 0.0
      %3836 = vmatpush1.msra.mxu0 0.0
      %3837 = vmatprep.subr.mxu0 0.0
      %3838 = vmatpush1.msra.mxu0 0.0
      %3839 = vmatprep.subr.mxu0 0.0
      %3840 = vmatpush1.msra.mxu0 0.0
      %3841 = vmatprep.subr.mxu0 0.0
      %3842 = vmatpush1.msra.mxu0 0.0
      %3843 = vmatprep.subr.mxu0 0.0
      %3844 = vmatpush1.msra.mxu0 0.0
      %3845 = vmatprep.subr.mxu0 0.0
      %3846 = vmatpush1.msra.mxu0 0.0
      %3847 = vmatprep.subr.mxu0 0.0
      %3848 = vmatpush1.msra.mxu0 0.0
      %3849 = vmatprep.subr.mxu0 0.0
      %3850 = vmatpush1.msra.mxu0 0.0
      %3851 = vmatprep.subr.mxu0 0.0
      %3852 = vmatpush1.msra.mxu0 0.0
      %3853 = vmatprep.subr.mxu0 0.0
      %3854 = vmatpush1.msra.mxu0 0.0
      %3855 = vmatprep.subr.mxu0 0.0
      %3856 = vmatpush1.msra.mxu0 0.0
      %3857 = vmatprep.subr.mxu0 0.0
      %3858 = vmatpush1.msra.mxu0 0.0
      %3859 = vmatprep.subr.mxu0 0.0
      %3860 = vmatpush1.msra.mxu0 0.0
      %3861 = vmatprep.subr.mxu0 0.0
      %3862 = vmatpush1.msra.mxu0 0.0
      %3863 = vmatprep.subr.mxu0 0.0
      %3864 = vmatpush1.msra.mxu0 0.0
      %3865 = vmatprep.subr.mxu0 0.0
      %3866 = vmatpush1.msra.mxu0 0.0
      %3867 = vmatprep.subr.mxu0 0.0
      %3868 = vmatpush1.msra.mxu0 0.0
      %3869 = vmatprep.subr.mxu0 0.0
      %3870 = vmatpush1.msra.mxu0 0.0
      %3871 = vmatprep.subr.mxu0 0.0
      %3872 = vmatpush1.msra.mxu0 0.0
      %3873 = vmatprep.subr.mxu0 0.0
      %3874 = vmatpush1.msra.mxu0 0.0
      %3875 = vmatprep.mubr.f32.mxu0 0.0
      %3876 = vmatmul.mubr.f32.gmra.mrb[0].mxu0 %v3809
      %v3877 = vpop.f32.mrb[0].mxu0
      %v3878 = vadd.f32 %v3806, %v3877
      %v3879 = vpop.f32.mrb[0].mxu0
      %3880 = vdwg.mxu0
      %v3881 = vmax.f32 %v3878, 0.0
      %v3882 = vld [vmem:[%s22] sm:$0xff]
      %v3883 = vld [vmem:[%s22 + $0x8] sm:$0xff]
      %v3884 = vld [vmem:[%s22 + $0x10] sm:$0xff]
      %v3885 = vld [vmem:[%s22 + $0x18] sm:$0xff]
      %v3886 = vld [vmem:[%s22 + $0x20] sm:$0xff]
      %v3887 = vld [vmem:[%s22 + $0x28] sm:$0xff]
      %v3888 = vld [vmem:[%s22 + $0x30] sm:$0xff]
      %v3889 = vld [vmem:[%s22 + $0x38] sm:$0xff]
      %v3890 = vld [vmem:[%s23] sm:$0x1]
      %v3892 = vlaneseq
      %v3893 = vshrl.u32 %v3892, 7
      %v3894 = vsub.s32 0, %v3893
      %v3895 = vrot.slane %v3890, %v3894
      %vm3897 = vcmask 523264
      %v3899 = vsel %vm3897, %v3881, 0
      %3901 = vmatprep.subr.mxu0 0.0
      %3902 = vmatpush1.msra.mxu0 %v3882
      %3903 = vmatprep.subr.mxu0 0.0
      %3904 = vmatpush1.msra.mxu0 %v3883
      %3905 = vmatprep.subr.mxu0 0.0
      %3906 = vmatpush1.msra.mxu0 %v3884
      %3907 = vmatprep.subr.mxu0 0.0
      %3908 = vmatpush1.msra.mxu0 %v3885
      %3909 = vmatprep.subr.mxu0 0.0
      %3910 = vmatpush1.msra.mxu0 %v3886
      %3911 = vmatprep.subr.mxu0 0.0
      %3912 = vmatpush1.msra.mxu0 %v3887
      %3913 = vmatprep.subr.mxu0 0.0
      %3914 = vmatpush1.msra.mxu0 %v3888
      %3915 = vmatprep.subr.mxu0 0.0
      %3916 = vmatpush1.msra.mxu0 %v3889
      %3917 = vmatprep.subr.mxu0 0.0
      %3918 = vmatpush1.msra.mxu0 0.0
      %3919 = vmatprep.subr.mxu0 0.0
      %3920 = vmatpush1.msra.mxu0 0.0
      %3921 = vmatprep.subr.mxu0 0.0
      %3922 = vmatpush1.msra.mxu0 0.0
      %3923 = vmatprep.subr.mxu0 0.0
      %3924 = vmatpush1.msra.mxu0 0.0
      %3925 = vmatprep.subr.mxu0 0.0
      %3926 = vmatpush1.msra.mxu0 0.0
      %3927 = vmatprep.subr.mxu0 0.0
      %3928 = vmatpush1.msra.mxu0 0.0
      %3929 = vmatprep.subr.mxu0 0.0
      %3930 = vmatpush1.msra.mxu0 0.0
      %3931 = vmatprep.subr.mxu0 0.0
      %3932 = vmatpush1.msra.mxu0 0.0
      %3933 = vmatprep.subr.mxu0 0.0
      %3934 = vmatpush1.msra.mxu0 0.0
      %3935 = vmatprep.subr.mxu0 0.0
      %3936 = vmatpush1.msra.mxu0 0.0
      %3937 = vmatprep.subr.mxu0 0.0
      %3938 = vmatpush1.msra.mxu0 0.0
      %3939 = vmatprep.subr.mxu0 0.0
      %3940 = vmatpush1.msra.mxu0 0.0
      %3941 = vmatprep.subr.mxu0 0.0
      %3942 = vmatpush1.msra.mxu0 0.0
      %3943 = vmatprep.subr.mxu0 0.0
      %3944 = vmatpush1.msra.mxu0 0.0
      %3945 = vmatprep.subr.mxu0 0.0
      %3946 = vmatpush1.msra.mxu0 0.0
      %3947 = vmatprep.subr.mxu0 0.0
      %3948 = vmatpush1.msra.mxu0 0.0
      %3949 = vmatprep.subr.mxu0 0.0
      %3950 = vmatpush1.msra.mxu0 0.0
      %3951 = vmatprep.subr.mxu0 0.0
      %3952 = vmatpush1.msra.mxu0 0.0
      %3953 = vmatprep.subr.mxu0 0.0
      %3954 = vmatpush1.msra.mxu0 0.0
      %3955 = vmatprep.subr.mxu0 0.0
      %3956 = vmatpush1.msra.mxu0 0.0
      %3957 = vmatprep.subr.mxu0 0.0
      %3958 = vmatpush1.msra.mxu0 0.0
      %3959 = vmatprep.subr.mxu0 0.0
      %3960 = vmatpush1.msra.mxu0 0.0
      %3961 = vmatprep.subr.mxu0 0.0
      %3962 = vmatpush1.msra.mxu0 0.0
      %3963 = vmatprep.subr.mxu0 0.0
      %3964 = vmatpush1.msra.mxu0 0.0
      %3965 = vmatprep.mubr.f32.mxu0 0.0
      %3966 = vmatmul.mubr.f32.gmra.mrb[0].mxu0 %v3899
      %v3967 = vpop.f32.mrb[0].mxu0
      %v3968 = vadd.f32 %v3895, %v3967
      %v3969 = vpop.f32.mrb[0].mxu0
      %3970 = vdwg.mxu0
      %v3971 = vadd.f32 %v3767, %v3968
      %3972 = vst.msk [vmem:[%s763] sm:$0xff] %vm766, %v3971
      %p3973 = scmp.lt.s32.totalorder %s35, 1
      %s3974 = scalar_select %p3973, %s35, 1
      %s3975 = smul.addr %s3974, 8
      %s3976 = scalar_lea.vmem %s24, %s3975
      // Predicated region
      $region117: #{decoder_layer_pallas.1} parent=115 // pred_check
        %p3977 = pneg %p572
      $region118: #{decoder_layer_pallas.1} parent=115 // pred_check_branch
        %3979 = sbr.rel (%p3977) target = $region120
      $region119: #{decoder_layer_pallas.1} parent=115 // pred_region
        _
      $region120: #{decoder_layer_pallas.1} parent=115 // pred_fallthru
        _
    $region116: #{decoder_layer_pallas.1} parent=5 // pred_fallthru
      _
    %p3980 = scmp.le.s32.totalorder 2, %s30
    // Predicated region
    $region121: #{decoder_layer_pallas.1} parent=5 // pred_check
      %p3981 = pneg %p3980
    $region122: #{decoder_layer_pallas.1} parent=5 // pred_check_branch
      %3983 = sbr.rel (%p3981) target = $region124
    $region123: #{decoder_layer_pallas.1} parent=5 // pred_region
      %s3984 = ssub.s32 %s30, 2
      // Predicated region
      $region125: #{decoder_layer_pallas.1} parent=123 // pred_check
        %p3985 = pneg %p578
      $region126: #{decoder_layer_pallas.1} parent=123 // pred_check_branch
        %3987 = sbr.rel (%p3985) target = $region128
      $region127: #{decoder_layer_pallas.1} parent=123 // pred_region
        %p3988 = scmp.lt.s32.totalorder %s36, 1
        %s3989 = scalar_select %p3988, %s36, 1
        %s3990 = smul.addr %s3989, 8
        %s3991 = scalar_lea.vmem %s24, %s3990
      $region128: #{decoder_layer_pallas.1} parent=123 // pred_fallthru
        _
    $region124: #{decoder_layer_pallas.1} parent=5 // pred_fallthru
      _
  $region6: #{decoder_layer_pallas.1} parent=0 // loop_footer
    %s34 = sadd.s32 1, %s30
  $region7: #{decoder_layer_pallas.1} parent=0 // loop_footer_branch
    %29 = sbr.rel target = $region3
  $region8: #{decoder_layer_pallas.1} parent=0 // loop_exit
    _

</llo_original>
